<compile_context>
chip_gen: v7x
topology: tpu7x:2x2x1
jax: 0.10.0
libtpu: 0.0.40
codegen_flags: <defaults>
</compile_context>

<pallas_src>
import math

import jax
import jax.numpy as jnp
from jax.experimental import pallas as pl
from jax.experimental.pallas import tpu as pltpu

# ----------------------------- hyper-parameters ------------------------------
INPUT_DIM = 768
D_MODEL = 128
N_HEAD = 4
HEAD_DIM = D_MODEL // N_HEAD
N_LAYERS = 2
D_FF = 512
OUTPUT_DIM = 2
LN_EPS = 1e-5
SM_SCALE = 1.0 / math.sqrt(HEAD_DIM)

# dtype of MXU operands (activations / weights / attention probs at matmul
# sites). Accumulation, LayerNorm statistics, softmax and residuals stay f32.
MM_DTYPE = jnp.bfloat16


def _head_slab_width(topic_size):
    # lane-dense head output slab: [seg logit-diff | topic logits | zero pad]
    return max(128, ((1 + topic_size + 127) // 128) * 128)


# ----------------------------- fused kernel ----------------------------------

def make_kernel(Bb, S):
    """Kernel processing Bb sequences of length S per grid step (M = Bb*S rows)."""
    M = Bb * S

    def kernel(
            x_ref,                         # (M, INPUT_DIM)        bf16
            wr_ref, br_ref,                # (IN, D) bf16, (1, D) f32
            wqkv_ref, bqkv_ref,            # (L, D, 3D) bf16, (L, 1, 3D) f32
            wo_ref, bo_ref,                # (L, D, D) bf16, (L, 1, D) f32
            w1_ref, b1_ref,                # (L, D, DFF) bf16, (L, 1, DFF) f32
            w2_ref, b2_ref,                # (L, DFF, D) bf16, (L, 1, D) f32
            ln1g_ref, ln1b_ref,            # (L, 1, D) f32
            ln2g_ref, ln2b_ref,            # (L, 1, D) f32
            wh_ref, bh_ref,                # (D, HW) bf16, (1, HW) f32
            out_ref):                      # (M, HW) f32

        def mm(a, b):
            return jnp.dot(a.astype(MM_DTYPE), b,
                           preferred_element_type=jnp.float32)

        def add_ln(x, y, g, b):            # post-norm residual, f32 statistics
            z = x + y
            mu = jnp.mean(z, axis=-1, keepdims=True)
            var = jnp.mean(jnp.square(z - mu), axis=-1, keepdims=True)
            return (z - mu) * jax.lax.rsqrt(var + LN_EPS) * g + b

        def mha(h, wqkv, bqkv, wo, bo):
            # Single lane-dense QKV projection: (M,128) x (128,384) on the MXU.
            qkv = mm(h, wqkv) + bqkv                                  # (M, 3D) f32
            ctx_heads = []
            for hd in range(N_HEAD):
                lo = hd * HEAD_DIM
                q = qkv[:, lo:lo + HEAD_DIM].reshape(Bb, S, HEAD_DIM)
                k = qkv[:, D_MODEL + lo:D_MODEL + lo + HEAD_DIM].reshape(Bb, S, HEAD_DIM)
                v = qkv[:, 2 * D_MODEL + lo:2 * D_MODEL + lo + HEAD_DIM].reshape(Bb, S, HEAD_DIM)
                s = jnp.einsum('bqe,bke->bqk',
                               q.astype(MM_DTYPE), k.astype(MM_DTYPE),
                               preferred_element_type=jnp.float32) * SM_SCALE
                m = jnp.max(s, axis=-1, keepdims=True)
                e = jnp.exp(s - m)
                p = e * pl.reciprocal(jnp.sum(e, axis=-1, keepdims=True),
                                      approx=True)
                ctx_heads.append(
                    jnp.einsum('bqk,bke->bqe',
                               p.astype(MM_DTYPE), v.astype(MM_DTYPE),
                               preferred_element_type=jnp.float32))   # (Bb,S,HD)
            # Fold the head concat back onto lanes -> single K=128 output proj.
            ctx = jnp.concatenate(ctx_heads, axis=-1).reshape(M, D_MODEL)
            return mm(ctx, wo) + bo                                   # (M, D)

        # dimension-reduction linear (x already bf16 from the wrapper)
        h = mm(x_ref[...], wr_ref[...]) + br_ref[...]                 # (M, D) f32

        # 2-layer post-norm TransformerEncoder (dropout = identity at inference)
        for l in range(N_LAYERS):
            attn = mha(h, wqkv_ref[l], bqkv_ref[l], wo_ref[l], bo_ref[l])
            h = add_ln(h, attn, ln1g_ref[l], ln1b_ref[l])
            ff = mm(jnp.maximum(mm(h, w1_ref[l]) + b1_ref[l], 0.0),
                    w2_ref[l]) + b2_ref[l]
            h = add_ln(h, ff, ln2g_ref[l], ln2b_ref[l])

        # merged heads: one lane-dense (128-wide) matmul into the output slab
        out_ref[...] = (mm(h, wh_ref[...]) + bh_ref[...]).astype(out_ref.dtype)

    return kernel


# ----------------------------- wrapper ---------------------------------------

def _resident_spec(shape):
    nd = len(shape)
    return pl.BlockSpec(tuple(shape), lambda i, _z=(0,) * nd: _z)


def transformer_classifier_fused(x_padded, packed):
    """x_padded: (B, S, INPUT_DIM) f32  ->  (B, S, HW) f32 logit slab."""
    B, S, IN = x_padded.shape
    HW = packed["w_heads"].shape[1]
    L = N_LAYERS

    # Sequences per grid step: aim for >= ~128 MXU rows per step.
    Bb = min(B, max(1, pl.cdiv(128, S)))
    # Keep row blocks sublane-aligned when the flattened batch is tiled.
    while (Bb * S) % 8 != 0 and Bb < B:
        Bb += 1
    if (Bb * S) % 8 != 0:
        Bb = B                      # single step; block == full array (always legal)
    B_pad = pl.cdiv(B, Bb) * Bb
    if B_pad != B:
        x_padded = jnp.pad(x_padded, ((0, B_pad - B), (0, 0), (0, 0)))

    # bf16 host-side cast halves the only batch-scaling DMA; flatten so the
    # kernel sees lane-dense (Bb*S, *) row blocks with no in-kernel reshapes
    # of the input.
    x_flat = x_padded.reshape(B_pad * S, IN).astype(MM_DTYPE)
    Mb = Bb * S
    grid = (B_pad // Bb,)

    flops_per_seq = (
        2 * S * IN * D_MODEL
        + L * (2 * S * D_MODEL * 3 * D_MODEL            # qkv projection
               + 2 * 2 * N_HEAD * S * S * HEAD_DIM      # scores + pv
               + 2 * S * D_MODEL * D_MODEL              # output projection
               + 2 * 2 * S * D_MODEL * D_FF)            # ffn
        + 2 * S * D_MODEL * HW)                         # heads
    weight_bytes = sum(int(v.size) * v.dtype.itemsize for v in packed.values())
    cost = pl.CostEstimate(
        flops=int(B_pad * flops_per_seq),
        transcendentals=int(B_pad * L * N_HEAD * S * S),
        bytes_accessed=int(x_flat.size * 2 + weight_bytes + B_pad * S * HW * 4))

    in_specs = [
        pl.BlockSpec((Mb, IN), lambda i: (i, 0)),
        _resident_spec(packed["w_reduce"].shape),
        _resident_spec(packed["b_reduce"].shape),
        _resident_spec(packed["w_qkv"].shape),
        _resident_spec(packed["b_qkv"].shape),
        _resident_spec(packed["w_o"].shape),
        _resident_spec(packed["b_o"].shape),
        _resident_spec(packed["w1"].shape),
        _resident_spec(packed["b1"].shape),
        _resident_spec(packed["w2"].shape),
        _resident_spec(packed["b2"].shape),
        _resident_spec(packed["ln1_g"].shape),
        _resident_spec(packed["ln1_b"].shape),
        _resident_spec(packed["ln2_g"].shape),
        _resident_spec(packed["ln2_b"].shape),
        _resident_spec(packed["w_heads"].shape),
        _resident_spec(packed["b_heads"].shape),
    ]
    out_spec = pl.BlockSpec((Mb, HW), lambda i: (i, 0))

    out_flat = pl.pallas_call(
        make_kernel(Bb, S),
        out_shape=jax.ShapeDtypeStruct((B_pad * S, HW), jnp.float32),
        grid=grid,
        in_specs=in_specs,
        out_specs=out_spec,
        compiler_params=pltpu.CompilerParams(
            dimension_semantics=("parallel",),
            vmem_limit_bytes=32 * 1024 * 1024),
        cost_estimate=cost,
    )(x_flat,
      packed["w_reduce"], packed["b_reduce"],
      packed["w_qkv"], packed["b_qkv"],
      packed["w_o"], packed["b_o"],
      packed["w1"], packed["b1"],
      packed["w2"], packed["b2"],
      packed["ln1_g"], packed["ln1_b"],
      packed["ln2_g"], packed["ln2_b"],
      packed["w_heads"], packed["b_heads"])

    return out_flat.reshape(B_pad, S, HW)[:B]


# ----------------------------- params ----------------------------------------

def init_params(key, topic_size, input_dim=INPUT_DIM, d_model=D_MODEL,
                output_dim=OUTPUT_DIM, n_layers=N_LAYERS, d_feedforward=D_FF):
    def u(k, shape, a):
        return jax.random.uniform(k, shape, jnp.float32, -a, a)

    ks = iter(jax.random.split(key, 64))
    params = {
        "w_reduce": u(next(ks), (input_dim, d_model), 0.1),
        "b_reduce": jnp.zeros((d_model,), jnp.float32),
        "w_seg": u(next(ks), (d_model, output_dim), 0.1),
        "b_seg": jnp.zeros((output_dim,), jnp.float32),
        "w_top": u(next(ks), (d_model, topic_size), 0.1),
        "b_top": jnp.zeros((topic_size,), jnp.float32),
        "layers": [],
    }
    for _ in range(n_layers):
        params["layers"].append({
            "w_qkv": u(next(ks), (d_model, 3 * d_model), 0.05),
            "b_qkv": jnp.zeros((3 * d_model,), jnp.float32),
            "w_o": u(next(ks), (d_model, d_model), 0.05),
            "b_o": jnp.zeros((d_model,), jnp.float32),
            "w1": u(next(ks), (d_model, d_feedforward), 0.05),
            "b1": jnp.zeros((d_feedforward,), jnp.float32),
            "w2": u(next(ks), (d_feedforward, d_model), 0.05),
            "b2": jnp.zeros((d_model,), jnp.float32),
            "ln1_g": jnp.ones((d_model,), jnp.float32),
            "ln1_b": jnp.zeros((d_model,), jnp.float32),
            "ln2_g": jnp.ones((d_model,), jnp.float32),
            "ln2_b": jnp.zeros((d_model,), jnp.float32),
        })
    return params


def pack_params(params, topic_size):
    """Repack PyTorch-layout params into the fused-kernel layout (done once).

    QKV / output-projection weights stay in their natural lane-dense layouts
    (D, 3D) / (D, D); heads are taken as contiguous 32-wide column blocks in
    the kernel (same convention as column-sliced per-head weights).
    """
    D = D_MODEL
    HW = _head_slab_width(topic_size)

    stack = lambda key: jnp.stack([lp[key] for lp in params["layers"]])
    stack_row = lambda key: jnp.stack(
        [lp[key].reshape(1, -1) for lp in params["layers"]])

    # Merged, lane-dense head projection:
    #   col 0            -> seg logit difference (softmax ch0 == sigmoid(l0-l1))
    #   cols 1..topic    -> topic logits
    #   remaining cols   -> zero padding up to a multiple of 128 lanes
    seg_w = (params["w_seg"][:, 0] - params["w_seg"][:, 1])[:, None]    # (D, 1)
    seg_b = (params["b_seg"][0] - params["b_seg"][1])[None]             # (1,)
    w_heads = jnp.concatenate(
        [seg_w, params["w_top"],
         jnp.zeros((D, HW - 1 - topic_size), jnp.float32)], axis=1)     # (D, HW)
    b_heads = jnp.concatenate(
        [seg_b, params["b_top"],
         jnp.zeros((HW - 1 - topic_size,), jnp.float32)], axis=0).reshape(1, HW)

    return {
        "w_reduce": params["w_reduce"].astype(MM_DTYPE),            # (IN, D)
        "b_reduce": params["b_reduce"].reshape(1, D).astype(jnp.float32),
        "w_qkv": stack("w_qkv").astype(MM_DTYPE),                   # (L, D, 3D)
        "b_qkv": stack_row("b_qkv").astype(jnp.float32),            # (L, 1, 3D)
        "w_o": stack("w_o").astype(MM_DTYPE),                       # (L, D, D)
        "b_o": stack_row("b_o").astype(jnp.float32),                # (L, 1, D)
        "w1": stack("w1").astype(MM_DTYPE),                         # (L, D, DFF)
        "b1": stack_row("b1").astype(jnp.float32),                  # (L, 1, DFF)
        "w2": stack("w2").astype(MM_DTYPE),                         # (L, DFF, D)
        "b2": stack_row("b2").astype(jnp.float32),                  # (L, 1, D)
        "ln1_g": stack_row("ln1_g").astype(jnp.float32),
        "ln1_b": stack_row("ln1_b").astype(jnp.float32),
        "ln2_g": stack_row("ln2_g").astype(jnp.float32),
        "ln2_b": stack_row("ln2_b").astype(jnp.float32),
        "w_heads": w_heads.astype(MM_DTYPE),                        # (D, HW)
        "b_heads": b_heads.astype(jnp.float32),                     # (1, HW)
    }


# ----------------------------- forward ----------------------------------------

def forward(papers, packed, topic_size, top=0.7):
    # pad_sequence(batch_first=True, padding_value=0); S stays == max(len) so
    # the unmasked-attention semantics match the reference exactly.
    lens = [int(p.shape[0]) for p in papers]
    S = max(lens)
    padded = jnp.stack(
        [jnp.pad(p, ((0, S - p.shape[0]), (0, 0))) for p in papers], axis=0)

    slab = transformer_classifier_fused(padded, packed)        # (B, S, HW) f32

    # softmax over 2 classes, channel 0  ==  sigmoid(logit0 - logit1)
    seg_prob = jax.nn.sigmoid(slab[..., 0])                    # (B, S)
    seg_label = (seg_prob >= top).astype(jnp.int32)            # torch .long()
    topic_logits = slab[..., 1:1 + topic_size]                 # (B, S, topic)

    segment_probability_papers = [seg_prob[i, :l] for i, l in enumerate(lens)]
    segment_label_papers = [seg_label[i, :l] for i, l in enumerate(lens)]
    topic_probability_papers = [topic_logits[i, :l] for i, l in enumerate(lens)]
    return segment_probability_papers, segment_label_papers, topic_probability_papers


# ----------------------------- demo -------------------------------------------

if __name__ == "__main__":
    topic_size = 16
    lens = [6, 8]                       # variable-length "papers" (sentences x emb)

    key = jax.random.PRNGKey(0)
    k_data, k_params = jax.random.split(key)
    data_keys = jax.random.split(k_data, len(lens))
    papers = [jax.random.normal(data_keys[i], (l, INPUT_DIM), jnp.float32)
              for i, l in enumerate(lens)]

    params = init_params(k_params, topic_size)
    packed = pack_params(params, topic_size)

    seg_probs, seg_labels, topic_probs = forward(papers, packed, topic_size)
    for t in seg_probs + seg_labels + topic_probs:
        jax.block_until_ready(t)

    # light sanity checks
    assert seg_probs[0].shape == (6,) and seg_probs[1].shape == (8,)
    assert seg_labels[1].dtype == jnp.int32
    assert topic_probs[1].shape == (8, topic_size)
    assert bool(jnp.all(jnp.isfinite(seg_probs[1])))
    print("KERNEL_OK")
</pallas_src>

<mosaic_0001>
module attributes {stable_mosaic.version = 11 : i64} {
  func.func @kernel(%arg0: i32, %arg1: memref<16x768xbf16, #tpu.memory_space<vmem>>, %arg2: memref<768x128xbf16, #tpu.memory_space<vmem>>, %arg3: memref<1x128xf32, #tpu.memory_space<vmem>>, %arg4: memref<2x128x384xbf16, #tpu.memory_space<vmem>>, %arg5: memref<2x1x384xf32, #tpu.memory_space<vmem>>, %arg6: memref<2x128x128xbf16, #tpu.memory_space<vmem>>, %arg7: memref<2x1x128xf32, #tpu.memory_space<vmem>>, %arg8: memref<2x128x512xbf16, #tpu.memory_space<vmem>>, %arg9: memref<2x1x512xf32, #tpu.memory_space<vmem>>, %arg10: memref<2x512x128xbf16, #tpu.memory_space<vmem>>, %arg11: memref<2x1x128xf32, #tpu.memory_space<vmem>>, %arg12: memref<2x1x128xf32, #tpu.memory_space<vmem>>, %arg13: memref<2x1x128xf32, #tpu.memory_space<vmem>>, %arg14: memref<2x1x128xf32, #tpu.memory_space<vmem>>, %arg15: memref<2x1x128xf32, #tpu.memory_space<vmem>>, %arg16: memref<128x128xbf16, #tpu.memory_space<vmem>>, %arg17: memref<1x128xf32, #tpu.memory_space<vmem>>, %arg18: memref<16x128xf32, #tpu.memory_space<vmem>>) attributes {dimension_semantics = [#tpu.dimension_semantics<parallel>], iteration_bounds = array<i64: 1>, scalar_prefetch = 0 : i64, scratch_operands = 0 : i64, tpu.core_type = #tpu.core_type<tc>, window_params = [{transform_indices = @transform_0, window_bounds = array<i64: 16, 768>}, {pipeline_mode = #tpu.pipeline_mode<synchronous>, transform_indices = @transform_1, window_bounds = array<i64: 768, 128>}, {pipeline_mode = #tpu.pipeline_mode<synchronous>, transform_indices = @transform_2, window_bounds = array<i64: 1, 128>}, {pipeline_mode = #tpu.pipeline_mode<synchronous>, transform_indices = @transform_3, window_bounds = array<i64: 2, 128, 384>}, {pipeline_mode = #tpu.pipeline_mode<synchronous>, transform_indices = @transform_4, window_bounds = array<i64: 2, 1, 384>}, {pipeline_mode = #tpu.pipeline_mode<synchronous>, transform_indices = @transform_5, window_bounds = array<i64: 2, 128, 128>}, {pipeline_mode = #tpu.pipeline_mode<synchronous>, transform_indices = @transform_6, window_bounds = array<i64: 2, 1, 128>}, {pipeline_mode = #tpu.pipeline_mode<synchronous>, transform_indices = @transform_7, window_bounds = array<i64: 2, 128, 512>}, {pipeline_mode = #tpu.pipeline_mode<synchronous>, transform_indices = @transform_8, window_bounds = array<i64: 2, 1, 512>}, {pipeline_mode = #tpu.pipeline_mode<synchronous>, transform_indices = @transform_9, window_bounds = array<i64: 2, 512, 128>}, {pipeline_mode = #tpu.pipeline_mode<synchronous>, transform_indices = @transform_10, window_bounds = array<i64: 2, 1, 128>}, {pipeline_mode = #tpu.pipeline_mode<synchronous>, transform_indices = @transform_11, window_bounds = array<i64: 2, 1, 128>}, {pipeline_mode = #tpu.pipeline_mode<synchronous>, transform_indices = @transform_12, window_bounds = array<i64: 2, 1, 128>}, {pipeline_mode = #tpu.pipeline_mode<synchronous>, transform_indices = @transform_13, window_bounds = array<i64: 2, 1, 128>}, {pipeline_mode = #tpu.pipeline_mode<synchronous>, transform_indices = @transform_14, window_bounds = array<i64: 2, 1, 128>}, {pipeline_mode = #tpu.pipeline_mode<synchronous>, transform_indices = @transform_15, window_bounds = array<i64: 128, 128>}, {pipeline_mode = #tpu.pipeline_mode<synchronous>, transform_indices = @transform_16, window_bounds = array<i64: 1, 128>}, {transform_indices = @transform_17, window_bounds = array<i64: 16, 128>}]} {
    %c0 = arith.constant 0 : index
    %c0_0 = arith.constant 0 : index
    %0 = vector.load %arg1[%c0, %c0_0] : memref<16x768xbf16, #tpu.memory_space<vmem>>, vector<16x768xbf16>
    %c0_1 = arith.constant 0 : index
    %c0_2 = arith.constant 0 : index
    %1 = vector.load %arg2[%c0_1, %c0_2] : memref<768x128xbf16, #tpu.memory_space<vmem>>, vector<768x128xbf16>
    %cst = arith.constant dense<0.000000e+00> : vector<16x128xf32>
    %2 = tpu.matmul %0, %1, %cst {dimension_numbers = #tpu.dot_dimension_numbers<[1], [0], [0], [1], [0, 0, 1, 1], [], []>} : vector<16x768xbf16>, vector<768x128xbf16>, vector<16x128xf32> -> vector<16x128xf32>
    %c0_3 = arith.constant 0 : index
    %c0_4 = arith.constant 0 : index
    %3 = vector.load %arg3[%c0_3, %c0_4] : memref<1x128xf32, #tpu.memory_space<vmem>>, vector<1x128xf32>
    %4 = vector.broadcast %3 : vector<1x128xf32> to vector<16x128xf32>
    %5 = arith.addf %2, %4 : vector<16x128xf32>
    %c0_5 = arith.constant 0 : index
    %c0_6 = arith.constant 0 : index
    %c0_7 = arith.constant 0 : index
    %6 = vector.load %arg4[%c0_5, %c0_6, %c0_7] : memref<2x128x384xbf16, #tpu.memory_space<vmem>>, vector<1x128x384xbf16>
    %7 = vector.shape_cast %6 : vector<1x128x384xbf16> to vector<128x384xbf16>
    %c0_8 = arith.constant 0 : index
    %c0_9 = arith.constant 0 : index
    %c0_10 = arith.constant 0 : index
    %8 = vector.load %arg5[%c0_8, %c0_9, %c0_10] : memref<2x1x384xf32, #tpu.memory_space<vmem>>, vector<1x1x384xf32>
    %9 = vector.shape_cast %8 : vector<1x1x384xf32> to vector<1x384xf32>
    %c0_11 = arith.constant 0 : index
    %c0_12 = arith.constant 0 : index
    %c0_13 = arith.constant 0 : index
    %10 = vector.load %arg6[%c0_11, %c0_12, %c0_13] : memref<2x128x128xbf16, #tpu.memory_space<vmem>>, vector<1x128x128xbf16>
    %11 = vector.shape_cast %10 : vector<1x128x128xbf16> to vector<128x128xbf16>
    %c0_14 = arith.constant 0 : index
    %c0_15 = arith.constant 0 : index
    %c0_16 = arith.constant 0 : index
    %12 = vector.load %arg7[%c0_14, %c0_15, %c0_16] : memref<2x1x128xf32, #tpu.memory_space<vmem>>, vector<1x1x128xf32>
    %13 = vector.shape_cast %12 : vector<1x1x128xf32> to vector<1x128xf32>
    %14 = arith.truncf %5 : vector<16x128xf32> to vector<16x128xbf16>
    %cst_17 = arith.constant dense<0.000000e+00> : vector<16x384xf32>
    %15 = tpu.matmul %14, %7, %cst_17 {dimension_numbers = #tpu.dot_dimension_numbers<[1], [0], [0], [1], [0, 0, 1, 1], [], []>} : vector<16x128xbf16>, vector<128x384xbf16>, vector<16x384xf32> -> vector<16x384xf32>
    %16 = vector.broadcast %9 : vector<1x384xf32> to vector<16x384xf32>
    %17 = arith.addf %15, %16 : vector<16x384xf32>
    %18 = vector.extract_strided_slice %17 {offsets = [0, 0], sizes = [16, 32], strides = [1, 1]} : vector<16x384xf32> to vector<16x32xf32>
    %19 = vector.shape_cast %18 : vector<16x32xf32> to vector<2x8x32xf32>
    %20 = vector.extract_strided_slice %17 {offsets = [0, 128], sizes = [16, 32], strides = [1, 1]} : vector<16x384xf32> to vector<16x32xf32>
    %21 = vector.shape_cast %20 : vector<16x32xf32> to vector<2x8x32xf32>
    %22 = vector.extract_strided_slice %17 {offsets = [0, 256], sizes = [16, 32], strides = [1, 1]} : vector<16x384xf32> to vector<16x32xf32>
    %23 = vector.shape_cast %22 : vector<16x32xf32> to vector<2x8x32xf32>
    %24 = arith.truncf %19 : vector<2x8x32xf32> to vector<2x8x32xbf16>
    %25 = arith.truncf %21 : vector<2x8x32xf32> to vector<2x8x32xbf16>
    "tpu.trace_start"() <{level = 10 : i32, message = "bqe,bke->bqk"}> : () -> ()
    %cst_18 = arith.constant dense<0.000000e+00> : vector<2x8x8xf32>
    %26 = tpu.matmul %24, %25, %cst_18 {dimension_numbers = #tpu.dot_dimension_numbers<[2], [2], [1], [1], [0, 0, 0, 1, 1, 1], [0], [0]>} : vector<2x8x32xbf16>, vector<2x8x32xbf16>, vector<2x8x8xf32> -> vector<2x8x8xf32>
    "tpu.trace_stop"() : () -> ()
    %cst_19 = arith.constant 0.176776692 : f32
    %27 = vector.broadcast %cst_19 : f32 to vector<2x8x8xf32>
    %28 = arith.mulf %26, %27 : vector<2x8x8xf32>
    %cst_20 = arith.constant dense<0xFF800000> : vector<2x8xf32>
    %29 = vector.multi_reduction <maximumf>, %28, %cst_20 [2] : vector<2x8x8xf32> to vector<2x8xf32>
    %30 = vector.shape_cast %29 : vector<2x8xf32> to vector<2x8x1xf32>
    %31 = vector.broadcast %30 : vector<2x8x1xf32> to vector<2x8x8xf32>
    %32 = arith.subf %28, %31 : vector<2x8x8xf32>
    %33 = math.exp %32 : vector<2x8x8xf32>
    %cst_21 = arith.constant dense<0.000000e+00> : vector<2x8xf32>
    %34 = vector.multi_reduction <add>, %33, %cst_21 [2] : vector<2x8x8xf32> to vector<2x8xf32>
    %35 = vector.shape_cast %34 : vector<2x8xf32> to vector<2x8x1xf32>
    %36 = tpu.reciprocal %35 {approx = true} : vector<2x8x1xf32> -> vector<2x8x1xf32>
    %37 = vector.broadcast %36 : vector<2x8x1xf32> to vector<2x8x8xf32>
    %38 = arith.mulf %33, %37 : vector<2x8x8xf32>
    %39 = arith.truncf %38 : vector<2x8x8xf32> to vector<2x8x8xbf16>
    %40 = arith.truncf %23 : vector<2x8x32xf32> to vector<2x8x32xbf16>
    "tpu.trace_start"() <{level = 10 : i32, message = "bqk,bke->bqe"}> : () -> ()
    %cst_22 = arith.constant dense<0.000000e+00> : vector<2x8x32xf32>
    %41 = tpu.matmul %39, %40, %cst_22 {dimension_numbers = #tpu.dot_dimension_numbers<[2], [1], [1], [2], [0, 0, 0, 1, 1, 2], [0], [0]>} : vector<2x8x8xbf16>, vector<2x8x32xbf16>, vector<2x8x32xf32> -> vector<2x8x32xf32>
    "tpu.trace_stop"() : () -> ()
    %42 = vector.extract_strided_slice %17 {offsets = [0, 32], sizes = [16, 32], strides = [1, 1]} : vector<16x384xf32> to vector<16x32xf32>
    %43 = vector.shape_cast %42 : vector<16x32xf32> to vector<2x8x32xf32>
    %44 = vector.extract_strided_slice %17 {offsets = [0, 160], sizes = [16, 32], strides = [1, 1]} : vector<16x384xf32> to vector<16x32xf32>
    %45 = vector.shape_cast %44 : vector<16x32xf32> to vector<2x8x32xf32>
    %46 = vector.extract_strided_slice %17 {offsets = [0, 288], sizes = [16, 32], strides = [1, 1]} : vector<16x384xf32> to vector<16x32xf32>
    %47 = vector.shape_cast %46 : vector<16x32xf32> to vector<2x8x32xf32>
    %48 = arith.truncf %43 : vector<2x8x32xf32> to vector<2x8x32xbf16>
    %49 = arith.truncf %45 : vector<2x8x32xf32> to vector<2x8x32xbf16>
    "tpu.trace_start"() <{level = 10 : i32, message = "bqe,bke->bqk"}> : () -> ()
    %cst_23 = arith.constant dense<0.000000e+00> : vector<2x8x8xf32>
    %50 = tpu.matmul %48, %49, %cst_23 {dimension_numbers = #tpu.dot_dimension_numbers<[2], [2], [1], [1], [0, 0, 0, 1, 1, 1], [0], [0]>} : vector<2x8x32xbf16>, vector<2x8x32xbf16>, vector<2x8x8xf32> -> vector<2x8x8xf32>
    "tpu.trace_stop"() : () -> ()
    %cst_24 = arith.constant 0.176776692 : f32
    %51 = vector.broadcast %cst_24 : f32 to vector<2x8x8xf32>
    %52 = arith.mulf %50, %51 : vector<2x8x8xf32>
    %cst_25 = arith.constant dense<0xFF800000> : vector<2x8xf32>
    %53 = vector.multi_reduction <maximumf>, %52, %cst_25 [2] : vector<2x8x8xf32> to vector<2x8xf32>
    %54 = vector.shape_cast %53 : vector<2x8xf32> to vector<2x8x1xf32>
    %55 = vector.broadcast %54 : vector<2x8x1xf32> to vector<2x8x8xf32>
    %56 = arith.subf %52, %55 : vector<2x8x8xf32>
    %57 = math.exp %56 : vector<2x8x8xf32>
    %cst_26 = arith.constant dense<0.000000e+00> : vector<2x8xf32>
    %58 = vector.multi_reduction <add>, %57, %cst_26 [2] : vector<2x8x8xf32> to vector<2x8xf32>
    %59 = vector.shape_cast %58 : vector<2x8xf32> to vector<2x8x1xf32>
    %60 = tpu.reciprocal %59 {approx = true} : vector<2x8x1xf32> -> vector<2x8x1xf32>
    %61 = vector.broadcast %60 : vector<2x8x1xf32> to vector<2x8x8xf32>
    %62 = arith.mulf %57, %61 : vector<2x8x8xf32>
    %63 = arith.truncf %62 : vector<2x8x8xf32> to vector<2x8x8xbf16>
    %64 = arith.truncf %47 : vector<2x8x32xf32> to vector<2x8x32xbf16>
    "tpu.trace_start"() <{level = 10 : i32, message = "bqk,bke->bqe"}> : () -> ()
    %cst_27 = arith.constant dense<0.000000e+00> : vector<2x8x32xf32>
    %65 = tpu.matmul %63, %64, %cst_27 {dimension_numbers = #tpu.dot_dimension_numbers<[2], [1], [1], [2], [0, 0, 0, 1, 1, 2], [0], [0]>} : vector<2x8x8xbf16>, vector<2x8x32xbf16>, vector<2x8x32xf32> -> vector<2x8x32xf32>
    "tpu.trace_stop"() : () -> ()
    %66 = vector.extract_strided_slice %17 {offsets = [0, 64], sizes = [16, 32], strides = [1, 1]} : vector<16x384xf32> to vector<16x32xf32>
    %67 = vector.shape_cast %66 : vector<16x32xf32> to vector<2x8x32xf32>
    %68 = vector.extract_strided_slice %17 {offsets = [0, 192], sizes = [16, 32], strides = [1, 1]} : vector<16x384xf32> to vector<16x32xf32>
    %69 = vector.shape_cast %68 : vector<16x32xf32> to vector<2x8x32xf32>
    %70 = vector.extract_strided_slice %17 {offsets = [0, 320], sizes = [16, 32], strides = [1, 1]} : vector<16x384xf32> to vector<16x32xf32>
    %71 = vector.shape_cast %70 : vector<16x32xf32> to vector<2x8x32xf32>
    %72 = arith.truncf %67 : vector<2x8x32xf32> to vector<2x8x32xbf16>
    %73 = arith.truncf %69 : vector<2x8x32xf32> to vector<2x8x32xbf16>
    "tpu.trace_start"() <{level = 10 : i32, message = "bqe,bke->bqk"}> : () -> ()
    %cst_28 = arith.constant dense<0.000000e+00> : vector<2x8x8xf32>
    %74 = tpu.matmul %72, %73, %cst_28 {dimension_numbers = #tpu.dot_dimension_numbers<[2], [2], [1], [1], [0, 0, 0, 1, 1, 1], [0], [0]>} : vector<2x8x32xbf16>, vector<2x8x32xbf16>, vector<2x8x8xf32> -> vector<2x8x8xf32>
    "tpu.trace_stop"() : () -> ()
    %cst_29 = arith.constant 0.176776692 : f32
    %75 = vector.broadcast %cst_29 : f32 to vector<2x8x8xf32>
    %76 = arith.mulf %74, %75 : vector<2x8x8xf32>
    %cst_30 = arith.constant dense<0xFF800000> : vector<2x8xf32>
    %77 = vector.multi_reduction <maximumf>, %76, %cst_30 [2] : vector<2x8x8xf32> to vector<2x8xf32>
    %78 = vector.shape_cast %77 : vector<2x8xf32> to vector<2x8x1xf32>
    %79 = vector.broadcast %78 : vector<2x8x1xf32> to vector<2x8x8xf32>
    %80 = arith.subf %76, %79 : vector<2x8x8xf32>
    %81 = math.exp %80 : vector<2x8x8xf32>
    %cst_31 = arith.constant dense<0.000000e+00> : vector<2x8xf32>
    %82 = vector.multi_reduction <add>, %81, %cst_31 [2] : vector<2x8x8xf32> to vector<2x8xf32>
    %83 = vector.shape_cast %82 : vector<2x8xf32> to vector<2x8x1xf32>
    %84 = tpu.reciprocal %83 {approx = true} : vector<2x8x1xf32> -> vector<2x8x1xf32>
    %85 = vector.broadcast %84 : vector<2x8x1xf32> to vector<2x8x8xf32>
    %86 = arith.mulf %81, %85 : vector<2x8x8xf32>
    %87 = arith.truncf %86 : vector<2x8x8xf32> to vector<2x8x8xbf16>
    %88 = arith.truncf %71 : vector<2x8x32xf32> to vector<2x8x32xbf16>
    "tpu.trace_start"() <{level = 10 : i32, message = "bqk,bke->bqe"}> : () -> ()
    %cst_32 = arith.constant dense<0.000000e+00> : vector<2x8x32xf32>
    %89 = tpu.matmul %87, %88, %cst_32 {dimension_numbers = #tpu.dot_dimension_numbers<[2], [1], [1], [2], [0, 0, 0, 1, 1, 2], [0], [0]>} : vector<2x8x8xbf16>, vector<2x8x32xbf16>, vector<2x8x32xf32> -> vector<2x8x32xf32>
    "tpu.trace_stop"() : () -> ()
    %90 = vector.extract_strided_slice %17 {offsets = [0, 96], sizes = [16, 32], strides = [1, 1]} : vector<16x384xf32> to vector<16x32xf32>
    %91 = vector.shape_cast %90 : vector<16x32xf32> to vector<2x8x32xf32>
    %92 = vector.extract_strided_slice %17 {offsets = [0, 224], sizes = [16, 32], strides = [1, 1]} : vector<16x384xf32> to vector<16x32xf32>
    %93 = vector.shape_cast %92 : vector<16x32xf32> to vector<2x8x32xf32>
    %94 = vector.extract_strided_slice %17 {offsets = [0, 352], sizes = [16, 32], strides = [1, 1]} : vector<16x384xf32> to vector<16x32xf32>
    %95 = vector.shape_cast %94 : vector<16x32xf32> to vector<2x8x32xf32>
    %96 = arith.truncf %91 : vector<2x8x32xf32> to vector<2x8x32xbf16>
    %97 = arith.truncf %93 : vector<2x8x32xf32> to vector<2x8x32xbf16>
    "tpu.trace_start"() <{level = 10 : i32, message = "bqe,bke->bqk"}> : () -> ()
    %cst_33 = arith.constant dense<0.000000e+00> : vector<2x8x8xf32>
    %98 = tpu.matmul %96, %97, %cst_33 {dimension_numbers = #tpu.dot_dimension_numbers<[2], [2], [1], [1], [0, 0, 0, 1, 1, 1], [0], [0]>} : vector<2x8x32xbf16>, vector<2x8x32xbf16>, vector<2x8x8xf32> -> vector<2x8x8xf32>
    "tpu.trace_stop"() : () -> ()
    %cst_34 = arith.constant 0.176776692 : f32
    %99 = vector.broadcast %cst_34 : f32 to vector<2x8x8xf32>
    %100 = arith.mulf %98, %99 : vector<2x8x8xf32>
    %cst_35 = arith.constant dense<0xFF800000> : vector<2x8xf32>
    %101 = vector.multi_reduction <maximumf>, %100, %cst_35 [2] : vector<2x8x8xf32> to vector<2x8xf32>
    %102 = vector.shape_cast %101 : vector<2x8xf32> to vector<2x8x1xf32>
    %103 = vector.broadcast %102 : vector<2x8x1xf32> to vector<2x8x8xf32>
    %104 = arith.subf %100, %103 : vector<2x8x8xf32>
    %105 = math.exp %104 : vector<2x8x8xf32>
    %cst_36 = arith.constant dense<0.000000e+00> : vector<2x8xf32>
    %106 = vector.multi_reduction <add>, %105, %cst_36 [2] : vector<2x8x8xf32> to vector<2x8xf32>
    %107 = vector.shape_cast %106 : vector<2x8xf32> to vector<2x8x1xf32>
    %108 = tpu.reciprocal %107 {approx = true} : vector<2x8x1xf32> -> vector<2x8x1xf32>
    %109 = vector.broadcast %108 : vector<2x8x1xf32> to vector<2x8x8xf32>
    %110 = arith.mulf %105, %109 : vector<2x8x8xf32>
    %111 = arith.truncf %110 : vector<2x8x8xf32> to vector<2x8x8xbf16>
    %112 = arith.truncf %95 : vector<2x8x32xf32> to vector<2x8x32xbf16>
    "tpu.trace_start"() <{level = 10 : i32, message = "bqk,bke->bqe"}> : () -> ()
    %cst_37 = arith.constant dense<0.000000e+00> : vector<2x8x32xf32>
    %113 = tpu.matmul %111, %112, %cst_37 {dimension_numbers = #tpu.dot_dimension_numbers<[2], [1], [1], [2], [0, 0, 0, 1, 1, 2], [0], [0]>} : vector<2x8x8xbf16>, vector<2x8x32xbf16>, vector<2x8x32xf32> -> vector<2x8x32xf32>
    "tpu.trace_stop"() : () -> ()
    %114 = tpu.concatenate %41, %65, %89, %113 in 2 : vector<2x8x32xf32>, vector<2x8x32xf32>, vector<2x8x32xf32>, vector<2x8x32xf32> -> vector<2x8x128xf32>
    %115 = vector.shape_cast %114 : vector<2x8x128xf32> to vector<16x128xf32>
    %116 = arith.truncf %115 : vector<16x128xf32> to vector<16x128xbf16>
    %cst_38 = arith.constant dense<0.000000e+00> : vector<16x128xf32>
    %117 = tpu.matmul %116, %11, %cst_38 {dimension_numbers = #tpu.dot_dimension_numbers<[1], [0], [0], [1], [0, 0, 1, 1], [], []>} : vector<16x128xbf16>, vector<128x128xbf16>, vector<16x128xf32> -> vector<16x128xf32>
    %118 = vector.broadcast %13 : vector<1x128xf32> to vector<16x128xf32>
    %119 = arith.addf %117, %118 : vector<16x128xf32>
    %c0_39 = arith.constant 0 : index
    %c0_40 = arith.constant 0 : index
    %c0_41 = arith.constant 0 : index
    %120 = vector.load %arg12[%c0_39, %c0_40, %c0_41] : memref<2x1x128xf32, #tpu.memory_space<vmem>>, vector<1x1x128xf32>
    %121 = vector.shape_cast %120 : vector<1x1x128xf32> to vector<1x128xf32>
    %c0_42 = arith.constant 0 : index
    %c0_43 = arith.constant 0 : index
    %c0_44 = arith.constant 0 : index
    %122 = vector.load %arg13[%c0_42, %c0_43, %c0_44] : memref<2x1x128xf32, #tpu.memory_space<vmem>>, vector<1x1x128xf32>
    %123 = vector.shape_cast %122 : vector<1x1x128xf32> to vector<1x128xf32>
    %124 = arith.addf %5, %119 : vector<16x128xf32>
    %cst_45 = arith.constant dense<0.000000e+00> : vector<16xf32>
    %125 = vector.multi_reduction <add>, %124, %cst_45 [1] : vector<16x128xf32> to vector<16xf32>
    %126 = vector.shape_cast %125 : vector<16xf32> to vector<16x1xf32>
    %cst_46 = arith.constant 1.280000e+02 : f32
    %127 = vector.broadcast %cst_46 : f32 to vector<16x1xf32>
    %128 = arith.divf %126, %127 : vector<16x1xf32>
    %129 = vector.broadcast %128 : vector<16x1xf32> to vector<16x128xf32>
    %130 = arith.subf %124, %129 : vector<16x128xf32>
    %131 = arith.mulf %130, %130 : vector<16x128xf32>
    %cst_47 = arith.constant dense<0.000000e+00> : vector<16xf32>
    %132 = vector.multi_reduction <add>, %131, %cst_47 [1] : vector<16x128xf32> to vector<16xf32>
    %133 = vector.shape_cast %132 : vector<16xf32> to vector<16x1xf32>
    %cst_48 = arith.constant 1.280000e+02 : f32
    %134 = vector.broadcast %cst_48 : f32 to vector<16x1xf32>
    %135 = arith.divf %133, %134 : vector<16x1xf32>
    %136 = vector.broadcast %128 : vector<16x1xf32> to vector<16x128xf32>
    %137 = arith.subf %124, %136 : vector<16x128xf32>
    %cst_49 = arith.constant 9.99999974E-6 : f32
    %138 = vector.broadcast %cst_49 : f32 to vector<16x1xf32>
    %139 = arith.addf %135, %138 : vector<16x1xf32>
    %140 = math.rsqrt %139 : vector<16x1xf32>
    %141 = vector.broadcast %140 : vector<16x1xf32> to vector<16x128xf32>
    %142 = arith.mulf %137, %141 : vector<16x128xf32>
    %143 = vector.broadcast %121 : vector<1x128xf32> to vector<16x128xf32>
    %144 = arith.mulf %142, %143 : vector<16x128xf32>
    %145 = vector.broadcast %123 : vector<1x128xf32> to vector<16x128xf32>
    %146 = arith.addf %144, %145 : vector<16x128xf32>
    %c0_50 = arith.constant 0 : index
    %c0_51 = arith.constant 0 : index
    %c0_52 = arith.constant 0 : index
    %147 = vector.load %arg8[%c0_50, %c0_51, %c0_52] : memref<2x128x512xbf16, #tpu.memory_space<vmem>>, vector<1x128x512xbf16>
    %148 = vector.shape_cast %147 : vector<1x128x512xbf16> to vector<128x512xbf16>
    %149 = arith.truncf %146 : vector<16x128xf32> to vector<16x128xbf16>
    %cst_53 = arith.constant dense<0.000000e+00> : vector<16x512xf32>
    %150 = tpu.matmul %149, %148, %cst_53 {dimension_numbers = #tpu.dot_dimension_numbers<[1], [0], [0], [1], [0, 0, 1, 1], [], []>} : vector<16x128xbf16>, vector<128x512xbf16>, vector<16x512xf32> -> vector<16x512xf32>
    %c0_54 = arith.constant 0 : index
    %c0_55 = arith.constant 0 : index
    %c0_56 = arith.constant 0 : index
    %151 = vector.load %arg9[%c0_54, %c0_55, %c0_56] : memref<2x1x512xf32, #tpu.memory_space<vmem>>, vector<1x1x512xf32>
    %152 = vector.shape_cast %151 : vector<1x1x512xf32> to vector<1x512xf32>
    %153 = vector.broadcast %152 : vector<1x512xf32> to vector<16x512xf32>
    %154 = arith.addf %150, %153 : vector<16x512xf32>
    %cst_57 = arith.constant 0.000000e+00 : f32
    %155 = vector.broadcast %cst_57 : f32 to vector<16x512xf32>
    %156 = arith.maximumf %154, %155 : vector<16x512xf32>
    %c0_58 = arith.constant 0 : index
    %c0_59 = arith.constant 0 : index
    %c0_60 = arith.constant 0 : index
    %157 = vector.load %arg10[%c0_58, %c0_59, %c0_60] : memref<2x512x128xbf16, #tpu.memory_space<vmem>>, vector<1x512x128xbf16>
    %158 = vector.shape_cast %157 : vector<1x512x128xbf16> to vector<512x128xbf16>
    %159 = arith.truncf %156 : vector<16x512xf32> to vector<16x512xbf16>
    %cst_61 = arith.constant dense<0.000000e+00> : vector<16x128xf32>
    %160 = tpu.matmul %159, %158, %cst_61 {dimension_numbers = #tpu.dot_dimension_numbers<[1], [0], [0], [1], [0, 0, 1, 1], [], []>} : vector<16x512xbf16>, vector<512x128xbf16>, vector<16x128xf32> -> vector<16x128xf32>
    %c0_62 = arith.constant 0 : index
    %c0_63 = arith.constant 0 : index
    %c0_64 = arith.constant 0 : index
    %161 = vector.load %arg11[%c0_62, %c0_63, %c0_64] : memref<2x1x128xf32, #tpu.memory_space<vmem>>, vector<1x1x128xf32>
    %162 = vector.shape_cast %161 : vector<1x1x128xf32> to vector<1x128xf32>
    %163 = vector.broadcast %162 : vector<1x128xf32> to vector<16x128xf32>
    %164 = arith.addf %160, %163 : vector<16x128xf32>
    %c0_65 = arith.constant 0 : index
    %c0_66 = arith.constant 0 : index
    %c0_67 = arith.constant 0 : index
    %165 = vector.load %arg14[%c0_65, %c0_66, %c0_67] : memref<2x1x128xf32, #tpu.memory_space<vmem>>, vector<1x1x128xf32>
    %166 = vector.shape_cast %165 : vector<1x1x128xf32> to vector<1x128xf32>
    %c0_68 = arith.constant 0 : index
    %c0_69 = arith.constant 0 : index
    %c0_70 = arith.constant 0 : index
    %167 = vector.load %arg15[%c0_68, %c0_69, %c0_70] : memref<2x1x128xf32, #tpu.memory_space<vmem>>, vector<1x1x128xf32>
    %168 = vector.shape_cast %167 : vector<1x1x128xf32> to vector<1x128xf32>
    %169 = arith.addf %146, %164 : vector<16x128xf32>
    %cst_71 = arith.constant dense<0.000000e+00> : vector<16xf32>
    %170 = vector.multi_reduction <add>, %169, %cst_71 [1] : vector<16x128xf32> to vector<16xf32>
    %171 = vector.shape_cast %170 : vector<16xf32> to vector<16x1xf32>
    %cst_72 = arith.constant 1.280000e+02 : f32
    %172 = vector.broadcast %cst_72 : f32 to vector<16x1xf32>
    %173 = arith.divf %171, %172 : vector<16x1xf32>
    %174 = vector.broadcast %173 : vector<16x1xf32> to vector<16x128xf32>
    %175 = arith.subf %169, %174 : vector<16x128xf32>
    %176 = arith.mulf %175, %175 : vector<16x128xf32>
    %cst_73 = arith.constant dense<0.000000e+00> : vector<16xf32>
    %177 = vector.multi_reduction <add>, %176, %cst_73 [1] : vector<16x128xf32> to vector<16xf32>
    %178 = vector.shape_cast %177 : vector<16xf32> to vector<16x1xf32>
    %cst_74 = arith.constant 1.280000e+02 : f32
    %179 = vector.broadcast %cst_74 : f32 to vector<16x1xf32>
    %180 = arith.divf %178, %179 : vector<16x1xf32>
    %181 = vector.broadcast %173 : vector<16x1xf32> to vector<16x128xf32>
    %182 = arith.subf %169, %181 : vector<16x128xf32>
    %cst_75 = arith.constant 9.99999974E-6 : f32
    %183 = vector.broadcast %cst_75 : f32 to vector<16x1xf32>
    %184 = arith.addf %180, %183 : vector<16x1xf32>
    %185 = math.rsqrt %184 : vector<16x1xf32>
    %186 = vector.broadcast %185 : vector<16x1xf32> to vector<16x128xf32>
    %187 = arith.mulf %182, %186 : vector<16x128xf32>
    %188 = vector.broadcast %166 : vector<1x128xf32> to vector<16x128xf32>
    %189 = arith.mulf %187, %188 : vector<16x128xf32>
    %190 = vector.broadcast %168 : vector<1x128xf32> to vector<16x128xf32>
    %191 = arith.addf %189, %190 : vector<16x128xf32>
    %c1 = arith.constant 1 : index
    %c0_76 = arith.constant 0 : index
    %c0_77 = arith.constant 0 : index
    %192 = vector.load %arg4[%c1, %c0_76, %c0_77] : memref<2x128x384xbf16, #tpu.memory_space<vmem>>, vector<1x128x384xbf16>
    %193 = vector.shape_cast %192 : vector<1x128x384xbf16> to vector<128x384xbf16>
    %c1_78 = arith.constant 1 : index
    %c0_79 = arith.constant 0 : index
    %c0_80 = arith.constant 0 : index
    %194 = vector.load %arg5[%c1_78, %c0_79, %c0_80] : memref<2x1x384xf32, #tpu.memory_space<vmem>>, vector<1x1x384xf32>
    %195 = vector.shape_cast %194 : vector<1x1x384xf32> to vector<1x384xf32>
    %c1_81 = arith.constant 1 : index
    %c0_82 = arith.constant 0 : index
    %c0_83 = arith.constant 0 : index
    %196 = vector.load %arg6[%c1_81, %c0_82, %c0_83] : memref<2x128x128xbf16, #tpu.memory_space<vmem>>, vector<1x128x128xbf16>
    %197 = vector.shape_cast %196 : vector<1x128x128xbf16> to vector<128x128xbf16>
    %c1_84 = arith.constant 1 : index
    %c0_85 = arith.constant 0 : index
    %c0_86 = arith.constant 0 : index
    %198 = vector.load %arg7[%c1_84, %c0_85, %c0_86] : memref<2x1x128xf32, #tpu.memory_space<vmem>>, vector<1x1x128xf32>
    %199 = vector.shape_cast %198 : vector<1x1x128xf32> to vector<1x128xf32>
    %200 = arith.truncf %191 : vector<16x128xf32> to vector<16x128xbf16>
    %cst_87 = arith.constant dense<0.000000e+00> : vector<16x384xf32>
    %201 = tpu.matmul %200, %193, %cst_87 {dimension_numbers = #tpu.dot_dimension_numbers<[1], [0], [0], [1], [0, 0, 1, 1], [], []>} : vector<16x128xbf16>, vector<128x384xbf16>, vector<16x384xf32> -> vector<16x384xf32>
    %202 = vector.broadcast %195 : vector<1x384xf32> to vector<16x384xf32>
    %203 = arith.addf %201, %202 : vector<16x384xf32>
    %204 = vector.extract_strided_slice %203 {offsets = [0, 0], sizes = [16, 32], strides = [1, 1]} : vector<16x384xf32> to vector<16x32xf32>
    %205 = vector.shape_cast %204 : vector<16x32xf32> to vector<2x8x32xf32>
    %206 = vector.extract_strided_slice %203 {offsets = [0, 128], sizes = [16, 32], strides = [1, 1]} : vector<16x384xf32> to vector<16x32xf32>
    %207 = vector.shape_cast %206 : vector<16x32xf32> to vector<2x8x32xf32>
    %208 = vector.extract_strided_slice %203 {offsets = [0, 256], sizes = [16, 32], strides = [1, 1]} : vector<16x384xf32> to vector<16x32xf32>
    %209 = vector.shape_cast %208 : vector<16x32xf32> to vector<2x8x32xf32>
    %210 = arith.truncf %205 : vector<2x8x32xf32> to vector<2x8x32xbf16>
    %211 = arith.truncf %207 : vector<2x8x32xf32> to vector<2x8x32xbf16>
    "tpu.trace_start"() <{level = 10 : i32, message = "bqe,bke->bqk"}> : () -> ()
    %cst_88 = arith.constant dense<0.000000e+00> : vector<2x8x8xf32>
    %212 = tpu.matmul %210, %211, %cst_88 {dimension_numbers = #tpu.dot_dimension_numbers<[2], [2], [1], [1], [0, 0, 0, 1, 1, 1], [0], [0]>} : vector<2x8x32xbf16>, vector<2x8x32xbf16>, vector<2x8x8xf32> -> vector<2x8x8xf32>
    "tpu.trace_stop"() : () -> ()
    %cst_89 = arith.constant 0.176776692 : f32
    %213 = vector.broadcast %cst_89 : f32 to vector<2x8x8xf32>
    %214 = arith.mulf %212, %213 : vector<2x8x8xf32>
    %cst_90 = arith.constant dense<0xFF800000> : vector<2x8xf32>
    %215 = vector.multi_reduction <maximumf>, %214, %cst_90 [2] : vector<2x8x8xf32> to vector<2x8xf32>
    %216 = vector.shape_cast %215 : vector<2x8xf32> to vector<2x8x1xf32>
    %217 = vector.broadcast %216 : vector<2x8x1xf32> to vector<2x8x8xf32>
    %218 = arith.subf %214, %217 : vector<2x8x8xf32>
    %219 = math.exp %218 : vector<2x8x8xf32>
    %cst_91 = arith.constant dense<0.000000e+00> : vector<2x8xf32>
    %220 = vector.multi_reduction <add>, %219, %cst_91 [2] : vector<2x8x8xf32> to vector<2x8xf32>
    %221 = vector.shape_cast %220 : vector<2x8xf32> to vector<2x8x1xf32>
    %222 = tpu.reciprocal %221 {approx = true} : vector<2x8x1xf32> -> vector<2x8x1xf32>
    %223 = vector.broadcast %222 : vector<2x8x1xf32> to vector<2x8x8xf32>
    %224 = arith.mulf %219, %223 : vector<2x8x8xf32>
    %225 = arith.truncf %224 : vector<2x8x8xf32> to vector<2x8x8xbf16>
    %226 = arith.truncf %209 : vector<2x8x32xf32> to vector<2x8x32xbf16>
    "tpu.trace_start"() <{level = 10 : i32, message = "bqk,bke->bqe"}> : () -> ()
    %cst_92 = arith.constant dense<0.000000e+00> : vector<2x8x32xf32>
    %227 = tpu.matmul %225, %226, %cst_92 {dimension_numbers = #tpu.dot_dimension_numbers<[2], [1], [1], [2], [0, 0, 0, 1, 1, 2], [0], [0]>} : vector<2x8x8xbf16>, vector<2x8x32xbf16>, vector<2x8x32xf32> -> vector<2x8x32xf32>
    "tpu.trace_stop"() : () -> ()
    %228 = vector.extract_strided_slice %203 {offsets = [0, 32], sizes = [16, 32], strides = [1, 1]} : vector<16x384xf32> to vector<16x32xf32>
    %229 = vector.shape_cast %228 : vector<16x32xf32> to vector<2x8x32xf32>
    %230 = vector.extract_strided_slice %203 {offsets = [0, 160], sizes = [16, 32], strides = [1, 1]} : vector<16x384xf32> to vector<16x32xf32>
    %231 = vector.shape_cast %230 : vector<16x32xf32> to vector<2x8x32xf32>
    %232 = vector.extract_strided_slice %203 {offsets = [0, 288], sizes = [16, 32], strides = [1, 1]} : vector<16x384xf32> to vector<16x32xf32>
    %233 = vector.shape_cast %232 : vector<16x32xf32> to vector<2x8x32xf32>
    %234 = arith.truncf %229 : vector<2x8x32xf32> to vector<2x8x32xbf16>
    %235 = arith.truncf %231 : vector<2x8x32xf32> to vector<2x8x32xbf16>
    "tpu.trace_start"() <{level = 10 : i32, message = "bqe,bke->bqk"}> : () -> ()
    %cst_93 = arith.constant dense<0.000000e+00> : vector<2x8x8xf32>
    %236 = tpu.matmul %234, %235, %cst_93 {dimension_numbers = #tpu.dot_dimension_numbers<[2], [2], [1], [1], [0, 0, 0, 1, 1, 1], [0], [0]>} : vector<2x8x32xbf16>, vector<2x8x32xbf16>, vector<2x8x8xf32> -> vector<2x8x8xf32>
    "tpu.trace_stop"() : () -> ()
    %cst_94 = arith.constant 0.176776692 : f32
    %237 = vector.broadcast %cst_94 : f32 to vector<2x8x8xf32>
    %238 = arith.mulf %236, %237 : vector<2x8x8xf32>
    %cst_95 = arith.constant dense<0xFF800000> : vector<2x8xf32>
    %239 = vector.multi_reduction <maximumf>, %238, %cst_95 [2] : vector<2x8x8xf32> to vector<2x8xf32>
    %240 = vector.shape_cast %239 : vector<2x8xf32> to vector<2x8x1xf32>
    %241 = vector.broadcast %240 : vector<2x8x1xf32> to vector<2x8x8xf32>
    %242 = arith.subf %238, %241 : vector<2x8x8xf32>
    %243 = math.exp %242 : vector<2x8x8xf32>
    %cst_96 = arith.constant dense<0.000000e+00> : vector<2x8xf32>
    %244 = vector.multi_reduction <add>, %243, %cst_96 [2] : vector<2x8x8xf32> to vector<2x8xf32>
    %245 = vector.shape_cast %244 : vector<2x8xf32> to vector<2x8x1xf32>
    %246 = tpu.reciprocal %245 {approx = true} : vector<2x8x1xf32> -> vector<2x8x1xf32>
    %247 = vector.broadcast %246 : vector<2x8x1xf32> to vector<2x8x8xf32>
    %248 = arith.mulf %243, %247 : vector<2x8x8xf32>
    %249 = arith.truncf %248 : vector<2x8x8xf32> to vector<2x8x8xbf16>
    %250 = arith.truncf %233 : vector<2x8x32xf32> to vector<2x8x32xbf16>
    "tpu.trace_start"() <{level = 10 : i32, message = "bqk,bke->bqe"}> : () -> ()
    %cst_97 = arith.constant dense<0.000000e+00> : vector<2x8x32xf32>
    %251 = tpu.matmul %249, %250, %cst_97 {dimension_numbers = #tpu.dot_dimension_numbers<[2], [1], [1], [2], [0, 0, 0, 1, 1, 2], [0], [0]>} : vector<2x8x8xbf16>, vector<2x8x32xbf16>, vector<2x8x32xf32> -> vector<2x8x32xf32>
    "tpu.trace_stop"() : () -> ()
    %252 = vector.extract_strided_slice %203 {offsets = [0, 64], sizes = [16, 32], strides = [1, 1]} : vector<16x384xf32> to vector<16x32xf32>
    %253 = vector.shape_cast %252 : vector<16x32xf32> to vector<2x8x32xf32>
    %254 = vector.extract_strided_slice %203 {offsets = [0, 192], sizes = [16, 32], strides = [1, 1]} : vector<16x384xf32> to vector<16x32xf32>
    %255 = vector.shape_cast %254 : vector<16x32xf32> to vector<2x8x32xf32>
    %256 = vector.extract_strided_slice %203 {offsets = [0, 320], sizes = [16, 32], strides = [1, 1]} : vector<16x384xf32> to vector<16x32xf32>
    %257 = vector.shape_cast %256 : vector<16x32xf32> to vector<2x8x32xf32>
    %258 = arith.truncf %253 : vector<2x8x32xf32> to vector<2x8x32xbf16>
    %259 = arith.truncf %255 : vector<2x8x32xf32> to vector<2x8x32xbf16>
    "tpu.trace_start"() <{level = 10 : i32, message = "bqe,bke->bqk"}> : () -> ()
    %cst_98 = arith.constant dense<0.000000e+00> : vector<2x8x8xf32>
    %260 = tpu.matmul %258, %259, %cst_98 {dimension_numbers = #tpu.dot_dimension_numbers<[2], [2], [1], [1], [0, 0, 0, 1, 1, 1], [0], [0]>} : vector<2x8x32xbf16>, vector<2x8x32xbf16>, vector<2x8x8xf32> -> vector<2x8x8xf32>
    "tpu.trace_stop"() : () -> ()
    %cst_99 = arith.constant 0.176776692 : f32
    %261 = vector.broadcast %cst_99 : f32 to vector<2x8x8xf32>
    %262 = arith.mulf %260, %261 : vector<2x8x8xf32>
    %cst_100 = arith.constant dense<0xFF800000> : vector<2x8xf32>
    %263 = vector.multi_reduction <maximumf>, %262, %cst_100 [2] : vector<2x8x8xf32> to vector<2x8xf32>
    %264 = vector.shape_cast %263 : vector<2x8xf32> to vector<2x8x1xf32>
    %265 = vector.broadcast %264 : vector<2x8x1xf32> to vector<2x8x8xf32>
    %266 = arith.subf %262, %265 : vector<2x8x8xf32>
    %267 = math.exp %266 : vector<2x8x8xf32>
    %cst_101 = arith.constant dense<0.000000e+00> : vector<2x8xf32>
    %268 = vector.multi_reduction <add>, %267, %cst_101 [2] : vector<2x8x8xf32> to vector<2x8xf32>
    %269 = vector.shape_cast %268 : vector<2x8xf32> to vector<2x8x1xf32>
    %270 = tpu.reciprocal %269 {approx = true} : vector<2x8x1xf32> -> vector<2x8x1xf32>
    %271 = vector.broadcast %270 : vector<2x8x1xf32> to vector<2x8x8xf32>
    %272 = arith.mulf %267, %271 : vector<2x8x8xf32>
    %273 = arith.truncf %272 : vector<2x8x8xf32> to vector<2x8x8xbf16>
    %274 = arith.truncf %257 : vector<2x8x32xf32> to vector<2x8x32xbf16>
    "tpu.trace_start"() <{level = 10 : i32, message = "bqk,bke->bqe"}> : () -> ()
    %cst_102 = arith.constant dense<0.000000e+00> : vector<2x8x32xf32>
    %275 = tpu.matmul %273, %274, %cst_102 {dimension_numbers = #tpu.dot_dimension_numbers<[2], [1], [1], [2], [0, 0, 0, 1, 1, 2], [0], [0]>} : vector<2x8x8xbf16>, vector<2x8x32xbf16>, vector<2x8x32xf32> -> vector<2x8x32xf32>
    "tpu.trace_stop"() : () -> ()
    %276 = vector.extract_strided_slice %203 {offsets = [0, 96], sizes = [16, 32], strides = [1, 1]} : vector<16x384xf32> to vector<16x32xf32>
    %277 = vector.shape_cast %276 : vector<16x32xf32> to vector<2x8x32xf32>
    %278 = vector.extract_strided_slice %203 {offsets = [0, 224], sizes = [16, 32], strides = [1, 1]} : vector<16x384xf32> to vector<16x32xf32>
    %279 = vector.shape_cast %278 : vector<16x32xf32> to vector<2x8x32xf32>
    %280 = vector.extract_strided_slice %203 {offsets = [0, 352], sizes = [16, 32], strides = [1, 1]} : vector<16x384xf32> to vector<16x32xf32>
    %281 = vector.shape_cast %280 : vector<16x32xf32> to vector<2x8x32xf32>
    %282 = arith.truncf %277 : vector<2x8x32xf32> to vector<2x8x32xbf16>
    %283 = arith.truncf %279 : vector<2x8x32xf32> to vector<2x8x32xbf16>
    "tpu.trace_start"() <{level = 10 : i32, message = "bqe,bke->bqk"}> : () -> ()
    %cst_103 = arith.constant dense<0.000000e+00> : vector<2x8x8xf32>
    %284 = tpu.matmul %282, %283, %cst_103 {dimension_numbers = #tpu.dot_dimension_numbers<[2], [2], [1], [1], [0, 0, 0, 1, 1, 1], [0], [0]>} : vector<2x8x32xbf16>, vector<2x8x32xbf16>, vector<2x8x8xf32> -> vector<2x8x8xf32>
    "tpu.trace_stop"() : () -> ()
    %cst_104 = arith.constant 0.176776692 : f32
    %285 = vector.broadcast %cst_104 : f32 to vector<2x8x8xf32>
    %286 = arith.mulf %284, %285 : vector<2x8x8xf32>
    %cst_105 = arith.constant dense<0xFF800000> : vector<2x8xf32>
    %287 = vector.multi_reduction <maximumf>, %286, %cst_105 [2] : vector<2x8x8xf32> to vector<2x8xf32>
    %288 = vector.shape_cast %287 : vector<2x8xf32> to vector<2x8x1xf32>
    %289 = vector.broadcast %288 : vector<2x8x1xf32> to vector<2x8x8xf32>
    %290 = arith.subf %286, %289 : vector<2x8x8xf32>
    %291 = math.exp %290 : vector<2x8x8xf32>
    %cst_106 = arith.constant dense<0.000000e+00> : vector<2x8xf32>
    %292 = vector.multi_reduction <add>, %291, %cst_106 [2] : vector<2x8x8xf32> to vector<2x8xf32>
    %293 = vector.shape_cast %292 : vector<2x8xf32> to vector<2x8x1xf32>
    %294 = tpu.reciprocal %293 {approx = true} : vector<2x8x1xf32> -> vector<2x8x1xf32>
    %295 = vector.broadcast %294 : vector<2x8x1xf32> to vector<2x8x8xf32>
    %296 = arith.mulf %291, %295 : vector<2x8x8xf32>
    %297 = arith.truncf %296 : vector<2x8x8xf32> to vector<2x8x8xbf16>
    %298 = arith.truncf %281 : vector<2x8x32xf32> to vector<2x8x32xbf16>
    "tpu.trace_start"() <{level = 10 : i32, message = "bqk,bke->bqe"}> : () -> ()
    %cst_107 = arith.constant dense<0.000000e+00> : vector<2x8x32xf32>
    %299 = tpu.matmul %297, %298, %cst_107 {dimension_numbers = #tpu.dot_dimension_numbers<[2], [1], [1], [2], [0, 0, 0, 1, 1, 2], [0], [0]>} : vector<2x8x8xbf16>, vector<2x8x32xbf16>, vector<2x8x32xf32> -> vector<2x8x32xf32>
    "tpu.trace_stop"() : () -> ()
    %300 = tpu.concatenate %227, %251, %275, %299 in 2 : vector<2x8x32xf32>, vector<2x8x32xf32>, vector<2x8x32xf32>, vector<2x8x32xf32> -> vector<2x8x128xf32>
    %301 = vector.shape_cast %300 : vector<2x8x128xf32> to vector<16x128xf32>
    %302 = arith.truncf %301 : vector<16x128xf32> to vector<16x128xbf16>
    %cst_108 = arith.constant dense<0.000000e+00> : vector<16x128xf32>
    %303 = tpu.matmul %302, %197, %cst_108 {dimension_numbers = #tpu.dot_dimension_numbers<[1], [0], [0], [1], [0, 0, 1, 1], [], []>} : vector<16x128xbf16>, vector<128x128xbf16>, vector<16x128xf32> -> vector<16x128xf32>
    %304 = vector.broadcast %199 : vector<1x128xf32> to vector<16x128xf32>
    %305 = arith.addf %303, %304 : vector<16x128xf32>
    %c1_109 = arith.constant 1 : index
    %c0_110 = arith.constant 0 : index
    %c0_111 = arith.constant 0 : index
    %306 = vector.load %arg12[%c1_109, %c0_110, %c0_111] : memref<2x1x128xf32, #tpu.memory_space<vmem>>, vector<1x1x128xf32>
    %307 = vector.shape_cast %306 : vector<1x1x128xf32> to vector<1x128xf32>
    %c1_112 = arith.constant 1 : index
    %c0_113 = arith.constant 0 : index
    %c0_114 = arith.constant 0 : index
    %308 = vector.load %arg13[%c1_112, %c0_113, %c0_114] : memref<2x1x128xf32, #tpu.memory_space<vmem>>, vector<1x1x128xf32>
    %309 = vector.shape_cast %308 : vector<1x1x128xf32> to vector<1x128xf32>
    %310 = arith.addf %191, %305 : vector<16x128xf32>
    %cst_115 = arith.constant dense<0.000000e+00> : vector<16xf32>
    %311 = vector.multi_reduction <add>, %310, %cst_115 [1] : vector<16x128xf32> to vector<16xf32>
    %312 = vector.shape_cast %311 : vector<16xf32> to vector<16x1xf32>
    %cst_116 = arith.constant 1.280000e+02 : f32
    %313 = vector.broadcast %cst_116 : f32 to vector<16x1xf32>
    %314 = arith.divf %312, %313 : vector<16x1xf32>
    %315 = vector.broadcast %314 : vector<16x1xf32> to vector<16x128xf32>
    %316 = arith.subf %310, %315 : vector<16x128xf32>
    %317 = arith.mulf %316, %316 : vector<16x128xf32>
    %cst_117 = arith.constant dense<0.000000e+00> : vector<16xf32>
    %318 = vector.multi_reduction <add>, %317, %cst_117 [1] : vector<16x128xf32> to vector<16xf32>
    %319 = vector.shape_cast %318 : vector<16xf32> to vector<16x1xf32>
    %cst_118 = arith.constant 1.280000e+02 : f32
    %320 = vector.broadcast %cst_118 : f32 to vector<16x1xf32>
    %321 = arith.divf %319, %320 : vector<16x1xf32>
    %322 = vector.broadcast %314 : vector<16x1xf32> to vector<16x128xf32>
    %323 = arith.subf %310, %322 : vector<16x128xf32>
    %cst_119 = arith.constant 9.99999974E-6 : f32
    %324 = vector.broadcast %cst_119 : f32 to vector<16x1xf32>
    %325 = arith.addf %321, %324 : vector<16x1xf32>
    %326 = math.rsqrt %325 : vector<16x1xf32>
    %327 = vector.broadcast %326 : vector<16x1xf32> to vector<16x128xf32>
    %328 = arith.mulf %323, %327 : vector<16x128xf32>
    %329 = vector.broadcast %307 : vector<1x128xf32> to vector<16x128xf32>
    %330 = arith.mulf %328, %329 : vector<16x128xf32>
    %331 = vector.broadcast %309 : vector<1x128xf32> to vector<16x128xf32>
    %332 = arith.addf %330, %331 : vector<16x128xf32>
    %c1_120 = arith.constant 1 : index
    %c0_121 = arith.constant 0 : index
    %c0_122 = arith.constant 0 : index
    %333 = vector.load %arg8[%c1_120, %c0_121, %c0_122] : memref<2x128x512xbf16, #tpu.memory_space<vmem>>, vector<1x128x512xbf16>
    %334 = vector.shape_cast %333 : vector<1x128x512xbf16> to vector<128x512xbf16>
    %335 = arith.truncf %332 : vector<16x128xf32> to vector<16x128xbf16>
    %cst_123 = arith.constant dense<0.000000e+00> : vector<16x512xf32>
    %336 = tpu.matmul %335, %334, %cst_123 {dimension_numbers = #tpu.dot_dimension_numbers<[1], [0], [0], [1], [0, 0, 1, 1], [], []>} : vector<16x128xbf16>, vector<128x512xbf16>, vector<16x512xf32> -> vector<16x512xf32>
    %c1_124 = arith.constant 1 : index
    %c0_125 = arith.constant 0 : index
    %c0_126 = arith.constant 0 : index
    %337 = vector.load %arg9[%c1_124, %c0_125, %c0_126] : memref<2x1x512xf32, #tpu.memory_space<vmem>>, vector<1x1x512xf32>
    %338 = vector.shape_cast %337 : vector<1x1x512xf32> to vector<1x512xf32>
    %339 = vector.broadcast %338 : vector<1x512xf32> to vector<16x512xf32>
    %340 = arith.addf %336, %339 : vector<16x512xf32>
    %cst_127 = arith.constant 0.000000e+00 : f32
    %341 = vector.broadcast %cst_127 : f32 to vector<16x512xf32>
    %342 = arith.maximumf %340, %341 : vector<16x512xf32>
    %c1_128 = arith.constant 1 : index
    %c0_129 = arith.constant 0 : index
    %c0_130 = arith.constant 0 : index
    %343 = vector.load %arg10[%c1_128, %c0_129, %c0_130] : memref<2x512x128xbf16, #tpu.memory_space<vmem>>, vector<1x512x128xbf16>
    %344 = vector.shape_cast %343 : vector<1x512x128xbf16> to vector<512x128xbf16>
    %345 = arith.truncf %342 : vector<16x512xf32> to vector<16x512xbf16>
    %cst_131 = arith.constant dense<0.000000e+00> : vector<16x128xf32>
    %346 = tpu.matmul %345, %344, %cst_131 {dimension_numbers = #tpu.dot_dimension_numbers<[1], [0], [0], [1], [0, 0, 1, 1], [], []>} : vector<16x512xbf16>, vector<512x128xbf16>, vector<16x128xf32> -> vector<16x128xf32>
    %c1_132 = arith.constant 1 : index
    %c0_133 = arith.constant 0 : index
    %c0_134 = arith.constant 0 : index
    %347 = vector.load %arg11[%c1_132, %c0_133, %c0_134] : memref<2x1x128xf32, #tpu.memory_space<vmem>>, vector<1x1x128xf32>
    %348 = vector.shape_cast %347 : vector<1x1x128xf32> to vector<1x128xf32>
    %349 = vector.broadcast %348 : vector<1x128xf32> to vector<16x128xf32>
    %350 = arith.addf %346, %349 : vector<16x128xf32>
    %c1_135 = arith.constant 1 : index
    %c0_136 = arith.constant 0 : index
    %c0_137 = arith.constant 0 : index
    %351 = vector.load %arg14[%c1_135, %c0_136, %c0_137] : memref<2x1x128xf32, #tpu.memory_space<vmem>>, vector<1x1x128xf32>
    %352 = vector.shape_cast %351 : vector<1x1x128xf32> to vector<1x128xf32>
    %c1_138 = arith.constant 1 : index
    %c0_139 = arith.constant 0 : index
    %c0_140 = arith.constant 0 : index
    %353 = vector.load %arg15[%c1_138, %c0_139, %c0_140] : memref<2x1x128xf32, #tpu.memory_space<vmem>>, vector<1x1x128xf32>
    %354 = vector.shape_cast %353 : vector<1x1x128xf32> to vector<1x128xf32>
    %355 = arith.addf %332, %350 : vector<16x128xf32>
    %cst_141 = arith.constant dense<0.000000e+00> : vector<16xf32>
    %356 = vector.multi_reduction <add>, %355, %cst_141 [1] : vector<16x128xf32> to vector<16xf32>
    %357 = vector.shape_cast %356 : vector<16xf32> to vector<16x1xf32>
    %cst_142 = arith.constant 1.280000e+02 : f32
    %358 = vector.broadcast %cst_142 : f32 to vector<16x1xf32>
    %359 = arith.divf %357, %358 : vector<16x1xf32>
    %360 = vector.broadcast %359 : vector<16x1xf32> to vector<16x128xf32>
    %361 = arith.subf %355, %360 : vector<16x128xf32>
    %362 = arith.mulf %361, %361 : vector<16x128xf32>
    %cst_143 = arith.constant dense<0.000000e+00> : vector<16xf32>
    %363 = vector.multi_reduction <add>, %362, %cst_143 [1] : vector<16x128xf32> to vector<16xf32>
    %364 = vector.shape_cast %363 : vector<16xf32> to vector<16x1xf32>
    %cst_144 = arith.constant 1.280000e+02 : f32
    %365 = vector.broadcast %cst_144 : f32 to vector<16x1xf32>
    %366 = arith.divf %364, %365 : vector<16x1xf32>
    %367 = vector.broadcast %359 : vector<16x1xf32> to vector<16x128xf32>
    %368 = arith.subf %355, %367 : vector<16x128xf32>
    %cst_145 = arith.constant 9.99999974E-6 : f32
    %369 = vector.broadcast %cst_145 : f32 to vector<16x1xf32>
    %370 = arith.addf %366, %369 : vector<16x1xf32>
    %371 = math.rsqrt %370 : vector<16x1xf32>
    %372 = vector.broadcast %371 : vector<16x1xf32> to vector<16x128xf32>
    %373 = arith.mulf %368, %372 : vector<16x128xf32>
    %374 = vector.broadcast %352 : vector<1x128xf32> to vector<16x128xf32>
    %375 = arith.mulf %373, %374 : vector<16x128xf32>
    %376 = vector.broadcast %354 : vector<1x128xf32> to vector<16x128xf32>
    %377 = arith.addf %375, %376 : vector<16x128xf32>
    %c0_146 = arith.constant 0 : index
    %c0_147 = arith.constant 0 : index
    %378 = vector.load %arg16[%c0_146, %c0_147] : memref<128x128xbf16, #tpu.memory_space<vmem>>, vector<128x128xbf16>
    %379 = arith.truncf %377 : vector<16x128xf32> to vector<16x128xbf16>
    %cst_148 = arith.constant dense<0.000000e+00> : vector<16x128xf32>
    %380 = tpu.matmul %379, %378, %cst_148 {dimension_numbers = #tpu.dot_dimension_numbers<[1], [0], [0], [1], [0, 0, 1, 1], [], []>} : vector<16x128xbf16>, vector<128x128xbf16>, vector<16x128xf32> -> vector<16x128xf32>
    %c0_149 = arith.constant 0 : index
    %c0_150 = arith.constant 0 : index
    %381 = vector.load %arg17[%c0_149, %c0_150] : memref<1x128xf32, #tpu.memory_space<vmem>>, vector<1x128xf32>
    %382 = vector.broadcast %381 : vector<1x128xf32> to vector<16x128xf32>
    %383 = arith.addf %380, %382 : vector<16x128xf32>
    %c0_151 = arith.constant 0 : index
    %c0_152 = arith.constant 0 : index
    %384 = vector.load %arg18[%c0_151, %c0_152] : memref<16x128xf32, #tpu.memory_space<vmem>>, vector<16x128xf32>
    tpu.vector_store %arg18[%c0_151, %c0_152], %383 {strides = array<i32>} : memref<16x128xf32, #tpu.memory_space<vmem>>, vector<16x128xf32>,
    return
  }
  func.func @transform_0(%arg0: i32) -> (i32, i32) {
    %c0_i32 = arith.constant 0 : i32
    %c0_i32_0 = arith.constant 0 : i32
    return %arg0, %c0_i32 : i32, i32
  }
  func.func @transform_1(%arg0: i32) -> (i32, i32) {
    %c0_i32 = arith.constant 0 : i32
    %c0_i32_0 = arith.constant 0 : i32
    %c0_i32_1 = arith.constant 0 : i32
    return %c0_i32, %c0_i32_0 : i32, i32
  }
  func.func @transform_2(%arg0: i32) -> (i32, i32) {
    %c0_i32 = arith.constant 0 : i32
    %c0_i32_0 = arith.constant 0 : i32
    %c0_i32_1 = arith.constant 0 : i32
    return %c0_i32, %c0_i32_0 : i32, i32
  }
  func.func @transform_3(%arg0: i32) -> (i32, i32, i32) {
    %c0_i32 = arith.constant 0 : i32
    %c0_i32_0 = arith.constant 0 : i32
    %c0_i32_1 = arith.constant 0 : i32
    %c0_i32_2 = arith.constant 0 : i32
    return %c0_i32, %c0_i32_0, %c0_i32_1 : i32, i32, i32
  }
  func.func @transform_4(%arg0: i32) -> (i32, i32, i32) {
    %c0_i32 = arith.constant 0 : i32
    %c0_i32_0 = arith.constant 0 : i32
    %c0_i32_1 = arith.constant 0 : i32
    %c0_i32_2 = arith.constant 0 : i32
    return %c0_i32, %c0_i32_0, %c0_i32_1 : i32, i32, i32
  }
  func.func @transform_5(%arg0: i32) -> (i32, i32, i32) {
    %c0_i32 = arith.constant 0 : i32
    %c0_i32_0 = arith.constant 0 : i32
    %c0_i32_1 = arith.constant 0 : i32
    %c0_i32_2 = arith.constant 0 : i32
    return %c0_i32, %c0_i32_0, %c0_i32_1 : i32, i32, i32
  }
  func.func @transform_6(%arg0: i32) -> (i32, i32, i32) {
    %c0_i32 = arith.constant 0 : i32
    %c0_i32_0 = arith.constant 0 : i32
    %c0_i32_1 = arith.constant 0 : i32
    %c0_i32_2 = arith.constant 0 : i32
    return %c0_i32, %c0_i32_0, %c0_i32_1 : i32, i32, i32
  }
  func.func @transform_7(%arg0: i32) -> (i32, i32, i32) {
    %c0_i32 = arith.constant 0 : i32
    %c0_i32_0 = arith.constant 0 : i32
    %c0_i32_1 = arith.constant 0 : i32
    %c0_i32_2 = arith.constant 0 : i32
    return %c0_i32, %c0_i32_0, %c0_i32_1 : i32, i32, i32
  }
  func.func @transform_8(%arg0: i32) -> (i32, i32, i32) {
    %c0_i32 = arith.constant 0 : i32
    %c0_i32_0 = arith.constant 0 : i32
    %c0_i32_1 = arith.constant 0 : i32
    %c0_i32_2 = arith.constant 0 : i32
    return %c0_i32, %c0_i32_0, %c0_i32_1 : i32, i32, i32
  }
  func.func @transform_9(%arg0: i32) -> (i32, i32, i32) {
    %c0_i32 = arith.constant 0 : i32
    %c0_i32_0 = arith.constant 0 : i32
    %c0_i32_1 = arith.constant 0 : i32
    %c0_i32_2 = arith.constant 0 : i32
    return %c0_i32, %c0_i32_0, %c0_i32_1 : i32, i32, i32
  }
  func.func @transform_10(%arg0: i32) -> (i32, i32, i32) {
    %c0_i32 = arith.constant 0 : i32
    %c0_i32_0 = arith.constant 0 : i32
    %c0_i32_1 = arith.constant 0 : i32
    %c0_i32_2 = arith.constant 0 : i32
    return %c0_i32, %c0_i32_0, %c0_i32_1 : i32, i32, i32
  }
  func.func @transform_11(%arg0: i32) -> (i32, i32, i32) {
    %c0_i32 = arith.constant 0 : i32
    %c0_i32_0 = arith.constant 0 : i32
    %c0_i32_1 = arith.constant 0 : i32
    %c0_i32_2 = arith.constant 0 : i32
    return %c0_i32, %c0_i32_0, %c0_i32_1 : i32, i32, i32
  }
  func.func @transform_12(%arg0: i32) -> (i32, i32, i32) {
    %c0_i32 = arith.constant 0 : i32
    %c0_i32_0 = arith.constant 0 : i32
    %c0_i32_1 = arith.constant 0 : i32
    %c0_i32_2 = arith.constant 0 : i32
    return %c0_i32, %c0_i32_0, %c0_i32_1 : i32, i32, i32
  }
  func.func @transform_13(%arg0: i32) -> (i32, i32, i32) {
    %c0_i32 = arith.constant 0 : i32
    %c0_i32_0 = arith.constant 0 : i32
    %c0_i32_1 = arith.constant 0 : i32
    %c0_i32_2 = arith.constant 0 : i32
    return %c0_i32, %c0_i32_0, %c0_i32_1 : i32, i32, i32
  }
  func.func @transform_14(%arg0: i32) -> (i32, i32, i32) {
    %c0_i32 = arith.constant 0 : i32
    %c0_i32_0 = arith.constant 0 : i32
    %c0_i32_1 = arith.constant 0 : i32
    %c0_i32_2 = arith.constant 0 : i32
    return %c0_i32, %c0_i32_0, %c0_i32_1 : i32, i32, i32
  }
  func.func @transform_15(%arg0: i32) -> (i32, i32) {
    %c0_i32 = arith.constant 0 : i32
    %c0_i32_0 = arith.constant 0 : i32
    %c0_i32_1 = arith.constant 0 : i32
    return %c0_i32, %c0_i32_0 : i32, i32
  }
  func.func @transform_16(%arg0: i32) -> (i32, i32) {
    %c0_i32 = arith.constant 0 : i32
    %c0_i32_0 = arith.constant 0 : i32
    %c0_i32_1 = arith.constant 0 : i32
    return %c0_i32, %c0_i32_0 : i32, i32
  }
  func.func @transform_17(%arg0: i32) -> (i32, i32) {
    %c0_i32 = arith.constant 0 : i32
    %c0_i32_0 = arith.constant 0 : i32
    return %arg0, %c0_i32 : i32, i32
  }
}

</mosaic_0001>

<llo_original>
// kernel: tpu_custom_call.1
$region0: #{tpu_custom_call.1}
  #allocation0 [shape = 'u32[]', space=smem, size = 0x4, offset = 0x4, fixed_abs, tag = 'smem constant byte address 0x4 - core index']
  #allocation1 [shape = 'u32[144,128]{1,0:T(1,128)}', space=vmem, size = 0x12000, scoped, tag = 'internal scratch']
  %s0 = inlined_call_operand.hbm [shape: bf16[16,768], index: 0, kind: input, shape index: {}]
  %s1 = inlined_call_operand.hbm [shape: bf16[768,128], index: 1, kind: input, shape index: {}]
  %s2 = inlined_call_operand.hbm [shape: f32[1,128], index: 2, kind: input, shape index: {}]
  %s3 = inlined_call_operand.hbm [shape: bf16[2,128,384], index: 3, kind: input, shape index: {}]
  %s4 = inlined_call_operand.vmem [shape: f32[2,1,384], index: 4, kind: input, shape index: {}]
  %s5 = inlined_call_operand.hbm [shape: bf16[2,128,128], index: 5, kind: input, shape index: {}]
  %s6 = inlined_call_operand.vmem [shape: f32[2,1,128], index: 6, kind: input, shape index: {}]
  %s7 = inlined_call_operand.hbm [shape: bf16[2,128,512], index: 7, kind: input, shape index: {}]
  %s8 = inlined_call_operand.vmem [shape: f32[2,1,512], index: 8, kind: input, shape index: {}]
  %s9 = inlined_call_operand.hbm [shape: bf16[2,512,128], index: 9, kind: input, shape index: {}]
  %s10 = inlined_call_operand.vmem [shape: f32[2,1,128], index: 10, kind: input, shape index: {}]
  %s11 = inlined_call_operand.vmem [shape: f32[2,1,128], index: 11, kind: input, shape index: {}]
  %s12 = inlined_call_operand.vmem [shape: f32[2,1,128], index: 12, kind: input, shape index: {}]
  %s13 = inlined_call_operand.vmem [shape: f32[2,1,128], index: 13, kind: input, shape index: {}]
  %s14 = inlined_call_operand.vmem [shape: f32[2,1,128], index: 14, kind: input, shape index: {}]
  %s15 = inlined_call_operand.hbm [shape: bf16[128,128], index: 15, kind: input, shape index: {}]
  %s16 = inlined_call_operand.vmem [shape: f32[1,128], index: 16, kind: input, shape index: {}]
  %s17 = inlined_call_operand.hbm [shape: f32[16,128], index: 17, kind: output, shape index: {}]
  %s18 = sld [smem:[#allocation0]]
  $region110: #{tpu_custom_call.1} parent=0
    _
  %s20 = ssub.s32 1, %s18
  %s21 = scalar_select 0, %s20, %s18
  $region1: #{tpu_custom_call.1} parent=0
    #allocation2 [shape = 'u8[24576]{0}', space=vmem, size = 0x6000, scoped, tag = 'input window, operand 0, single buffered']
    #allocation3 [shape = 's32[1]{0}', space=sflag, size = 0x4, scoped, tag = 'scoped memory for tpu_custom_call.1']
    #allocation4 [shape = 's32[1]{0}', space=sflag, size = 0x4, scoped, tag = 'scoped memory for tpu_custom_call.1']
    #allocation5 [shape = 'u8[196608]{0}', space=vmem, size = 0x30000, scoped, tag = 'input window, operand 1, single buffered']
    #allocation6 [shape = 's32[1]{0}', space=sflag, size = 0x4, scoped, tag = 'scoped memory for tpu_custom_call.1']
    #allocation7 [shape = 'u8[512]{0}', space=vmem, size = 0x400, scoped, tag = 'input window, operand 2, single buffered']
    #allocation8 [shape = 'u8[196608]{0}', space=vmem, size = 0x30000, scoped, tag = 'input window, operand 3, single buffered']
    #allocation9 [shape = 's32[1]{0}', space=sflag, size = 0x4, scoped, tag = 'scoped memory for tpu_custom_call.1']
    #allocation10 [shape = 'u8[65536]{0}', space=vmem, size = 0x10000, scoped, tag = 'input window, operand 5, single buffered']
    #allocation11 [shape = 'u8[262144]{0}', space=vmem, size = 0x40000, scoped, tag = 'input window, operand 7, single buffered']
    #allocation12 [shape = 's32[1]{0}', space=sflag, size = 0x4, scoped, tag = 'scoped memory for tpu_custom_call.1']
    #allocation13 [shape = 'u8[262144]{0}', space=vmem, size = 0x40000, scoped, tag = 'input window, operand 9, single buffered']
    #allocation14 [shape = 'u8[32768]{0}', space=vmem, size = 0x8000, scoped, tag = 'input window, operand 15, single buffered']
    #allocation15 [shape = 's32[1]{0}', space=sflag, size = 0x4, scoped, tag = 'scoped memory for tpu_custom_call.1']
    #allocation16 [shape = 'u8[8192]{0}', space=vmem, size = 0x2000, scoped, tag = 'output window, operand 0, single buffered']
    %22 = vsyncpa [#allocation3], 0
    %23 = vsyncpa [#allocation6], 0
    %24 = vsyncpa [#allocation9], 0
    %25 = vsyncpa [#allocation12], 0
    %26 = vsyncpa [#allocation15], 0
    %27 = vsyncpa [#allocation4], 0
    // Predicated region
    $region2: #{tpu_custom_call.1} parent=1 // pred_check
      _
    $region3: #{tpu_custom_call.1} parent=1 // pred_check_branch
      %29 = sbr.rel (0) target = $region5
    $region4: #{tpu_custom_call.1} parent=1 // pred_region
      %s31 = ssub.s32 768, 768
      %32 = vsyncadd [#allocation3], %s31
      %s33 = sshll.u32 [#allocation2], 4
      %s34 = int_to_ptr.vmem [resolvable:$true] %s33
      %39 = dma.hbm_to_vmem [thread:$0]  %s0, 768, %s34, [#allocation3], 384, 384, 24
    $region5: #{tpu_custom_call.1} parent=1 // pred_fallthru
      _
    // Predicated region
    $region6: #{tpu_custom_call.1} parent=1 // pred_check
      _
    $region7: #{tpu_custom_call.1} parent=1 // pred_check_branch
      %41 = sbr.rel (0) target = $region9
    $region8: #{tpu_custom_call.1} parent=1 // pred_region
      %s43 = ssub.s32 6144, 6144
      %44 = vsyncadd [#allocation6], %s43
      %s45 = sshll.u32 [#allocation5], 4
      %s46 = int_to_ptr.vmem [resolvable:$true] %s45
      %51 = dma.hbm_to_vmem [thread:$0]  %s1, 6144, %s46, [#allocation6], 64, 64, 4
    $region9: #{tpu_custom_call.1} parent=1 // pred_fallthru
      _
    // Predicated region
    $region10: #{tpu_custom_call.1} parent=1 // pred_check
      _
    $region11: #{tpu_custom_call.1} parent=1 // pred_check_branch
      %53 = sbr.rel (0) target = $region13
    $region12: #{tpu_custom_call.1} parent=1 // pred_region
      %s55 = ssub.s32 16, 16
      %56 = vsyncadd [#allocation6], %s55
      %s58 = sshll.u32 [#allocation7], 4
      %s59 = int_to_ptr.vmem [resolvable:$true] %s58
      %61 = dma.hbm_to_vmem [thread:$0]  %s2, 16, %s59, [#allocation6]
    $region13: #{tpu_custom_call.1} parent=1 // pred_fallthru
      _
    // Predicated region
    $region14: #{tpu_custom_call.1} parent=1 // pred_check
      _
    $region15: #{tpu_custom_call.1} parent=1 // pred_check_branch
      %63 = sbr.rel (0) target = $region17
    $region16: #{tpu_custom_call.1} parent=1 // pred_region
      %s65 = ssub.s32 6144, 6144
      %66 = vsyncadd [#allocation9], %s65
      %s67 = sshll.u32 [#allocation8], 4
      %s68 = int_to_ptr.vmem [resolvable:$true] %s67
      %73 = dma.hbm_to_vmem [thread:$0]  %s3, 6144, %s68, [#allocation9], 192, 192, 12
    $region17: #{tpu_custom_call.1} parent=1 // pred_fallthru
      _
    // Predicated region
    $region18: #{tpu_custom_call.1} parent=1 // pred_check
      _
    $region19: #{tpu_custom_call.1} parent=1 // pred_check_branch
      %75 = sbr.rel (0) target = $region21
    $region20: #{tpu_custom_call.1} parent=1 // pred_region
      _
    $region21: #{tpu_custom_call.1} parent=1 // pred_fallthru
      _
    // Predicated region
    $region22: #{tpu_custom_call.1} parent=1 // pred_check
      _
    $region23: #{tpu_custom_call.1} parent=1 // pred_check_branch
      %77 = sbr.rel (0) target = $region25
    $region24: #{tpu_custom_call.1} parent=1 // pred_region
      %s79 = ssub.s32 2048, 2048
      %80 = vsyncadd [#allocation9], %s79
      %s81 = sshll.u32 [#allocation10], 4
      %s82 = int_to_ptr.vmem [resolvable:$true] %s81
      %87 = dma.hbm_to_vmem [thread:$0]  %s5, 2048, %s82, [#allocation9], 64, 64, 4
    $region25: #{tpu_custom_call.1} parent=1 // pred_fallthru
      _
    // Predicated region
    $region26: #{tpu_custom_call.1} parent=1 // pred_check
      _
    $region27: #{tpu_custom_call.1} parent=1 // pred_check_branch
      %89 = sbr.rel (0) target = $region29
    $region28: #{tpu_custom_call.1} parent=1 // pred_region
      _
    $region29: #{tpu_custom_call.1} parent=1 // pred_fallthru
      _
    // Predicated region
    $region30: #{tpu_custom_call.1} parent=1 // pred_check
      _
    $region31: #{tpu_custom_call.1} parent=1 // pred_check_branch
      %91 = sbr.rel (0) target = $region33
    $region32: #{tpu_custom_call.1} parent=1 // pred_region
      %s93 = ssub.s32 8192, 8192
      %94 = vsyncadd [#allocation12], %s93
      %s95 = sshll.u32 [#allocation11], 4
      %s96 = int_to_ptr.vmem [resolvable:$true] %s95
      %101 = dma.hbm_to_vmem [thread:$0]  %s7, 8192, %s96, [#allocation12], 256, 256, 16
    $region33: #{tpu_custom_call.1} parent=1 // pred_fallthru
      _
    // Predicated region
    $region34: #{tpu_custom_call.1} parent=1 // pred_check
      _
    $region35: #{tpu_custom_call.1} parent=1 // pred_check_branch
      %103 = sbr.rel (0) target = $region37
    $region36: #{tpu_custom_call.1} parent=1 // pred_region
      _
    $region37: #{tpu_custom_call.1} parent=1 // pred_fallthru
      _
    // Predicated region
    $region38: #{tpu_custom_call.1} parent=1 // pred_check
      _
    $region39: #{tpu_custom_call.1} parent=1 // pred_check_branch
      %105 = sbr.rel (0) target = $region41
    $region40: #{tpu_custom_call.1} parent=1 // pred_region
      %s107 = ssub.s32 8192, 8192
      %108 = vsyncadd [#allocation12], %s107
      %s109 = sshll.u32 [#allocation13], 4
      %s110 = int_to_ptr.vmem [resolvable:$true] %s109
      %115 = dma.hbm_to_vmem [thread:$0]  %s9, 8192, %s110, [#allocation12], 64, 64, 4
    $region41: #{tpu_custom_call.1} parent=1 // pred_fallthru
      _
    // Predicated region
    $region42: #{tpu_custom_call.1} parent=1 // pred_check
      _
    $region43: #{tpu_custom_call.1} parent=1 // pred_check_branch
      %117 = sbr.rel (0) target = $region45
    $region44: #{tpu_custom_call.1} parent=1 // pred_region
      _
    $region45: #{tpu_custom_call.1} parent=1 // pred_fallthru
      _
    // Predicated region
    $region46: #{tpu_custom_call.1} parent=1 // pred_check
      _
    $region47: #{tpu_custom_call.1} parent=1 // pred_check_branch
      %119 = sbr.rel (0) target = $region49
    $region48: #{tpu_custom_call.1} parent=1 // pred_region
      _
    $region49: #{tpu_custom_call.1} parent=1 // pred_fallthru
      _
    // Predicated region
    $region50: #{tpu_custom_call.1} parent=1 // pred_check
      _
    $region51: #{tpu_custom_call.1} parent=1 // pred_check_branch
      %121 = sbr.rel (0) target = $region53
    $region52: #{tpu_custom_call.1} parent=1 // pred_region
      _
    $region53: #{tpu_custom_call.1} parent=1 // pred_fallthru
      _
    // Predicated region
    $region54: #{tpu_custom_call.1} parent=1 // pred_check
      _
    $region55: #{tpu_custom_call.1} parent=1 // pred_check_branch
      %123 = sbr.rel (0) target = $region57
    $region56: #{tpu_custom_call.1} parent=1 // pred_region
      _
    $region57: #{tpu_custom_call.1} parent=1 // pred_fallthru
      _
    // Predicated region
    $region58: #{tpu_custom_call.1} parent=1 // pred_check
      _
    $region59: #{tpu_custom_call.1} parent=1 // pred_check_branch
      %125 = sbr.rel (0) target = $region61
    $region60: #{tpu_custom_call.1} parent=1 // pred_region
      _
    $region61: #{tpu_custom_call.1} parent=1 // pred_fallthru
      _
    // Predicated region
    $region62: #{tpu_custom_call.1} parent=1 // pred_check
      _
    $region63: #{tpu_custom_call.1} parent=1 // pred_check_branch
      %127 = sbr.rel (0) target = $region65
    $region64: #{tpu_custom_call.1} parent=1 // pred_region
      %s129 = ssub.s32 1024, 1024
      %130 = vsyncadd [#allocation15], %s129
      %s131 = sshll.u32 [#allocation14], 4
      %s132 = int_to_ptr.vmem [resolvable:$true] %s131
      %137 = dma.hbm_to_vmem [thread:$0]  %s15, 1024, %s132, [#allocation15], 64, 64, 4
    $region65: #{tpu_custom_call.1} parent=1 // pred_fallthru
      _
    // Predicated region
    $region66: #{tpu_custom_call.1} parent=1 // pred_check
      _
    $region67: #{tpu_custom_call.1} parent=1 // pred_check_branch
      %139 = sbr.rel (0) target = $region69
    $region68: #{tpu_custom_call.1} parent=1 // pred_region
      _
    $region69: #{tpu_custom_call.1} parent=1 // pred_fallthru
      _
    // Predicated region
    $region70: #{tpu_custom_call.1} parent=1 // pred_check
      _
    $region71: #{tpu_custom_call.1} parent=1 // pred_check_branch
      %141 = sbr.rel (0) target = $region73
    $region72: #{tpu_custom_call.1} parent=1 // pred_region
      %142 = dma.done [#allocation3], 768
    $region73: #{tpu_custom_call.1} parent=1 // pred_fallthru
      _
    // Predicated region
    $region74: #{tpu_custom_call.1} parent=1 // pred_check
      _
    $region75: #{tpu_custom_call.1} parent=1 // pred_check_branch
      %144 = sbr.rel (0) target = $region77
    $region76: #{tpu_custom_call.1} parent=1 // pred_region
      %145 = dma.done [#allocation6], 6144
    $region77: #{tpu_custom_call.1} parent=1 // pred_fallthru
      _
    // Predicated region
    $region78: #{tpu_custom_call.1} parent=1 // pred_check
      _
    $region79: #{tpu_custom_call.1} parent=1 // pred_check_branch
      %147 = sbr.rel (0) target = $region81
    $region80: #{tpu_custom_call.1} parent=1 // pred_region
      %148 = dma.done [#allocation6], 16
    $region81: #{tpu_custom_call.1} parent=1 // pred_fallthru
      _
    // Predicated region
    $region82: #{tpu_custom_call.1} parent=1 // pred_check
      _
    $region83: #{tpu_custom_call.1} parent=1 // pred_check_branch
      %150 = sbr.rel (0) target = $region85
    $region84: #{tpu_custom_call.1} parent=1 // pred_region
      %151 = dma.done [#allocation9], 6144
    $region85: #{tpu_custom_call.1} parent=1 // pred_fallthru
      _
    // Predicated region
    $region86: #{tpu_custom_call.1} parent=1 // pred_check
      _
    $region87: #{tpu_custom_call.1} parent=1 // pred_check_branch
      %153 = sbr.rel (0) target = $region89
    $region88: #{tpu_custom_call.1} parent=1 // pred_region
      %154 = dma.done [#allocation9], 2048
    $region89: #{tpu_custom_call.1} parent=1 // pred_fallthru
      _
    // Predicated region
    $region90: #{tpu_custom_call.1} parent=1 // pred_check
      _
    $region91: #{tpu_custom_call.1} parent=1 // pred_check_branch
      %156 = sbr.rel (0) target = $region93
    $region92: #{tpu_custom_call.1} parent=1 // pred_region
      %157 = dma.done [#allocation12], 8192
    $region93: #{tpu_custom_call.1} parent=1 // pred_fallthru
      _
    // Predicated region
    $region94: #{tpu_custom_call.1} parent=1 // pred_check
      _
    $region95: #{tpu_custom_call.1} parent=1 // pred_check_branch
      %159 = sbr.rel (0) target = $region97
    $region96: #{tpu_custom_call.1} parent=1 // pred_region
      %160 = dma.done [#allocation12], 8192
    $region97: #{tpu_custom_call.1} parent=1 // pred_fallthru
      _
    // Predicated region
    $region98: #{tpu_custom_call.1} parent=1 // pred_check
      _
    $region99: #{tpu_custom_call.1} parent=1 // pred_check_branch
      %162 = sbr.rel (0) target = $region101
    $region100: #{tpu_custom_call.1} parent=1 // pred_region
      %163 = dma.done [#allocation15], 1024
    $region101: #{tpu_custom_call.1} parent=1 // pred_fallthru
      _
    %v165 = vld [vmem:[#allocation2] sm:$0xff]
    %v166 = vld [vmem:[#allocation2 + $0x8] sm:$0xff]
    %v167 = vld [vmem:[#allocation2 + $0x10] sm:$0xff]
    %v168 = vld [vmem:[#allocation2 + $0x18] sm:$0xff]
    %v169 = vld [vmem:[#allocation2 + $0x20] sm:$0xff]
    %v170 = vld [vmem:[#allocation2 + $0x28] sm:$0xff]
    %v171 = vld [vmem:[#allocation5] sm:$0xf]
    %v172 = vld [vmem:[#allocation5 + $0x4] sm:$0xf]
    %v173 = vld [vmem:[#allocation5 + $0x8] sm:$0xf]
    %v174 = vld [vmem:[#allocation5 + $0xc] sm:$0xf]
    %v175 = vld [vmem:[#allocation5 + $0x10] sm:$0xf]
    %v176 = vld [vmem:[#allocation5 + $0x14] sm:$0xf]
    %v177 = vld [vmem:[#allocation5 + $0x18] sm:$0xf]
    %v178 = vld [vmem:[#allocation5 + $0x1c] sm:$0xf]
    %v179 = vld [vmem:[#allocation5 + $0x20] sm:$0xf]
    %v180 = vld [vmem:[#allocation5 + $0x24] sm:$0xf]
    %v181 = vld [vmem:[#allocation5 + $0x28] sm:$0xf]
    %v182 = vld [vmem:[#allocation5 + $0x2c] sm:$0xf]
    %v183 = vld [vmem:[#allocation5 + $0x30] sm:$0xf]
    %v184 = vld [vmem:[#allocation5 + $0x34] sm:$0xf]
    %v185 = vld [vmem:[#allocation5 + $0x38] sm:$0xf]
    %v186 = vld [vmem:[#allocation5 + $0x3c] sm:$0xf]
    %v187 = vld [vmem:[#allocation5 + $0x40] sm:$0xf]
    %v188 = vld [vmem:[#allocation5 + $0x44] sm:$0xf]
    %v189 = vld [vmem:[#allocation5 + $0x48] sm:$0xf]
    %v190 = vld [vmem:[#allocation5 + $0x4c] sm:$0xf]
    %v191 = vld [vmem:[#allocation5 + $0x50] sm:$0xf]
    %v192 = vld [vmem:[#allocation5 + $0x54] sm:$0xf]
    %v193 = vld [vmem:[#allocation5 + $0x58] sm:$0xf]
    %v194 = vld [vmem:[#allocation5 + $0x5c] sm:$0xf]
    %v195 = vld [vmem:[#allocation5 + $0x60] sm:$0xf]
    %v196 = vld [vmem:[#allocation5 + $0x64] sm:$0xf]
    %v197 = vld [vmem:[#allocation5 + $0x68] sm:$0xf]
    %v198 = vld [vmem:[#allocation5 + $0x6c] sm:$0xf]
    %v199 = vld [vmem:[#allocation5 + $0x70] sm:$0xf]
    %v200 = vld [vmem:[#allocation5 + $0x74] sm:$0xf]
    %v201 = vld [vmem:[#allocation5 + $0x78] sm:$0xf]
    %v202 = vld [vmem:[#allocation5 + $0x7c] sm:$0xf]
    %v203 = vld [vmem:[#allocation5 + $0x80] sm:$0xf]
    %v204 = vld [vmem:[#allocation5 + $0x84] sm:$0xf]
    %v205 = vld [vmem:[#allocation5 + $0x88] sm:$0xf]
    %v206 = vld [vmem:[#allocation5 + $0x8c] sm:$0xf]
    %v207 = vld [vmem:[#allocation5 + $0x90] sm:$0xf]
    %v208 = vld [vmem:[#allocation5 + $0x94] sm:$0xf]
    %v209 = vld [vmem:[#allocation5 + $0x98] sm:$0xf]
    %v210 = vld [vmem:[#allocation5 + $0x9c] sm:$0xf]
    %v211 = vld [vmem:[#allocation5 + $0xa0] sm:$0xf]
    %v212 = vld [vmem:[#allocation5 + $0xa4] sm:$0xf]
    %v213 = vld [vmem:[#allocation5 + $0xa8] sm:$0xf]
    %v214 = vld [vmem:[#allocation5 + $0xac] sm:$0xf]
    %v215 = vld [vmem:[#allocation5 + $0xb0] sm:$0xf]
    %v216 = vld [vmem:[#allocation5 + $0xb4] sm:$0xf]
    %v217 = vld [vmem:[#allocation5 + $0xb8] sm:$0xf]
    %v218 = vld [vmem:[#allocation5 + $0xbc] sm:$0xf]
    %v219 = vld [vmem:[#allocation5 + $0xc0] sm:$0xf]
    %v220 = vld [vmem:[#allocation5 + $0xc4] sm:$0xf]
    %v221 = vld [vmem:[#allocation5 + $0xc8] sm:$0xf]
    %v222 = vld [vmem:[#allocation5 + $0xcc] sm:$0xf]
    %v223 = vld [vmem:[#allocation5 + $0xd0] sm:$0xf]
    %v224 = vld [vmem:[#allocation5 + $0xd4] sm:$0xf]
    %v225 = vld [vmem:[#allocation5 + $0xd8] sm:$0xf]
    %v226 = vld [vmem:[#allocation5 + $0xdc] sm:$0xf]
    %v227 = vld [vmem:[#allocation5 + $0xe0] sm:$0xf]
    %v228 = vld [vmem:[#allocation5 + $0xe4] sm:$0xf]
    %v229 = vld [vmem:[#allocation5 + $0xe8] sm:$0xf]
    %v230 = vld [vmem:[#allocation5 + $0xec] sm:$0xf]
    %v231 = vld [vmem:[#allocation5 + $0xf0] sm:$0xf]
    %v232 = vld [vmem:[#allocation5 + $0xf4] sm:$0xf]
    %v233 = vld [vmem:[#allocation5 + $0xf8] sm:$0xf]
    %v234 = vld [vmem:[#allocation5 + $0xfc] sm:$0xf]
    %v235 = vld [vmem:[#allocation5 + $0x100] sm:$0xf]
    %v236 = vld [vmem:[#allocation5 + $0x104] sm:$0xf]
    %v237 = vld [vmem:[#allocation5 + $0x108] sm:$0xf]
    %v238 = vld [vmem:[#allocation5 + $0x10c] sm:$0xf]
    %v239 = vld [vmem:[#allocation5 + $0x110] sm:$0xf]
    %v240 = vld [vmem:[#allocation5 + $0x114] sm:$0xf]
    %v241 = vld [vmem:[#allocation5 + $0x118] sm:$0xf]
    %v242 = vld [vmem:[#allocation5 + $0x11c] sm:$0xf]
    %v243 = vld [vmem:[#allocation5 + $0x120] sm:$0xf]
    %v244 = vld [vmem:[#allocation5 + $0x124] sm:$0xf]
    %v245 = vld [vmem:[#allocation5 + $0x128] sm:$0xf]
    %v246 = vld [vmem:[#allocation5 + $0x12c] sm:$0xf]
    %v247 = vld [vmem:[#allocation5 + $0x130] sm:$0xf]
    %v248 = vld [vmem:[#allocation5 + $0x134] sm:$0xf]
    %v249 = vld [vmem:[#allocation5 + $0x138] sm:$0xf]
    %v250 = vld [vmem:[#allocation5 + $0x13c] sm:$0xf]
    %v251 = vld [vmem:[#allocation5 + $0x140] sm:$0xf]
    %v252 = vld [vmem:[#allocation5 + $0x144] sm:$0xf]
    %v253 = vld [vmem:[#allocation5 + $0x148] sm:$0xf]
    %v254 = vld [vmem:[#allocation5 + $0x14c] sm:$0xf]
    %v255 = vld [vmem:[#allocation5 + $0x150] sm:$0xf]
    %v256 = vld [vmem:[#allocation5 + $0x154] sm:$0xf]
    %v257 = vld [vmem:[#allocation5 + $0x158] sm:$0xf]
    %v258 = vld [vmem:[#allocation5 + $0x15c] sm:$0xf]
    %v259 = vld [vmem:[#allocation5 + $0x160] sm:$0xf]
    %v260 = vld [vmem:[#allocation5 + $0x164] sm:$0xf]
    %v261 = vld [vmem:[#allocation5 + $0x168] sm:$0xf]
    %v262 = vld [vmem:[#allocation5 + $0x16c] sm:$0xf]
    %v263 = vld [vmem:[#allocation5 + $0x170] sm:$0xf]
    %v264 = vld [vmem:[#allocation5 + $0x174] sm:$0xf]
    %v265 = vld [vmem:[#allocation5 + $0x178] sm:$0xf]
    %v266 = vld [vmem:[#allocation5 + $0x17c] sm:$0xf]
    %v267 = vld [vmem:[#allocation7] sm:$0x1]
    %v269 = vlaneseq
    %v270 = vshrl.u32 %v269, 7
    %v271 = vsub.s32 0, %v270
    %v272 = vrot.slane %v267, %v271
    %v280 = vunpack.c.l.b16 %v165
    %v281 = vunpack.c.h.b16 %v165
    %v282 = vunpack.c.l.b16 %v166
    %v283 = vunpack.c.h.b16 %v166
    %v284 = vunpack.c.l.b16 %v167
    %v285 = vunpack.c.h.b16 %v167
    %v286 = vunpack.c.l.b16 %v168
    %v287 = vunpack.c.h.b16 %v168
    %v288 = vunpack.c.l.b16 %v169
    %v289 = vunpack.c.h.b16 %v169
    %v290 = vunpack.c.l.b16 %v170
    %v291 = vunpack.c.h.b16 %v170
    %v292 = vpack.c.b16 %v286, %v280
    %v293 = vpack.c.b16 %v287, %v281
    %v294 = vpack.c.b16 %v288, %v282
    %v295 = vpack.c.b16 %v289, %v283
    %v296 = vpack.c.b16 %v290, %v284
    %v297 = vpack.c.b16 %v291, %v285
    %v400 = vunpack.c.l.b16 %v171
    %v401 = vunpack.c.l.b16 %v172
    %v402 = vunpack.c.l.b16 %v173
    %v403 = vunpack.c.l.b16 %v174
    %v404 = vunpack.c.l.b16 %v175
    %v405 = vunpack.c.l.b16 %v176
    %v406 = vunpack.c.l.b16 %v177
    %v407 = vunpack.c.l.b16 %v178
    %v408 = vunpack.c.l.b16 %v179
    %v409 = vunpack.c.l.b16 %v180
    %v410 = vunpack.c.l.b16 %v181
    %v411 = vunpack.c.l.b16 %v182
    %v412 = vunpack.c.l.b16 %v183
    %v413 = vunpack.c.l.b16 %v184
    %v414 = vunpack.c.l.b16 %v185
    %v415 = vunpack.c.l.b16 %v186
    %v416 = vunpack.c.l.b16 %v187
    %v417 = vunpack.c.l.b16 %v188
    %v418 = vunpack.c.l.b16 %v189
    %v419 = vunpack.c.l.b16 %v190
    %v420 = vunpack.c.l.b16 %v191
    %v421 = vunpack.c.l.b16 %v192
    %v422 = vunpack.c.l.b16 %v193
    %v423 = vunpack.c.l.b16 %v194
    %v424 = vunpack.c.l.b16 %v195
    %v425 = vunpack.c.l.b16 %v196
    %v426 = vunpack.c.l.b16 %v197
    %v427 = vunpack.c.l.b16 %v198
    %v428 = vunpack.c.l.b16 %v199
    %v429 = vunpack.c.l.b16 %v200
    %v430 = vunpack.c.l.b16 %v201
    %v431 = vunpack.c.l.b16 %v202
    %v432 = vunpack.c.l.b16 %v203
    %v433 = vunpack.c.l.b16 %v204
    %v434 = vunpack.c.l.b16 %v205
    %v435 = vunpack.c.l.b16 %v206
    %v436 = vunpack.c.l.b16 %v207
    %v437 = vunpack.c.l.b16 %v208
    %v438 = vunpack.c.l.b16 %v209
    %v439 = vunpack.c.l.b16 %v210
    %v440 = vunpack.c.l.b16 %v211
    %v441 = vunpack.c.l.b16 %v212
    %v442 = vunpack.c.l.b16 %v213
    %v443 = vunpack.c.l.b16 %v214
    %v444 = vunpack.c.l.b16 %v215
    %v445 = vunpack.c.l.b16 %v216
    %v446 = vunpack.c.l.b16 %v217
    %v447 = vunpack.c.l.b16 %v218
    %v448 = vunpack.c.l.b16 %v219
    %v449 = vunpack.c.l.b16 %v220
    %v450 = vunpack.c.l.b16 %v221
    %v451 = vunpack.c.l.b16 %v222
    %v452 = vunpack.c.l.b16 %v223
    %v453 = vunpack.c.l.b16 %v224
    %v454 = vunpack.c.l.b16 %v225
    %v455 = vunpack.c.l.b16 %v226
    %v456 = vunpack.c.l.b16 %v227
    %v457 = vunpack.c.l.b16 %v228
    %v458 = vunpack.c.l.b16 %v229
    %v459 = vunpack.c.l.b16 %v230
    %v460 = vunpack.c.l.b16 %v231
    %v461 = vunpack.c.l.b16 %v232
    %v462 = vunpack.c.l.b16 %v233
    %v463 = vunpack.c.l.b16 %v234
    %v464 = vunpack.c.l.b16 %v235
    %v465 = vunpack.c.l.b16 %v236
    %v466 = vunpack.c.l.b16 %v237
    %v467 = vunpack.c.l.b16 %v238
    %v468 = vunpack.c.l.b16 %v239
    %v469 = vunpack.c.l.b16 %v240
    %v470 = vunpack.c.l.b16 %v241
    %v471 = vunpack.c.l.b16 %v242
    %v472 = vunpack.c.l.b16 %v243
    %v473 = vunpack.c.l.b16 %v244
    %v474 = vunpack.c.l.b16 %v245
    %v475 = vunpack.c.l.b16 %v246
    %v476 = vunpack.c.l.b16 %v247
    %v477 = vunpack.c.l.b16 %v248
    %v478 = vunpack.c.l.b16 %v249
    %v479 = vunpack.c.l.b16 %v250
    %v480 = vunpack.c.l.b16 %v251
    %v481 = vunpack.c.l.b16 %v252
    %v482 = vunpack.c.l.b16 %v253
    %v483 = vunpack.c.l.b16 %v254
    %v484 = vunpack.c.l.b16 %v255
    %v485 = vunpack.c.l.b16 %v256
    %v486 = vunpack.c.l.b16 %v257
    %v487 = vunpack.c.l.b16 %v258
    %v488 = vunpack.c.l.b16 %v259
    %v489 = vunpack.c.l.b16 %v260
    %v490 = vunpack.c.l.b16 %v261
    %v491 = vunpack.c.l.b16 %v262
    %v492 = vunpack.c.l.b16 %v263
    %v493 = vunpack.c.l.b16 %v264
    %v494 = vunpack.c.l.b16 %v265
    %v495 = vunpack.c.l.b16 %v266
    %v496 = vpack.c.b16 %v401, %v400
    %v497 = vpack.c.b16 %v403, %v402
    %v498 = vpack.c.b16 %v405, %v404
    %v499 = vpack.c.b16 %v407, %v406
    %v500 = vpack.c.b16 %v409, %v408
    %v501 = vpack.c.b16 %v411, %v410
    %v502 = vpack.c.b16 %v413, %v412
    %v503 = vpack.c.b16 %v415, %v414
    %v504 = vpack.c.b16 %v417, %v416
    %v505 = vpack.c.b16 %v419, %v418
    %v506 = vpack.c.b16 %v421, %v420
    %v507 = vpack.c.b16 %v423, %v422
    %v508 = vpack.c.b16 %v425, %v424
    %v509 = vpack.c.b16 %v427, %v426
    %v510 = vpack.c.b16 %v429, %v428
    %v511 = vpack.c.b16 %v431, %v430
    %v512 = vpack.c.b16 %v433, %v432
    %v513 = vpack.c.b16 %v435, %v434
    %v514 = vpack.c.b16 %v437, %v436
    %v515 = vpack.c.b16 %v439, %v438
    %v516 = vpack.c.b16 %v441, %v440
    %v517 = vpack.c.b16 %v443, %v442
    %v518 = vpack.c.b16 %v445, %v444
    %v519 = vpack.c.b16 %v447, %v446
    %v520 = vpack.c.b16 %v449, %v448
    %v521 = vpack.c.b16 %v451, %v450
    %v522 = vpack.c.b16 %v453, %v452
    %v523 = vpack.c.b16 %v455, %v454
    %v524 = vpack.c.b16 %v457, %v456
    %v525 = vpack.c.b16 %v459, %v458
    %v526 = vpack.c.b16 %v461, %v460
    %v527 = vpack.c.b16 %v463, %v462
    %v528 = vpack.c.b16 %v465, %v464
    %v529 = vpack.c.b16 %v467, %v466
    %v530 = vpack.c.b16 %v469, %v468
    %v531 = vpack.c.b16 %v471, %v470
    %v532 = vpack.c.b16 %v473, %v472
    %v533 = vpack.c.b16 %v475, %v474
    %v534 = vpack.c.b16 %v477, %v476
    %v535 = vpack.c.b16 %v479, %v478
    %v536 = vpack.c.b16 %v481, %v480
    %v537 = vpack.c.b16 %v483, %v482
    %v538 = vpack.c.b16 %v485, %v484
    %v539 = vpack.c.b16 %v487, %v486
    %v540 = vpack.c.b16 %v489, %v488
    %v541 = vpack.c.b16 %v491, %v490
    %v542 = vpack.c.b16 %v493, %v492
    %v543 = vpack.c.b16 %v495, %v494
    %592 = vmatprep.subr.bf16.mxu0 0
    %593 = vmatpush1.bf16.msra.mxu0 %v496
    %594 = vmatprep.subr.bf16.mxu0 0
    %595 = vmatpush1.bf16.msra.mxu0 %v497
    %596 = vmatprep.subr.bf16.mxu0 0
    %597 = vmatpush1.bf16.msra.mxu0 %v498
    %598 = vmatprep.subr.bf16.mxu0 0
    %599 = vmatpush1.bf16.msra.mxu0 %v499
    %600 = vmatprep.subr.bf16.mxu0 0
    %601 = vmatpush1.bf16.msra.mxu0 %v500
    %602 = vmatprep.subr.bf16.mxu0 0
    %603 = vmatpush1.bf16.msra.mxu0 %v501
    %604 = vmatprep.subr.bf16.mxu0 0
    %605 = vmatpush1.bf16.msra.mxu0 %v502
    %606 = vmatprep.subr.bf16.mxu0 0
    %607 = vmatpush1.bf16.msra.mxu0 %v503
    %608 = vmatprep.subr.bf16.mxu0 0
    %609 = vmatpush1.bf16.msra.mxu0 %v504
    %610 = vmatprep.subr.bf16.mxu0 0
    %611 = vmatpush1.bf16.msra.mxu0 %v505
    %612 = vmatprep.subr.bf16.mxu0 0
    %613 = vmatpush1.bf16.msra.mxu0 %v506
    %614 = vmatprep.subr.bf16.mxu0 0
    %615 = vmatpush1.bf16.msra.mxu0 %v507
    %616 = vmatprep.subr.bf16.mxu0 0
    %617 = vmatpush1.bf16.msra.mxu0 %v508
    %618 = vmatprep.subr.bf16.mxu0 0
    %619 = vmatpush1.bf16.msra.mxu0 %v509
    %620 = vmatprep.subr.bf16.mxu0 0
    %621 = vmatpush1.bf16.msra.mxu0 %v510
    %622 = vmatprep.subr.bf16.mxu0 0
    %623 = vmatpush1.bf16.msra.mxu0 %v511
    %624 = vmatprep.mubr.bf16.mxu0 %v293
    %625 = vmatmul.mubr.bf16.gmra.mrb[0].mxu0 %v292
    %v626 = vpop.f32.mrb[0].mxu0
    %v627 = vadd.f32 %v272, %v626
    %v628 = vpop.f32.mrb[0].mxu0
    %v629 = vpop.f32.mrb[0].mxu0
    %v630 = vadd.f32 %v272, %v629
    %v631 = vpop.f32.mrb[0].mxu0
    %632 = vdwg.mxu0
    %633 = vmatprep.subr.bf16.mxu0 0
    %634 = vmatpush1.bf16.msra.mxu0 %v512
    %635 = vmatprep.subr.bf16.mxu0 0
    %636 = vmatpush1.bf16.msra.mxu0 %v513
    %637 = vmatprep.subr.bf16.mxu0 0
    %638 = vmatpush1.bf16.msra.mxu0 %v514
    %639 = vmatprep.subr.bf16.mxu0 0
    %640 = vmatpush1.bf16.msra.mxu0 %v515
    %641 = vmatprep.subr.bf16.mxu0 0
    %642 = vmatpush1.bf16.msra.mxu0 %v516
    %643 = vmatprep.subr.bf16.mxu0 0
    %644 = vmatpush1.bf16.msra.mxu0 %v517
    %645 = vmatprep.subr.bf16.mxu0 0
    %646 = vmatpush1.bf16.msra.mxu0 %v518
    %647 = vmatprep.subr.bf16.mxu0 0
    %648 = vmatpush1.bf16.msra.mxu0 %v519
    %649 = vmatprep.subr.bf16.mxu0 0
    %650 = vmatpush1.bf16.msra.mxu0 %v520
    %651 = vmatprep.subr.bf16.mxu0 0
    %652 = vmatpush1.bf16.msra.mxu0 %v521
    %653 = vmatprep.subr.bf16.mxu0 0
    %654 = vmatpush1.bf16.msra.mxu0 %v522
    %655 = vmatprep.subr.bf16.mxu0 0
    %656 = vmatpush1.bf16.msra.mxu0 %v523
    %657 = vmatprep.subr.bf16.mxu0 0
    %658 = vmatpush1.bf16.msra.mxu0 %v524
    %659 = vmatprep.subr.bf16.mxu0 0
    %660 = vmatpush1.bf16.msra.mxu0 %v525
    %661 = vmatprep.subr.bf16.mxu0 0
    %662 = vmatpush1.bf16.msra.mxu0 %v526
    %663 = vmatprep.subr.bf16.mxu0 0
    %664 = vmatpush1.bf16.msra.mxu0 %v527
    %665 = vmatprep.mubr.bf16.mxu0 %v295
    %666 = vmatmul.mubr.bf16.gmra.mrb[0].mxu0 %v294
    %v667 = vpop.f32.mrb[0].mxu0
    %v668 = vadd.f32 %v627, %v667
    %v669 = vpop.f32.mrb[0].mxu0
    %v670 = vpop.f32.mrb[0].mxu0
    %v671 = vadd.f32 %v630, %v670
    %v672 = vpop.f32.mrb[0].mxu0
    %673 = vdwg.mxu0
    %674 = vmatprep.subr.bf16.mxu0 0
    %675 = vmatpush1.bf16.msra.mxu0 %v528
    %676 = vmatprep.subr.bf16.mxu0 0
    %677 = vmatpush1.bf16.msra.mxu0 %v529
    %678 = vmatprep.subr.bf16.mxu0 0
    %679 = vmatpush1.bf16.msra.mxu0 %v530
    %680 = vmatprep.subr.bf16.mxu0 0
    %681 = vmatpush1.bf16.msra.mxu0 %v531
    %682 = vmatprep.subr.bf16.mxu0 0
    %683 = vmatpush1.bf16.msra.mxu0 %v532
    %684 = vmatprep.subr.bf16.mxu0 0
    %685 = vmatpush1.bf16.msra.mxu0 %v533
    %686 = vmatprep.subr.bf16.mxu0 0
    %687 = vmatpush1.bf16.msra.mxu0 %v534
    %688 = vmatprep.subr.bf16.mxu0 0
    %689 = vmatpush1.bf16.msra.mxu0 %v535
    %690 = vmatprep.subr.bf16.mxu0 0
    %691 = vmatpush1.bf16.msra.mxu0 %v536
    %692 = vmatprep.subr.bf16.mxu0 0
    %693 = vmatpush1.bf16.msra.mxu0 %v537
    %694 = vmatprep.subr.bf16.mxu0 0
    %695 = vmatpush1.bf16.msra.mxu0 %v538
    %696 = vmatprep.subr.bf16.mxu0 0
    %697 = vmatpush1.bf16.msra.mxu0 %v539
    %698 = vmatprep.subr.bf16.mxu0 0
    %699 = vmatpush1.bf16.msra.mxu0 %v540
    %700 = vmatprep.subr.bf16.mxu0 0
    %701 = vmatpush1.bf16.msra.mxu0 %v541
    %702 = vmatprep.subr.bf16.mxu0 0
    %703 = vmatpush1.bf16.msra.mxu0 %v542
    %704 = vmatprep.subr.bf16.mxu0 0
    %705 = vmatpush1.bf16.msra.mxu0 %v543
    %706 = vmatprep.mubr.bf16.mxu0 %v297
    %707 = vmatmul.mubr.bf16.gmra.mrb[0].mxu0 %v296
    %v708 = vpop.f32.mrb[0].mxu0
    %v709 = vadd.f32 %v668, %v708
    %v710 = vpop.f32.mrb[0].mxu0
    %v711 = vpop.f32.mrb[0].mxu0
    %v712 = vadd.f32 %v671, %v711
    %v713 = vpop.f32.mrb[0].mxu0
    %714 = vdwg.mxu0
    %v715 = vld [vmem:[#allocation8] sm:$0xff]
    %v716 = vld [vmem:[#allocation8 + $0x8] sm:$0xf]
    %v717 = vld [vmem:[#allocation8 + $0xc] sm:$0xff]
    %v718 = vld [vmem:[#allocation8 + $0x14] sm:$0xf]
    %v719 = vld [vmem:[#allocation8 + $0x18] sm:$0xff]
    %v720 = vld [vmem:[#allocation8 + $0x20] sm:$0xf]
    %v721 = vld [vmem:[#allocation8 + $0x24] sm:$0xff]
    %v722 = vld [vmem:[#allocation8 + $0x2c] sm:$0xf]
    %v723 = vld [vmem:[#allocation8 + $0x30] sm:$0xff]
    %v724 = vld [vmem:[#allocation8 + $0x38] sm:$0xf]
    %v725 = vld [vmem:[#allocation8 + $0x3c] sm:$0xff]
    %v726 = vld [vmem:[#allocation8 + $0x44] sm:$0xf]
    %v727 = vld [vmem:[#allocation8 + $0x48] sm:$0xff]
    %v728 = vld [vmem:[#allocation8 + $0x50] sm:$0xf]
    %v729 = vld [vmem:[#allocation8 + $0x54] sm:$0xff]
    %v730 = vld [vmem:[#allocation8 + $0x5c] sm:$0xf]
    %v731 = vld [vmem:[#allocation8 + $0x60] sm:$0xff]
    %v732 = vld [vmem:[#allocation8 + $0x68] sm:$0xf]
    %v733 = vld [vmem:[#allocation8 + $0x6c] sm:$0xff]
    %v734 = vld [vmem:[#allocation8 + $0x74] sm:$0xf]
    %v735 = vld [vmem:[#allocation8 + $0x78] sm:$0xff]
    %v736 = vld [vmem:[#allocation8 + $0x80] sm:$0xf]
    %v737 = vld [vmem:[#allocation8 + $0x84] sm:$0xff]
    %v738 = vld [vmem:[#allocation8 + $0x8c] sm:$0xf]
    %v739 = vld [vmem:[#allocation8 + $0x90] sm:$0xff]
    %v740 = vld [vmem:[#allocation8 + $0x98] sm:$0xf]
    %v741 = vld [vmem:[#allocation8 + $0x9c] sm:$0xff]
    %v742 = vld [vmem:[#allocation8 + $0xa4] sm:$0xf]
    %v743 = vld [vmem:[#allocation8 + $0xa8] sm:$0xff]
    %v744 = vld [vmem:[#allocation8 + $0xb0] sm:$0xf]
    %v745 = vld [vmem:[#allocation8 + $0xb4] sm:$0xff]
    %v746 = vld [vmem:[#allocation8 + $0xbc] sm:$0xf]
    %v747 = vld [vmem:[%s4] sm:$0x7]
    %v748 = vld [vmem:[#allocation10] sm:$0xf]
    %v749 = vld [vmem:[#allocation10 + $0x4] sm:$0xf]
    %v750 = vld [vmem:[#allocation10 + $0x8] sm:$0xf]
    %v751 = vld [vmem:[#allocation10 + $0xc] sm:$0xf]
    %v752 = vld [vmem:[#allocation10 + $0x10] sm:$0xf]
    %v753 = vld [vmem:[#allocation10 + $0x14] sm:$0xf]
    %v754 = vld [vmem:[#allocation10 + $0x18] sm:$0xf]
    %v755 = vld [vmem:[#allocation10 + $0x1c] sm:$0xf]
    %v756 = vld [vmem:[#allocation10 + $0x20] sm:$0xf]
    %v757 = vld [vmem:[#allocation10 + $0x24] sm:$0xf]
    %v758 = vld [vmem:[#allocation10 + $0x28] sm:$0xf]
    %v759 = vld [vmem:[#allocation10 + $0x2c] sm:$0xf]
    %v760 = vld [vmem:[#allocation10 + $0x30] sm:$0xf]
    %v761 = vld [vmem:[#allocation10 + $0x34] sm:$0xf]
    %v762 = vld [vmem:[#allocation10 + $0x38] sm:$0xf]
    %v763 = vld [vmem:[#allocation10 + $0x3c] sm:$0xf]
    %v764 = vld [vmem:[%s6] sm:$0x1]
    %v765 = vpack.c.bf16 %v712, %v709
    %v767 = vlaneseq
    %v768 = vshrl.u32 %v767, 7
    %v769 = vsub.s32 0, %v768
    %v770 = vrot.slane %v747, %v769
    %v771 = vlaneseq
    %v772 = vshrl.u32 %v771, 7
    %v773 = vsub.s32 1, %v772
    %v774 = vrot.slane %v747, %v773
    %v775 = vlaneseq
    %v776 = vshrl.u32 %v775, 7
    %v777 = vsub.s32 2, %v776
    %v778 = vrot.slane %v747, %v777
    %v814 = vunpack.c.l.b16 %v715
    %v815 = vunpack.c.h.b16 %v715
    %v816 = vunpack.c.l.b16 %v716
    %v817 = vunpack.c.l.b16 %v717
    %v818 = vunpack.c.h.b16 %v717
    %v819 = vunpack.c.l.b16 %v718
    %v820 = vunpack.c.l.b16 %v719
    %v821 = vunpack.c.h.b16 %v719
    %v822 = vunpack.c.l.b16 %v720
    %v823 = vunpack.c.l.b16 %v721
    %v824 = vunpack.c.h.b16 %v721
    %v825 = vunpack.c.l.b16 %v722
    %v826 = vunpack.c.l.b16 %v723
    %v827 = vunpack.c.h.b16 %v723
    %v828 = vunpack.c.l.b16 %v724
    %v829 = vunpack.c.l.b16 %v725
    %v830 = vunpack.c.h.b16 %v725
    %v831 = vunpack.c.l.b16 %v726
    %v832 = vunpack.c.l.b16 %v727
    %v833 = vunpack.c.h.b16 %v727
    %v834 = vunpack.c.l.b16 %v728
    %v835 = vunpack.c.l.b16 %v729
    %v836 = vunpack.c.h.b16 %v729
    %v837 = vunpack.c.l.b16 %v730
    %v838 = vunpack.c.l.b16 %v731
    %v839 = vunpack.c.h.b16 %v731
    %v840 = vunpack.c.l.b16 %v732
    %v841 = vunpack.c.l.b16 %v733
    %v842 = vunpack.c.h.b16 %v733
    %v843 = vunpack.c.l.b16 %v734
    %v844 = vunpack.c.l.b16 %v735
    %v845 = vunpack.c.h.b16 %v735
    %v846 = vunpack.c.l.b16 %v736
    %v847 = vunpack.c.l.b16 %v737
    %v848 = vunpack.c.h.b16 %v737
    %v849 = vunpack.c.l.b16 %v738
    %v850 = vunpack.c.l.b16 %v739
    %v851 = vunpack.c.h.b16 %v739
    %v852 = vunpack.c.l.b16 %v740
    %v853 = vunpack.c.l.b16 %v741
    %v854 = vunpack.c.h.b16 %v741
    %v855 = vunpack.c.l.b16 %v742
    %v856 = vunpack.c.l.b16 %v743
    %v857 = vunpack.c.h.b16 %v743
    %v858 = vunpack.c.l.b16 %v744
    %v859 = vunpack.c.l.b16 %v745
    %v860 = vunpack.c.h.b16 %v745
    %v861 = vunpack.c.l.b16 %v746
    %v862 = vpack.c.b16 %v817, %v814
    %v863 = vpack.c.b16 %v818, %v815
    %v864 = vpack.c.b16 %v819, %v816
    %v865 = vpack.c.b16 %v823, %v820
    %v866 = vpack.c.b16 %v824, %v821
    %v867 = vpack.c.b16 %v825, %v822
    %v868 = vpack.c.b16 %v829, %v826
    %v869 = vpack.c.b16 %v830, %v827
    %v870 = vpack.c.b16 %v831, %v828
    %v871 = vpack.c.b16 %v835, %v832
    %v872 = vpack.c.b16 %v836, %v833
    %v873 = vpack.c.b16 %v837, %v834
    %v874 = vpack.c.b16 %v841, %v838
    %v875 = vpack.c.b16 %v842, %v839
    %v876 = vpack.c.b16 %v843, %v840
    %v877 = vpack.c.b16 %v847, %v844
    %v878 = vpack.c.b16 %v848, %v845
    %v879 = vpack.c.b16 %v849, %v846
    %v880 = vpack.c.b16 %v853, %v850
    %v881 = vpack.c.b16 %v854, %v851
    %v882 = vpack.c.b16 %v855, %v852
    %v883 = vpack.c.b16 %v859, %v856
    %v884 = vpack.c.b16 %v860, %v857
    %v885 = vpack.c.b16 %v861, %v858
    %910 = vmatprep.subr.bf16.mxu0 %v863
    %911 = vmatpush1.bf16.msra.mxu0 %v862
    %912 = vmatprep.subr.bf16.mxu0 %v866
    %913 = vmatpush1.bf16.msra.mxu0 %v865
    %914 = vmatprep.subr.bf16.mxu0 %v869
    %915 = vmatpush1.bf16.msra.mxu0 %v868
    %916 = vmatprep.subr.bf16.mxu0 %v872
    %917 = vmatpush1.bf16.msra.mxu0 %v871
    %918 = vmatprep.subr.bf16.mxu0 %v875
    %919 = vmatpush1.bf16.msra.mxu0 %v874
    %920 = vmatprep.subr.bf16.mxu0 %v878
    %921 = vmatpush1.bf16.msra.mxu0 %v877
    %922 = vmatprep.subr.bf16.mxu0 %v881
    %923 = vmatpush1.bf16.msra.mxu0 %v880
    %924 = vmatprep.subr.bf16.mxu0 %v884
    %925 = vmatpush1.bf16.msra.mxu0 %v883
    %926 = vmatprep.subr.bf16.mxu0 0
    %927 = vmatpush1.bf16.msra.mxu0 0
    %928 = vmatprep.subr.bf16.mxu0 0
    %929 = vmatpush1.bf16.msra.mxu0 0
    %930 = vmatprep.subr.bf16.mxu0 0
    %931 = vmatpush1.bf16.msra.mxu0 0
    %932 = vmatprep.subr.bf16.mxu0 0
    %933 = vmatpush1.bf16.msra.mxu0 0
    %934 = vmatprep.subr.bf16.mxu0 0
    %935 = vmatpush1.bf16.msra.mxu0 0
    %936 = vmatprep.subr.bf16.mxu0 0
    %937 = vmatpush1.bf16.msra.mxu0 0
    %938 = vmatprep.subr.bf16.mxu0 0
    %939 = vmatpush1.bf16.msra.mxu0 0
    %940 = vmatprep.subr.bf16.mxu0 0
    %941 = vmatpush1.bf16.msra.mxu0 0
    %942 = vmatprep.mubr.bf16.mxu0 0
    %943 = vmatmul.mubr.bf16.gmra.mrb[0].mxu0 %v765
    %v944 = vpop.f32.mrb[0].mxu0
    %v945 = vadd.f32 %v770, %v944
    %v946 = vpop.f32.mrb[0].mxu0
    %v947 = vadd.f32 %v774, %v946
    %v948 = vpop.f32.mrb[0].mxu0
    %v949 = vadd.f32 %v770, %v948
    %v950 = vpop.f32.mrb[0].mxu0
    %v951 = vadd.f32 %v774, %v950
    %952 = vdwg.mxu0
    %953 = vmatprep.subr.bf16.mxu0 0
    %954 = vmatpush1.bf16.msra.mxu0 %v864
    %955 = vmatprep.subr.bf16.mxu0 0
    %956 = vmatpush1.bf16.msra.mxu0 %v867
    %957 = vmatprep.subr.bf16.mxu0 0
    %958 = vmatpush1.bf16.msra.mxu0 %v870
    %959 = vmatprep.subr.bf16.mxu0 0
    %960 = vmatpush1.bf16.msra.mxu0 %v873
    %961 = vmatprep.subr.bf16.mxu0 0
    %962 = vmatpush1.bf16.msra.mxu0 %v876
    %963 = vmatprep.subr.bf16.mxu0 0
    %964 = vmatpush1.bf16.msra.mxu0 %v879
    %965 = vmatprep.subr.bf16.mxu0 0
    %966 = vmatpush1.bf16.msra.mxu0 %v882
    %967 = vmatprep.subr.bf16.mxu0 0
    %968 = vmatpush1.bf16.msra.mxu0 %v885
    %969 = vmatprep.subr.bf16.mxu0 0
    %970 = vmatpush1.bf16.msra.mxu0 0
    %971 = vmatprep.subr.bf16.mxu0 0
    %972 = vmatpush1.bf16.msra.mxu0 0
    %973 = vmatprep.subr.bf16.mxu0 0
    %974 = vmatpush1.bf16.msra.mxu0 0
    %975 = vmatprep.subr.bf16.mxu0 0
    %976 = vmatpush1.bf16.msra.mxu0 0
    %977 = vmatprep.subr.bf16.mxu0 0
    %978 = vmatpush1.bf16.msra.mxu0 0
    %979 = vmatprep.subr.bf16.mxu0 0
    %980 = vmatpush1.bf16.msra.mxu0 0
    %981 = vmatprep.subr.bf16.mxu0 0
    %982 = vmatpush1.bf16.msra.mxu0 0
    %983 = vmatprep.subr.bf16.mxu0 0
    %984 = vmatpush1.bf16.msra.mxu0 0
    %985 = vmatprep.mubr.bf16.mxu0 0
    %986 = vmatmul.mubr.bf16.gmra.mrb[0].mxu0 %v765
    %v987 = vpop.f32.mrb[0].mxu0
    %v988 = vadd.f32 %v778, %v987
    %v989 = vpop.f32.mrb[0].mxu0
    %v990 = vpop.f32.mrb[0].mxu0
    %v991 = vadd.f32 %v778, %v990
    %v992 = vpop.f32.mrb[0].mxu0
    %993 = vdwg.mxu0
    %v994 = vpack.c.bf16 %v945, %v945
    %v995 = vpack.c.bf16 %v949, %v949
    %v996 = vpack.c.bf16 %v947, %v947
    %v997 = vpack.c.bf16 %v951, %v951
    %vm998 = vcmask 261120
    %v1000 = vsel %vm998, %v994, 0
    %v1003 = vsel %vm998, %v996, 0
    %1005 = vmatprep.subr.bf16.mxu0 0
    %1006 = vmatpush1.bf16.xpose.msra.mxu0 %v1003
    %1007 = vmatprep.subr.bf16.mxu0 0
    %1008 = vmatpush1.bf16.xpose.msra.mxu0 0
    %1009 = vmatprep.subr.bf16.mxu0 0
    %1010 = vmatpush1.bf16.xpose.msra.mxu0 0
    %1011 = vmatprep.subr.bf16.mxu0 0
    %1012 = vmatpush1.bf16.xpose.msra.mxu0 0
    %1013 = vmatprep.subr.bf16.mxu0 0
    %1014 = vmatpush1.bf16.xpose.msra.mxu0 0
    %1015 = vmatprep.subr.bf16.mxu0 0
    %1016 = vmatpush1.bf16.xpose.msra.mxu0 0
    %1017 = vmatprep.subr.bf16.mxu0 0
    %1018 = vmatpush1.bf16.xpose.msra.mxu0 0
    %1019 = vmatprep.subr.bf16.mxu0 0
    %1020 = vmatpush1.bf16.xpose.msra.mxu0 0
    %1021 = vmatprep.subr.bf16.mxu0 0
    %1022 = vmatpush1.bf16.xpose.msra.mxu0 0
    %1023 = vmatprep.subr.bf16.mxu0 0
    %1024 = vmatpush1.bf16.xpose.msra.mxu0 0
    %1025 = vmatprep.subr.bf16.mxu0 0
    %1026 = vmatpush1.bf16.xpose.msra.mxu0 0
    %1027 = vmatprep.subr.bf16.mxu0 0
    %1028 = vmatpush1.bf16.xpose.msra.mxu0 0
    %1029 = vmatprep.subr.bf16.mxu0 0
    %1030 = vmatpush1.bf16.xpose.msra.mxu0 0
    %1031 = vmatprep.subr.bf16.mxu0 0
    %1032 = vmatpush1.bf16.xpose.msra.mxu0 0
    %1033 = vmatprep.subr.bf16.mxu0 0
    %1034 = vmatpush1.bf16.xpose.msra.mxu0 0
    %1035 = vmatprep.subr.bf16.mxu0 0
    %1036 = vmatpush1.bf16.xpose.msra.mxu0 0
    %1037 = vmatprep.mubr.bf16.mxu0 0
    %1038 = vmatmul.mubr.bf16.gmra.mrb[0].mxu0 %v1000
    %v1039 = vpop.f32.mrb[0].mxu0
    %v1040 = vadd.f32 0.0, %v1039
    %v1041 = vpop.f32.mrb[0].mxu0
    %v1042 = vpop.f32.mrb[0].mxu0
    %v1043 = vpop.f32.mrb[0].mxu0
    %1044 = vdwg.mxu0
    %v1046 = vsel %vm998, %v995, 0
    %v1049 = vsel %vm998, %v997, 0
    %1051 = vmatprep.subr.bf16.mxu0 0
    %1052 = vmatpush1.bf16.xpose.msra.mxu0 %v1049
    %1053 = vmatprep.subr.bf16.mxu0 0
    %1054 = vmatpush1.bf16.xpose.msra.mxu0 0
    %1055 = vmatprep.subr.bf16.mxu0 0
    %1056 = vmatpush1.bf16.xpose.msra.mxu0 0
    %1057 = vmatprep.subr.bf16.mxu0 0
    %1058 = vmatpush1.bf16.xpose.msra.mxu0 0
    %1059 = vmatprep.subr.bf16.mxu0 0
    %1060 = vmatpush1.bf16.xpose.msra.mxu0 0
    %1061 = vmatprep.subr.bf16.mxu0 0
    %1062 = vmatpush1.bf16.xpose.msra.mxu0 0
    %1063 = vmatprep.subr.bf16.mxu0 0
    %1064 = vmatpush1.bf16.xpose.msra.mxu0 0
    %1065 = vmatprep.subr.bf16.mxu0 0
    %1066 = vmatpush1.bf16.xpose.msra.mxu0 0
    %1067 = vmatprep.subr.bf16.mxu0 0
    %1068 = vmatpush1.bf16.xpose.msra.mxu0 0
    %1069 = vmatprep.subr.bf16.mxu0 0
    %1070 = vmatpush1.bf16.xpose.msra.mxu0 0
    %1071 = vmatprep.subr.bf16.mxu0 0
    %1072 = vmatpush1.bf16.xpose.msra.mxu0 0
    %1073 = vmatprep.subr.bf16.mxu0 0
    %1074 = vmatpush1.bf16.xpose.msra.mxu0 0
    %1075 = vmatprep.subr.bf16.mxu0 0
    %1076 = vmatpush1.bf16.xpose.msra.mxu0 0
    %1077 = vmatprep.subr.bf16.mxu0 0
    %1078 = vmatpush1.bf16.xpose.msra.mxu0 0
    %1079 = vmatprep.subr.bf16.mxu0 0
    %1080 = vmatpush1.bf16.xpose.msra.mxu0 0
    %1081 = vmatprep.subr.bf16.mxu0 0
    %1082 = vmatpush1.bf16.xpose.msra.mxu0 0
    %1083 = vmatprep.mubr.bf16.mxu0 0
    %1084 = vmatmul.mubr.bf16.gmra.mrb[0].mxu0 %v1046
    %v1085 = vpop.f32.mrb[0].mxu0
    %v1086 = vadd.f32 0.0, %v1085
    %v1087 = vpop.f32.mrb[0].mxu0
    %v1088 = vpop.f32.mrb[0].mxu0
    %v1089 = vpop.f32.mrb[0].mxu0
    %1090 = vdwg.mxu0
    %v1091 = vmul.f32 %v1040, 0.17677669
    %v1092 = vmul.f32 %v1086, 0.17677669
    %vm1093 = vcmask 64512
    %v1094 = vsel %vm1093, %v1091, -inf
    %1095 = vmax.xlane.f32.xlu0 %v1094
    %v1096 = vpop.xlane.xlu0 %1095
    %v1097 = vsel %vm1093, %v1092, -inf
    %1098 = vmax.xlane.f32.xlu0 %v1097
    %v1099 = vpop.xlane.xlu0 %1098
    %v1100 = vsub.f32 %v1091, %v1096
    %v1101 = vsub.f32 %v1092, %v1099
    %v1102 = vmul.f32 %v1100, 1.442695
    %v1103 = vpow.pop %v1102
    %v1104 = vmul.f32 %v1101, 1.442695
    %v1105 = vpow.pop %v1104
    %v1106 = vsel %vm1093, %v1103, 0.0
    %1107 = vadd.xlane.f32.xlu0 %v1106
    %v1108 = vpop.xlane.xlu0 %1107
    %v1109 = vsel %vm1093, %v1105, 0.0
    %1110 = vadd.xlane.f32.xlu0 %v1109
    %v1111 = vpop.xlane.xlu0 %1110
    %v1112 = vrcp.pop %v1108
    %v1113 = vrcp.pop %v1111
    %v1114 = vmul.f32 %v1103, %v1112
    %v1115 = vmul.f32 %v1105, %v1113
    %v1116 = vpack.c.bf16 %v1114, %v1114
    %v1117 = vpack.c.bf16 %v1115, %v1115
    %v1118 = vpack.c.bf16 %v988, %v988
    %v1119 = vpack.c.bf16 %v991, %v991
    %v1121 = vsel %vm1093, %v1116, 0
    %vm1123 = vcmask 1043456
    %v1125 = vsel %vm1123, %v1118, 0
    %1127 = vmatprep.subr.bf16.mxu0 0
    %1128 = vmatpush1.bf16.msra.mxu0 %v1125
    %1129 = vmatprep.subr.bf16.mxu0 0
    %1130 = vmatpush1.bf16.msra.mxu0 0
    %1131 = vmatprep.subr.bf16.mxu0 0
    %1132 = vmatpush1.bf16.msra.mxu0 0
    %1133 = vmatprep.subr.bf16.mxu0 0
    %1134 = vmatpush1.bf16.msra.mxu0 0
    %1135 = vmatprep.subr.bf16.mxu0 0
    %1136 = vmatpush1.bf16.msra.mxu0 0
    %1137 = vmatprep.subr.bf16.mxu0 0
    %1138 = vmatpush1.bf16.msra.mxu0 0
    %1139 = vmatprep.subr.bf16.mxu0 0
    %1140 = vmatpush1.bf16.msra.mxu0 0
    %1141 = vmatprep.subr.bf16.mxu0 0
    %1142 = vmatpush1.bf16.msra.mxu0 0
    %1143 = vmatprep.subr.bf16.mxu0 0
    %1144 = vmatpush1.bf16.msra.mxu0 0
    %1145 = vmatprep.subr.bf16.mxu0 0
    %1146 = vmatpush1.bf16.msra.mxu0 0
    %1147 = vmatprep.subr.bf16.mxu0 0
    %1148 = vmatpush1.bf16.msra.mxu0 0
    %1149 = vmatprep.subr.bf16.mxu0 0
    %1150 = vmatpush1.bf16.msra.mxu0 0
    %1151 = vmatprep.subr.bf16.mxu0 0
    %1152 = vmatpush1.bf16.msra.mxu0 0
    %1153 = vmatprep.subr.bf16.mxu0 0
    %1154 = vmatpush1.bf16.msra.mxu0 0
    %1155 = vmatprep.subr.bf16.mxu0 0
    %1156 = vmatpush1.bf16.msra.mxu0 0
    %1157 = vmatprep.subr.bf16.mxu0 0
    %1158 = vmatpush1.bf16.msra.mxu0 0
    %1159 = vmatprep.mubr.bf16.mxu0 0
    %1160 = vmatmul.mubr.bf16.gmra.mrb[0].mxu0 %v1121
    %v1161 = vpop.f32.mrb[0].mxu0
    %v1162 = vadd.f32 0.0, %v1161
    %v1163 = vpop.f32.mrb[0].mxu0
    %v1164 = vpop.f32.mrb[0].mxu0
    %v1165 = vpop.f32.mrb[0].mxu0
    %1166 = vdwg.mxu0
    %v1168 = vsel %vm1093, %v1117, 0
    %v1171 = vsel %vm1123, %v1119, 0
    %1173 = vmatprep.subr.bf16.mxu0 0
    %1174 = vmatpush1.bf16.msra.mxu0 %v1171
    %1175 = vmatprep.subr.bf16.mxu0 0
    %1176 = vmatpush1.bf16.msra.mxu0 0
    %1177 = vmatprep.subr.bf16.mxu0 0
    %1178 = vmatpush1.bf16.msra.mxu0 0
    %1179 = vmatprep.subr.bf16.mxu0 0
    %1180 = vmatpush1.bf16.msra.mxu0 0
    %1181 = vmatprep.subr.bf16.mxu0 0
    %1182 = vmatpush1.bf16.msra.mxu0 0
    %1183 = vmatprep.subr.bf16.mxu0 0
    %1184 = vmatpush1.bf16.msra.mxu0 0
    %1185 = vmatprep.subr.bf16.mxu0 0
    %1186 = vmatpush1.bf16.msra.mxu0 0
    %1187 = vmatprep.subr.bf16.mxu0 0
    %1188 = vmatpush1.bf16.msra.mxu0 0
    %1189 = vmatprep.subr.bf16.mxu0 0
    %1190 = vmatpush1.bf16.msra.mxu0 0
    %1191 = vmatprep.subr.bf16.mxu0 0
    %1192 = vmatpush1.bf16.msra.mxu0 0
    %1193 = vmatprep.subr.bf16.mxu0 0
    %1194 = vmatpush1.bf16.msra.mxu0 0
    %1195 = vmatprep.subr.bf16.mxu0 0
    %1196 = vmatpush1.bf16.msra.mxu0 0
    %1197 = vmatprep.subr.bf16.mxu0 0
    %1198 = vmatpush1.bf16.msra.mxu0 0
    %1199 = vmatprep.subr.bf16.mxu0 0
    %1200 = vmatpush1.bf16.msra.mxu0 0
    %1201 = vmatprep.subr.bf16.mxu0 0
    %1202 = vmatpush1.bf16.msra.mxu0 0
    %1203 = vmatprep.subr.bf16.mxu0 0
    %1204 = vmatpush1.bf16.msra.mxu0 0
    %1205 = vmatprep.mubr.bf16.mxu0 0
    %1206 = vmatmul.mubr.bf16.gmra.mrb[0].mxu0 %v1168
    %v1207 = vpop.f32.mrb[0].mxu0
    %v1208 = vadd.f32 0.0, %v1207
    %v1209 = vpop.f32.mrb[0].mxu0
    %v1210 = vpop.f32.mrb[0].mxu0
    %v1211 = vpop.f32.mrb[0].mxu0
    %1212 = vdwg.mxu0
    %1214 = vrot.lane.b32.xlu0 %v994, 96
    %v1215 = vpop.permute.xlu0 %1214
    %1217 = vrot.lane.b32.xlu0 %v996, 96
    %v1218 = vpop.permute.xlu0 %1217
    %v1220 = vsel %vm998, %v1215, 0
    %v1223 = vsel %vm998, %v1218, 0
    %1225 = vmatprep.subr.bf16.mxu0 0
    %1226 = vmatpush1.bf16.xpose.msra.mxu0 %v1223
    %1227 = vmatprep.subr.bf16.mxu0 0
    %1228 = vmatpush1.bf16.xpose.msra.mxu0 0
    %1229 = vmatprep.subr.bf16.mxu0 0
    %1230 = vmatpush1.bf16.xpose.msra.mxu0 0
    %1231 = vmatprep.subr.bf16.mxu0 0
    %1232 = vmatpush1.bf16.xpose.msra.mxu0 0
    %1233 = vmatprep.subr.bf16.mxu0 0
    %1234 = vmatpush1.bf16.xpose.msra.mxu0 0
    %1235 = vmatprep.subr.bf16.mxu0 0
    %1236 = vmatpush1.bf16.xpose.msra.mxu0 0
    %1237 = vmatprep.subr.bf16.mxu0 0
    %1238 = vmatpush1.bf16.xpose.msra.mxu0 0
    %1239 = vmatprep.subr.bf16.mxu0 0
    %1240 = vmatpush1.bf16.xpose.msra.mxu0 0
    %1241 = vmatprep.subr.bf16.mxu0 0
    %1242 = vmatpush1.bf16.xpose.msra.mxu0 0
    %1243 = vmatprep.subr.bf16.mxu0 0
    %1244 = vmatpush1.bf16.xpose.msra.mxu0 0
    %1245 = vmatprep.subr.bf16.mxu0 0
    %1246 = vmatpush1.bf16.xpose.msra.mxu0 0
    %1247 = vmatprep.subr.bf16.mxu0 0
    %1248 = vmatpush1.bf16.xpose.msra.mxu0 0
    %1249 = vmatprep.subr.bf16.mxu0 0
    %1250 = vmatpush1.bf16.xpose.msra.mxu0 0
    %1251 = vmatprep.subr.bf16.mxu0 0
    %1252 = vmatpush1.bf16.xpose.msra.mxu0 0
    %1253 = vmatprep.subr.bf16.mxu0 0
    %1254 = vmatpush1.bf16.xpose.msra.mxu0 0
    %1255 = vmatprep.subr.bf16.mxu0 0
    %1256 = vmatpush1.bf16.xpose.msra.mxu0 0
    %1257 = vmatprep.mubr.bf16.mxu0 0
    %1258 = vmatmul.mubr.bf16.gmra.mrb[0].mxu0 %v1220
    %v1259 = vpop.f32.mrb[0].mxu0
    %v1260 = vadd.f32 0.0, %v1259
    %v1261 = vpop.f32.mrb[0].mxu0
    %v1262 = vpop.f32.mrb[0].mxu0
    %v1263 = vpop.f32.mrb[0].mxu0
    %1264 = vdwg.mxu0
    %1266 = vrot.lane.b32.xlu0 %v995, 96
    %v1267 = vpop.permute.xlu0 %1266
    %1269 = vrot.lane.b32.xlu0 %v997, 96
    %v1270 = vpop.permute.xlu0 %1269
    %v1272 = vsel %vm998, %v1267, 0
    %v1275 = vsel %vm998, %v1270, 0
    %1277 = vmatprep.subr.bf16.mxu0 0
    %1278 = vmatpush1.bf16.xpose.msra.mxu0 %v1275
    %1279 = vmatprep.subr.bf16.mxu0 0
    %1280 = vmatpush1.bf16.xpose.msra.mxu0 0
    %1281 = vmatprep.subr.bf16.mxu0 0
    %1282 = vmatpush1.bf16.xpose.msra.mxu0 0
    %1283 = vmatprep.subr.bf16.mxu0 0
    %1284 = vmatpush1.bf16.xpose.msra.mxu0 0
    %1285 = vmatprep.subr.bf16.mxu0 0
    %1286 = vmatpush1.bf16.xpose.msra.mxu0 0
    %1287 = vmatprep.subr.bf16.mxu0 0
    %1288 = vmatpush1.bf16.xpose.msra.mxu0 0
    %1289 = vmatprep.subr.bf16.mxu0 0
    %1290 = vmatpush1.bf16.xpose.msra.mxu0 0
    %1291 = vmatprep.subr.bf16.mxu0 0
    %1292 = vmatpush1.bf16.xpose.msra.mxu0 0
    %1293 = vmatprep.subr.bf16.mxu0 0
    %1294 = vmatpush1.bf16.xpose.msra.mxu0 0
    %1295 = vmatprep.subr.bf16.mxu0 0
    %1296 = vmatpush1.bf16.xpose.msra.mxu0 0
    %1297 = vmatprep.subr.bf16.mxu0 0
    %1298 = vmatpush1.bf16.xpose.msra.mxu0 0
    %1299 = vmatprep.subr.bf16.mxu0 0
    %1300 = vmatpush1.bf16.xpose.msra.mxu0 0
    %1301 = vmatprep.subr.bf16.mxu0 0
    %1302 = vmatpush1.bf16.xpose.msra.mxu0 0
    %1303 = vmatprep.subr.bf16.mxu0 0
    %1304 = vmatpush1.bf16.xpose.msra.mxu0 0
    %1305 = vmatprep.subr.bf16.mxu0 0
    %1306 = vmatpush1.bf16.xpose.msra.mxu0 0
    %1307 = vmatprep.subr.bf16.mxu0 0
    %1308 = vmatpush1.bf16.xpose.msra.mxu0 0
    %1309 = vmatprep.mubr.bf16.mxu0 0
    %1310 = vmatmul.mubr.bf16.gmra.mrb[0].mxu0 %v1272
    %v1311 = vpop.f32.mrb[0].mxu0
    %v1312 = vadd.f32 0.0, %v1311
    %v1313 = vpop.f32.mrb[0].mxu0
    %v1314 = vpop.f32.mrb[0].mxu0
    %v1315 = vpop.f32.mrb[0].mxu0
    %1316 = vdwg.mxu0
    %v1317 = vmul.f32 %v1260, 0.17677669
    %v1318 = vmul.f32 %v1312, 0.17677669
    %v1319 = vsel %vm1093, %v1317, -inf
    %1320 = vmax.xlane.f32.xlu0 %v1319
    %v1321 = vpop.xlane.xlu0 %1320
    %v1322 = vsel %vm1093, %v1318, -inf
    %1323 = vmax.xlane.f32.xlu0 %v1322
    %v1324 = vpop.xlane.xlu0 %1323
    %v1325 = vsub.f32 %v1317, %v1321
    %v1326 = vsub.f32 %v1318, %v1324
    %v1327 = vmul.f32 %v1325, 1.442695
    %v1328 = vpow.pop %v1327
    %v1329 = vmul.f32 %v1326, 1.442695
    %v1330 = vpow.pop %v1329
    %v1331 = vsel %vm1093, %v1328, 0.0
    %1332 = vadd.xlane.f32.xlu0 %v1331
    %v1333 = vpop.xlane.xlu0 %1332
    %v1334 = vsel %vm1093, %v1330, 0.0
    %1335 = vadd.xlane.f32.xlu0 %v1334
    %v1336 = vpop.xlane.xlu0 %1335
    %v1337 = vrcp.pop %v1333
    %v1338 = vrcp.pop %v1336
    %v1339 = vmul.f32 %v1328, %v1337
    %v1340 = vmul.f32 %v1330, %v1338
    %v1341 = vpack.c.bf16 %v1339, %v1339
    %v1342 = vpack.c.bf16 %v1340, %v1340
    %1344 = vrot.lane.b32.xlu0 %v1118, 96
    %v1345 = vpop.permute.xlu0 %1344
    %v1347 = vsel %vm1093, %v1341, 0
    %v1350 = vsel %vm1123, %v1345, 0
    %1352 = vmatprep.subr.bf16.mxu0 0
    %1353 = vmatpush1.bf16.msra.mxu0 %v1350
    %1354 = vmatprep.subr.bf16.mxu0 0
    %1355 = vmatpush1.bf16.msra.mxu0 0
    %1356 = vmatprep.subr.bf16.mxu0 0
    %1357 = vmatpush1.bf16.msra.mxu0 0
    %1358 = vmatprep.subr.bf16.mxu0 0
    %1359 = vmatpush1.bf16.msra.mxu0 0
    %1360 = vmatprep.subr.bf16.mxu0 0
    %1361 = vmatpush1.bf16.msra.mxu0 0
    %1362 = vmatprep.subr.bf16.mxu0 0
    %1363 = vmatpush1.bf16.msra.mxu0 0
    %1364 = vmatprep.subr.bf16.mxu0 0
    %1365 = vmatpush1.bf16.msra.mxu0 0
    %1366 = vmatprep.subr.bf16.mxu0 0
    %1367 = vmatpush1.bf16.msra.mxu0 0
    %1368 = vmatprep.subr.bf16.mxu0 0
    %1369 = vmatpush1.bf16.msra.mxu0 0
    %1370 = vmatprep.subr.bf16.mxu0 0
    %1371 = vmatpush1.bf16.msra.mxu0 0
    %1372 = vmatprep.subr.bf16.mxu0 0
    %1373 = vmatpush1.bf16.msra.mxu0 0
    %1374 = vmatprep.subr.bf16.mxu0 0
    %1375 = vmatpush1.bf16.msra.mxu0 0
    %1376 = vmatprep.subr.bf16.mxu0 0
    %1377 = vmatpush1.bf16.msra.mxu0 0
    %1378 = vmatprep.subr.bf16.mxu0 0
    %1379 = vmatpush1.bf16.msra.mxu0 0
    %1380 = vmatprep.subr.bf16.mxu0 0
    %1381 = vmatpush1.bf16.msra.mxu0 0
    %1382 = vmatprep.subr.bf16.mxu0 0
    %1383 = vmatpush1.bf16.msra.mxu0 0
    %1384 = vmatprep.mubr.bf16.mxu0 0
    %1385 = vmatmul.mubr.bf16.gmra.mrb[0].mxu0 %v1347
    %v1386 = vpop.f32.mrb[0].mxu0
    %v1387 = vadd.f32 0.0, %v1386
    %v1388 = vpop.f32.mrb[0].mxu0
    %v1389 = vpop.f32.mrb[0].mxu0
    %v1390 = vpop.f32.mrb[0].mxu0
    %1391 = vdwg.mxu0
    %1393 = vrot.lane.b32.xlu0 %v1119, 96
    %v1394 = vpop.permute.xlu0 %1393
    %v1396 = vsel %vm1093, %v1342, 0
    %v1399 = vsel %vm1123, %v1394, 0
    %1401 = vmatprep.subr.bf16.mxu0 0
    %1402 = vmatpush1.bf16.msra.mxu0 %v1399
    %1403 = vmatprep.subr.bf16.mxu0 0
    %1404 = vmatpush1.bf16.msra.mxu0 0
    %1405 = vmatprep.subr.bf16.mxu0 0
    %1406 = vmatpush1.bf16.msra.mxu0 0
    %1407 = vmatprep.subr.bf16.mxu0 0
    %1408 = vmatpush1.bf16.msra.mxu0 0
    %1409 = vmatprep.subr.bf16.mxu0 0
    %1410 = vmatpush1.bf16.msra.mxu0 0
    %1411 = vmatprep.subr.bf16.mxu0 0
    %1412 = vmatpush1.bf16.msra.mxu0 0
    %1413 = vmatprep.subr.bf16.mxu0 0
    %1414 = vmatpush1.bf16.msra.mxu0 0
    %1415 = vmatprep.subr.bf16.mxu0 0
    %1416 = vmatpush1.bf16.msra.mxu0 0
    %1417 = vmatprep.subr.bf16.mxu0 0
    %1418 = vmatpush1.bf16.msra.mxu0 0
    %1419 = vmatprep.subr.bf16.mxu0 0
    %1420 = vmatpush1.bf16.msra.mxu0 0
    %1421 = vmatprep.subr.bf16.mxu0 0
    %1422 = vmatpush1.bf16.msra.mxu0 0
    %1423 = vmatprep.subr.bf16.mxu0 0
    %1424 = vmatpush1.bf16.msra.mxu0 0
    %1425 = vmatprep.subr.bf16.mxu0 0
    %1426 = vmatpush1.bf16.msra.mxu0 0
    %1427 = vmatprep.subr.bf16.mxu0 0
    %1428 = vmatpush1.bf16.msra.mxu0 0
    %1429 = vmatprep.subr.bf16.mxu0 0
    %1430 = vmatpush1.bf16.msra.mxu0 0
    %1431 = vmatprep.subr.bf16.mxu0 0
    %1432 = vmatpush1.bf16.msra.mxu0 0
    %1433 = vmatprep.mubr.bf16.mxu0 0
    %1434 = vmatmul.mubr.bf16.gmra.mrb[0].mxu0 %v1396
    %v1435 = vpop.f32.mrb[0].mxu0
    %v1436 = vadd.f32 0.0, %v1435
    %v1437 = vpop.f32.mrb[0].mxu0
    %v1438 = vpop.f32.mrb[0].mxu0
    %v1439 = vpop.f32.mrb[0].mxu0
    %1440 = vdwg.mxu0
    %1441 = vrot.lane.b32.xlu0 %v994, 64
    %v1442 = vpop.permute.xlu0 %1441
    %1443 = vrot.lane.b32.xlu0 %v996, 64
    %v1444 = vpop.permute.xlu0 %1443
    %v1446 = vsel %vm998, %v1442, 0
    %v1449 = vsel %vm998, %v1444, 0
    %1451 = vmatprep.subr.bf16.mxu0 0
    %1452 = vmatpush1.bf16.xpose.msra.mxu0 %v1449
    %1453 = vmatprep.subr.bf16.mxu0 0
    %1454 = vmatpush1.bf16.xpose.msra.mxu0 0
    %1455 = vmatprep.subr.bf16.mxu0 0
    %1456 = vmatpush1.bf16.xpose.msra.mxu0 0
    %1457 = vmatprep.subr.bf16.mxu0 0
    %1458 = vmatpush1.bf16.xpose.msra.mxu0 0
    %1459 = vmatprep.subr.bf16.mxu0 0
    %1460 = vmatpush1.bf16.xpose.msra.mxu0 0
    %1461 = vmatprep.subr.bf16.mxu0 0
    %1462 = vmatpush1.bf16.xpose.msra.mxu0 0
    %1463 = vmatprep.subr.bf16.mxu0 0
    %1464 = vmatpush1.bf16.xpose.msra.mxu0 0
    %1465 = vmatprep.subr.bf16.mxu0 0
    %1466 = vmatpush1.bf16.xpose.msra.mxu0 0
    %1467 = vmatprep.subr.bf16.mxu0 0
    %1468 = vmatpush1.bf16.xpose.msra.mxu0 0
    %1469 = vmatprep.subr.bf16.mxu0 0
    %1470 = vmatpush1.bf16.xpose.msra.mxu0 0
    %1471 = vmatprep.subr.bf16.mxu0 0
    %1472 = vmatpush1.bf16.xpose.msra.mxu0 0
    %1473 = vmatprep.subr.bf16.mxu0 0
    %1474 = vmatpush1.bf16.xpose.msra.mxu0 0
    %1475 = vmatprep.subr.bf16.mxu0 0
    %1476 = vmatpush1.bf16.xpose.msra.mxu0 0
    %1477 = vmatprep.subr.bf16.mxu0 0
    %1478 = vmatpush1.bf16.xpose.msra.mxu0 0
    %1479 = vmatprep.subr.bf16.mxu0 0
    %1480 = vmatpush1.bf16.xpose.msra.mxu0 0
    %1481 = vmatprep.subr.bf16.mxu0 0
    %1482 = vmatpush1.bf16.xpose.msra.mxu0 0
    %1483 = vmatprep.mubr.bf16.mxu0 0
    %1484 = vmatmul.mubr.bf16.gmra.mrb[0].mxu0 %v1446
    %v1485 = vpop.f32.mrb[0].mxu0
    %v1486 = vadd.f32 0.0, %v1485
    %v1487 = vpop.f32.mrb[0].mxu0
    %v1488 = vpop.f32.mrb[0].mxu0
    %v1489 = vpop.f32.mrb[0].mxu0
    %1490 = vdwg.mxu0
    %1491 = vrot.lane.b32.xlu0 %v995, 64
    %v1492 = vpop.permute.xlu0 %1491
    %1493 = vrot.lane.b32.xlu0 %v997, 64
    %v1494 = vpop.permute.xlu0 %1493
    %v1496 = vsel %vm998, %v1492, 0
    %v1499 = vsel %vm998, %v1494, 0
    %1501 = vmatprep.subr.bf16.mxu0 0
    %1502 = vmatpush1.bf16.xpose.msra.mxu0 %v1499
    %1503 = vmatprep.subr.bf16.mxu0 0
    %1504 = vmatpush1.bf16.xpose.msra.mxu0 0
    %1505 = vmatprep.subr.bf16.mxu0 0
    %1506 = vmatpush1.bf16.xpose.msra.mxu0 0
    %1507 = vmatprep.subr.bf16.mxu0 0
    %1508 = vmatpush1.bf16.xpose.msra.mxu0 0
    %1509 = vmatprep.subr.bf16.mxu0 0
    %1510 = vmatpush1.bf16.xpose.msra.mxu0 0
    %1511 = vmatprep.subr.bf16.mxu0 0
    %1512 = vmatpush1.bf16.xpose.msra.mxu0 0
    %1513 = vmatprep.subr.bf16.mxu0 0
    %1514 = vmatpush1.bf16.xpose.msra.mxu0 0
    %1515 = vmatprep.subr.bf16.mxu0 0
    %1516 = vmatpush1.bf16.xpose.msra.mxu0 0
    %1517 = vmatprep.subr.bf16.mxu0 0
    %1518 = vmatpush1.bf16.xpose.msra.mxu0 0
    %1519 = vmatprep.subr.bf16.mxu0 0
    %1520 = vmatpush1.bf16.xpose.msra.mxu0 0
    %1521 = vmatprep.subr.bf16.mxu0 0
    %1522 = vmatpush1.bf16.xpose.msra.mxu0 0
    %1523 = vmatprep.subr.bf16.mxu0 0
    %1524 = vmatpush1.bf16.xpose.msra.mxu0 0
    %1525 = vmatprep.subr.bf16.mxu0 0
    %1526 = vmatpush1.bf16.xpose.msra.mxu0 0
    %1527 = vmatprep.subr.bf16.mxu0 0
    %1528 = vmatpush1.bf16.xpose.msra.mxu0 0
    %1529 = vmatprep.subr.bf16.mxu0 0
    %1530 = vmatpush1.bf16.xpose.msra.mxu0 0
    %1531 = vmatprep.subr.bf16.mxu0 0
    %1532 = vmatpush1.bf16.xpose.msra.mxu0 0
    %1533 = vmatprep.mubr.bf16.mxu0 0
    %1534 = vmatmul.mubr.bf16.gmra.mrb[0].mxu0 %v1496
    %v1535 = vpop.f32.mrb[0].mxu0
    %v1536 = vadd.f32 0.0, %v1535
    %v1537 = vpop.f32.mrb[0].mxu0
    %v1538 = vpop.f32.mrb[0].mxu0
    %v1539 = vpop.f32.mrb[0].mxu0
    %1540 = vdwg.mxu0
    %v1541 = vmul.f32 %v1486, 0.17677669
    %v1542 = vmul.f32 %v1536, 0.17677669
    %v1543 = vsel %vm1093, %v1541, -inf
    %1544 = vmax.xlane.f32.xlu0 %v1543
    %v1545 = vpop.xlane.xlu0 %1544
    %v1546 = vsel %vm1093, %v1542, -inf
    %1547 = vmax.xlane.f32.xlu0 %v1546
    %v1548 = vpop.xlane.xlu0 %1547
    %v1549 = vsub.f32 %v1541, %v1545
    %v1550 = vsub.f32 %v1542, %v1548
    %v1551 = vmul.f32 %v1549, 1.442695
    %v1552 = vpow.pop %v1551
    %v1553 = vmul.f32 %v1550, 1.442695
    %v1554 = vpow.pop %v1553
    %v1555 = vsel %vm1093, %v1552, 0.0
    %1556 = vadd.xlane.f32.xlu0 %v1555
    %v1557 = vpop.xlane.xlu0 %1556
    %v1558 = vsel %vm1093, %v1554, 0.0
    %1559 = vadd.xlane.f32.xlu0 %v1558
    %v1560 = vpop.xlane.xlu0 %1559
    %v1561 = vrcp.pop %v1557
    %v1562 = vrcp.pop %v1560
    %v1563 = vmul.f32 %v1552, %v1561
    %v1564 = vmul.f32 %v1554, %v1562
    %v1565 = vpack.c.bf16 %v1563, %v1563
    %v1566 = vpack.c.bf16 %v1564, %v1564
    %1567 = vrot.lane.b32.xlu0 %v1118, 64
    %v1568 = vpop.permute.xlu0 %1567
    %v1570 = vsel %vm1093, %v1565, 0
    %v1573 = vsel %vm1123, %v1568, 0
    %1575 = vmatprep.subr.bf16.mxu0 0
    %1576 = vmatpush1.bf16.msra.mxu0 %v1573
    %1577 = vmatprep.subr.bf16.mxu0 0
    %1578 = vmatpush1.bf16.msra.mxu0 0
    %1579 = vmatprep.subr.bf16.mxu0 0
    %1580 = vmatpush1.bf16.msra.mxu0 0
    %1581 = vmatprep.subr.bf16.mxu0 0
    %1582 = vmatpush1.bf16.msra.mxu0 0
    %1583 = vmatprep.subr.bf16.mxu0 0
    %1584 = vmatpush1.bf16.msra.mxu0 0
    %1585 = vmatprep.subr.bf16.mxu0 0
    %1586 = vmatpush1.bf16.msra.mxu0 0
    %1587 = vmatprep.subr.bf16.mxu0 0
    %1588 = vmatpush1.bf16.msra.mxu0 0
    %1589 = vmatprep.subr.bf16.mxu0 0
    %1590 = vmatpush1.bf16.msra.mxu0 0
    %1591 = vmatprep.subr.bf16.mxu0 0
    %1592 = vmatpush1.bf16.msra.mxu0 0
    %1593 = vmatprep.subr.bf16.mxu0 0
    %1594 = vmatpush1.bf16.msra.mxu0 0
    %1595 = vmatprep.subr.bf16.mxu0 0
    %1596 = vmatpush1.bf16.msra.mxu0 0
    %1597 = vmatprep.subr.bf16.mxu0 0
    %1598 = vmatpush1.bf16.msra.mxu0 0
    %1599 = vmatprep.subr.bf16.mxu0 0
    %1600 = vmatpush1.bf16.msra.mxu0 0
    %1601 = vmatprep.subr.bf16.mxu0 0
    %1602 = vmatpush1.bf16.msra.mxu0 0
    %1603 = vmatprep.subr.bf16.mxu0 0
    %1604 = vmatpush1.bf16.msra.mxu0 0
    %1605 = vmatprep.subr.bf16.mxu0 0
    %1606 = vmatpush1.bf16.msra.mxu0 0
    %1607 = vmatprep.mubr.bf16.mxu0 0
    %1608 = vmatmul.mubr.bf16.gmra.mrb[0].mxu0 %v1570
    %v1609 = vpop.f32.mrb[0].mxu0
    %v1610 = vadd.f32 0.0, %v1609
    %v1611 = vpop.f32.mrb[0].mxu0
    %v1612 = vpop.f32.mrb[0].mxu0
    %v1613 = vpop.f32.mrb[0].mxu0
    %1614 = vdwg.mxu0
    %1615 = vrot.lane.b32.xlu0 %v1119, 64
    %v1616 = vpop.permute.xlu0 %1615
    %v1618 = vsel %vm1093, %v1566, 0
    %v1621 = vsel %vm1123, %v1616, 0
    %1623 = vmatprep.subr.bf16.mxu0 0
    %1624 = vmatpush1.bf16.msra.mxu0 %v1621
    %1625 = vmatprep.subr.bf16.mxu0 0
    %1626 = vmatpush1.bf16.msra.mxu0 0
    %1627 = vmatprep.subr.bf16.mxu0 0
    %1628 = vmatpush1.bf16.msra.mxu0 0
    %1629 = vmatprep.subr.bf16.mxu0 0
    %1630 = vmatpush1.bf16.msra.mxu0 0
    %1631 = vmatprep.subr.bf16.mxu0 0
    %1632 = vmatpush1.bf16.msra.mxu0 0
    %1633 = vmatprep.subr.bf16.mxu0 0
    %1634 = vmatpush1.bf16.msra.mxu0 0
    %1635 = vmatprep.subr.bf16.mxu0 0
    %1636 = vmatpush1.bf16.msra.mxu0 0
    %1637 = vmatprep.subr.bf16.mxu0 0
    %1638 = vmatpush1.bf16.msra.mxu0 0
    %1639 = vmatprep.subr.bf16.mxu0 0
    %1640 = vmatpush1.bf16.msra.mxu0 0
    %1641 = vmatprep.subr.bf16.mxu0 0
    %1642 = vmatpush1.bf16.msra.mxu0 0
    %1643 = vmatprep.subr.bf16.mxu0 0
    %1644 = vmatpush1.bf16.msra.mxu0 0
    %1645 = vmatprep.subr.bf16.mxu0 0
    %1646 = vmatpush1.bf16.msra.mxu0 0
    %1647 = vmatprep.subr.bf16.mxu0 0
    %1648 = vmatpush1.bf16.msra.mxu0 0
    %1649 = vmatprep.subr.bf16.mxu0 0
    %1650 = vmatpush1.bf16.msra.mxu0 0
    %1651 = vmatprep.subr.bf16.mxu0 0
    %1652 = vmatpush1.bf16.msra.mxu0 0
    %1653 = vmatprep.subr.bf16.mxu0 0
    %1654 = vmatpush1.bf16.msra.mxu0 0
    %1655 = vmatprep.mubr.bf16.mxu0 0
    %1656 = vmatmul.mubr.bf16.gmra.mrb[0].mxu0 %v1618
    %v1657 = vpop.f32.mrb[0].mxu0
    %v1658 = vadd.f32 0.0, %v1657
    %v1659 = vpop.f32.mrb[0].mxu0
    %v1660 = vpop.f32.mrb[0].mxu0
    %v1661 = vpop.f32.mrb[0].mxu0
    %1662 = vdwg.mxu0
    %1663 = vrot.lane.b32.xlu0 %v994, 32
    %v1664 = vpop.permute.xlu0 %1663
    %1665 = vrot.lane.b32.xlu0 %v996, 32
    %v1666 = vpop.permute.xlu0 %1665
    %v1668 = vsel %vm998, %v1664, 0
    %v1671 = vsel %vm998, %v1666, 0
    %1673 = vmatprep.subr.bf16.mxu0 0
    %1674 = vmatpush1.bf16.xpose.msra.mxu0 %v1671
    %1675 = vmatprep.subr.bf16.mxu0 0
    %1676 = vmatpush1.bf16.xpose.msra.mxu0 0
    %1677 = vmatprep.subr.bf16.mxu0 0
    %1678 = vmatpush1.bf16.xpose.msra.mxu0 0
    %1679 = vmatprep.subr.bf16.mxu0 0
    %1680 = vmatpush1.bf16.xpose.msra.mxu0 0
    %1681 = vmatprep.subr.bf16.mxu0 0
    %1682 = vmatpush1.bf16.xpose.msra.mxu0 0
    %1683 = vmatprep.subr.bf16.mxu0 0
    %1684 = vmatpush1.bf16.xpose.msra.mxu0 0
    %1685 = vmatprep.subr.bf16.mxu0 0
    %1686 = vmatpush1.bf16.xpose.msra.mxu0 0
    %1687 = vmatprep.subr.bf16.mxu0 0
    %1688 = vmatpush1.bf16.xpose.msra.mxu0 0
    %1689 = vmatprep.subr.bf16.mxu0 0
    %1690 = vmatpush1.bf16.xpose.msra.mxu0 0
    %1691 = vmatprep.subr.bf16.mxu0 0
    %1692 = vmatpush1.bf16.xpose.msra.mxu0 0
    %1693 = vmatprep.subr.bf16.mxu0 0
    %1694 = vmatpush1.bf16.xpose.msra.mxu0 0
    %1695 = vmatprep.subr.bf16.mxu0 0
    %1696 = vmatpush1.bf16.xpose.msra.mxu0 0
    %1697 = vmatprep.subr.bf16.mxu0 0
    %1698 = vmatpush1.bf16.xpose.msra.mxu0 0
    %1699 = vmatprep.subr.bf16.mxu0 0
    %1700 = vmatpush1.bf16.xpose.msra.mxu0 0
    %1701 = vmatprep.subr.bf16.mxu0 0
    %1702 = vmatpush1.bf16.xpose.msra.mxu0 0
    %1703 = vmatprep.subr.bf16.mxu0 0
    %1704 = vmatpush1.bf16.xpose.msra.mxu0 0
    %1705 = vmatprep.mubr.bf16.mxu0 0
    %1706 = vmatmul.mubr.bf16.gmra.mrb[0].mxu0 %v1668
    %v1707 = vpop.f32.mrb[0].mxu0
    %v1708 = vadd.f32 0.0, %v1707
    %v1709 = vpop.f32.mrb[0].mxu0
    %v1710 = vpop.f32.mrb[0].mxu0
    %v1711 = vpop.f32.mrb[0].mxu0
    %1712 = vdwg.mxu0
    %1713 = vrot.lane.b32.xlu0 %v995, 32
    %v1714 = vpop.permute.xlu0 %1713
    %1715 = vrot.lane.b32.xlu0 %v997, 32
    %v1716 = vpop.permute.xlu0 %1715
    %v1718 = vsel %vm998, %v1714, 0
    %v1721 = vsel %vm998, %v1716, 0
    %1723 = vmatprep.subr.bf16.mxu0 0
    %1724 = vmatpush1.bf16.xpose.msra.mxu0 %v1721
    %1725 = vmatprep.subr.bf16.mxu0 0
    %1726 = vmatpush1.bf16.xpose.msra.mxu0 0
    %1727 = vmatprep.subr.bf16.mxu0 0
    %1728 = vmatpush1.bf16.xpose.msra.mxu0 0
    %1729 = vmatprep.subr.bf16.mxu0 0
    %1730 = vmatpush1.bf16.xpose.msra.mxu0 0
    %1731 = vmatprep.subr.bf16.mxu0 0
    %1732 = vmatpush1.bf16.xpose.msra.mxu0 0
    %1733 = vmatprep.subr.bf16.mxu0 0
    %1734 = vmatpush1.bf16.xpose.msra.mxu0 0
    %1735 = vmatprep.subr.bf16.mxu0 0
    %1736 = vmatpush1.bf16.xpose.msra.mxu0 0
    %1737 = vmatprep.subr.bf16.mxu0 0
    %1738 = vmatpush1.bf16.xpose.msra.mxu0 0
    %1739 = vmatprep.subr.bf16.mxu0 0
    %1740 = vmatpush1.bf16.xpose.msra.mxu0 0
    %1741 = vmatprep.subr.bf16.mxu0 0
    %1742 = vmatpush1.bf16.xpose.msra.mxu0 0
    %1743 = vmatprep.subr.bf16.mxu0 0
    %1744 = vmatpush1.bf16.xpose.msra.mxu0 0
    %1745 = vmatprep.subr.bf16.mxu0 0
    %1746 = vmatpush1.bf16.xpose.msra.mxu0 0
    %1747 = vmatprep.subr.bf16.mxu0 0
    %1748 = vmatpush1.bf16.xpose.msra.mxu0 0
    %1749 = vmatprep.subr.bf16.mxu0 0
    %1750 = vmatpush1.bf16.xpose.msra.mxu0 0
    %1751 = vmatprep.subr.bf16.mxu0 0
    %1752 = vmatpush1.bf16.xpose.msra.mxu0 0
    %1753 = vmatprep.subr.bf16.mxu0 0
    %1754 = vmatpush1.bf16.xpose.msra.mxu0 0
    %1755 = vmatprep.mubr.bf16.mxu0 0
    %1756 = vmatmul.mubr.bf16.gmra.mrb[0].mxu0 %v1718
    %v1757 = vpop.f32.mrb[0].mxu0
    %v1758 = vadd.f32 0.0, %v1757
    %v1759 = vpop.f32.mrb[0].mxu0
    %v1760 = vpop.f32.mrb[0].mxu0
    %v1761 = vpop.f32.mrb[0].mxu0
    %1762 = vdwg.mxu0
    %v1763 = vmul.f32 %v1708, 0.17677669
    %v1764 = vmul.f32 %v1758, 0.17677669
    %v1765 = vsel %vm1093, %v1763, -inf
    %1766 = vmax.xlane.f32.xlu0 %v1765
    %v1767 = vpop.xlane.xlu0 %1766
    %v1768 = vsel %vm1093, %v1764, -inf
    %1769 = vmax.xlane.f32.xlu0 %v1768
    %v1770 = vpop.xlane.xlu0 %1769
    %v1771 = vsub.f32 %v1763, %v1767
    %v1772 = vsub.f32 %v1764, %v1770
    %v1773 = vmul.f32 %v1771, 1.442695
    %v1774 = vpow.pop %v1773
    %v1775 = vmul.f32 %v1772, 1.442695
    %v1776 = vpow.pop %v1775
    %v1777 = vsel %vm1093, %v1774, 0.0
    %1778 = vadd.xlane.f32.xlu0 %v1777
    %v1779 = vpop.xlane.xlu0 %1778
    %v1780 = vsel %vm1093, %v1776, 0.0
    %1781 = vadd.xlane.f32.xlu0 %v1780
    %v1782 = vpop.xlane.xlu0 %1781
    %v1783 = vrcp.pop %v1779
    %v1784 = vrcp.pop %v1782
    %v1785 = vmul.f32 %v1774, %v1783
    %v1786 = vmul.f32 %v1776, %v1784
    %v1787 = vpack.c.bf16 %v1785, %v1785
    %v1788 = vpack.c.bf16 %v1786, %v1786
    %1789 = vrot.lane.b32.xlu0 %v1118, 32
    %v1790 = vpop.permute.xlu0 %1789
    %v1792 = vsel %vm1093, %v1787, 0
    %v1795 = vsel %vm1123, %v1790, 0
    %1797 = vmatprep.subr.bf16.mxu0 0
    %1798 = vmatpush1.bf16.msra.mxu0 %v1795
    %1799 = vmatprep.subr.bf16.mxu0 0
    %1800 = vmatpush1.bf16.msra.mxu0 0
    %1801 = vmatprep.subr.bf16.mxu0 0
    %1802 = vmatpush1.bf16.msra.mxu0 0
    %1803 = vmatprep.subr.bf16.mxu0 0
    %1804 = vmatpush1.bf16.msra.mxu0 0
    %1805 = vmatprep.subr.bf16.mxu0 0
    %1806 = vmatpush1.bf16.msra.mxu0 0
    %1807 = vmatprep.subr.bf16.mxu0 0
    %1808 = vmatpush1.bf16.msra.mxu0 0
    %1809 = vmatprep.subr.bf16.mxu0 0
    %1810 = vmatpush1.bf16.msra.mxu0 0
    %1811 = vmatprep.subr.bf16.mxu0 0
    %1812 = vmatpush1.bf16.msra.mxu0 0
    %1813 = vmatprep.subr.bf16.mxu0 0
    %1814 = vmatpush1.bf16.msra.mxu0 0
    %1815 = vmatprep.subr.bf16.mxu0 0
    %1816 = vmatpush1.bf16.msra.mxu0 0
    %1817 = vmatprep.subr.bf16.mxu0 0
    %1818 = vmatpush1.bf16.msra.mxu0 0
    %1819 = vmatprep.subr.bf16.mxu0 0
    %1820 = vmatpush1.bf16.msra.mxu0 0
    %1821 = vmatprep.subr.bf16.mxu0 0
    %1822 = vmatpush1.bf16.msra.mxu0 0
    %1823 = vmatprep.subr.bf16.mxu0 0
    %1824 = vmatpush1.bf16.msra.mxu0 0
    %1825 = vmatprep.subr.bf16.mxu0 0
    %1826 = vmatpush1.bf16.msra.mxu0 0
    %1827 = vmatprep.subr.bf16.mxu0 0
    %1828 = vmatpush1.bf16.msra.mxu0 0
    %1829 = vmatprep.mubr.bf16.mxu0 0
    %1830 = vmatmul.mubr.bf16.gmra.mrb[0].mxu0 %v1792
    %v1831 = vpop.f32.mrb[0].mxu0
    %v1832 = vadd.f32 0.0, %v1831
    %v1833 = vpop.f32.mrb[0].mxu0
    %v1834 = vpop.f32.mrb[0].mxu0
    %v1835 = vpop.f32.mrb[0].mxu0
    %1836 = vdwg.mxu0
    %1837 = vrot.lane.b32.xlu0 %v1119, 32
    %v1838 = vpop.permute.xlu0 %1837
    %v1840 = vsel %vm1093, %v1788, 0
    %v1843 = vsel %vm1123, %v1838, 0
    %1845 = vmatprep.subr.bf16.mxu0 0
    %1846 = vmatpush1.bf16.msra.mxu0 %v1843
    %1847 = vmatprep.subr.bf16.mxu0 0
    %1848 = vmatpush1.bf16.msra.mxu0 0
    %1849 = vmatprep.subr.bf16.mxu0 0
    %1850 = vmatpush1.bf16.msra.mxu0 0
    %1851 = vmatprep.subr.bf16.mxu0 0
    %1852 = vmatpush1.bf16.msra.mxu0 0
    %1853 = vmatprep.subr.bf16.mxu0 0
    %1854 = vmatpush1.bf16.msra.mxu0 0
    %1855 = vmatprep.subr.bf16.mxu0 0
    %1856 = vmatpush1.bf16.msra.mxu0 0
    %1857 = vmatprep.subr.bf16.mxu0 0
    %1858 = vmatpush1.bf16.msra.mxu0 0
    %1859 = vmatprep.subr.bf16.mxu0 0
    %1860 = vmatpush1.bf16.msra.mxu0 0
    %1861 = vmatprep.subr.bf16.mxu0 0
    %1862 = vmatpush1.bf16.msra.mxu0 0
    %1863 = vmatprep.subr.bf16.mxu0 0
    %1864 = vmatpush1.bf16.msra.mxu0 0
    %1865 = vmatprep.subr.bf16.mxu0 0
    %1866 = vmatpush1.bf16.msra.mxu0 0
    %1867 = vmatprep.subr.bf16.mxu0 0
    %1868 = vmatpush1.bf16.msra.mxu0 0
    %1869 = vmatprep.subr.bf16.mxu0 0
    %1870 = vmatpush1.bf16.msra.mxu0 0
    %1871 = vmatprep.subr.bf16.mxu0 0
    %1872 = vmatpush1.bf16.msra.mxu0 0
    %1873 = vmatprep.subr.bf16.mxu0 0
    %1874 = vmatpush1.bf16.msra.mxu0 0
    %1875 = vmatprep.subr.bf16.mxu0 0
    %1876 = vmatpush1.bf16.msra.mxu0 0
    %1877 = vmatprep.mubr.bf16.mxu0 0
    %1878 = vmatmul.mubr.bf16.gmra.mrb[0].mxu0 %v1840
    %v1879 = vpop.f32.mrb[0].mxu0
    %v1880 = vadd.f32 0.0, %v1879
    %v1881 = vpop.f32.mrb[0].mxu0
    %v1882 = vpop.f32.mrb[0].mxu0
    %v1883 = vpop.f32.mrb[0].mxu0
    %1884 = vdwg.mxu0
    %1887 = vrot.lane.b32.xlu0 %v1387, 32
    %v1888 = vpop.permute.xlu0 %1887
    %1889 = vrot.lane.b32.xlu0 %v1436, 32
    %v1890 = vpop.permute.xlu0 %1889
    %1895 = vrot.lane.b32.xlu0 %v1610, 64
    %v1896 = vpop.permute.xlu0 %1895
    %1897 = vrot.lane.b32.xlu0 %v1658, 64
    %v1898 = vpop.permute.xlu0 %1897
    %1903 = vrot.lane.b32.xlu0 %v1832, 96
    %v1904 = vpop.permute.xlu0 %1903
    %1905 = vrot.lane.b32.xlu0 %v1880, 96
    %v1906 = vpop.permute.xlu0 %1905
    %v1909 = vsel %vm998, %v1162, %v1888
    %v1910 = vsel %vm998, %v1208, %v1890
    %vm1911 = vcmask 523264
    %v1912 = vsel %vm1911, %v1909, %v1896
    %v1913 = vsel %vm1911, %v1910, %v1898
    %vm1914 = vcmask 785408
    %v1915 = vsel %vm1914, %v1912, %v1904
    %v1916 = vsel %vm1914, %v1913, %v1906
    %v1917 = vpack.c.bf16 %v1916, %v1915
    %v1919 = vlaneseq
    %v1920 = vshrl.u32 %v1919, 7
    %v1921 = vsub.s32 0, %v1920
    %v1922 = vrot.slane %v764, %v1921
    %v1940 = vunpack.c.l.b16 %v748
    %v1941 = vunpack.c.l.b16 %v749
    %v1942 = vunpack.c.l.b16 %v750
    %v1943 = vunpack.c.l.b16 %v751
    %v1944 = vunpack.c.l.b16 %v752
    %v1945 = vunpack.c.l.b16 %v753
    %v1946 = vunpack.c.l.b16 %v754
    %v1947 = vunpack.c.l.b16 %v755
    %v1948 = vunpack.c.l.b16 %v756
    %v1949 = vunpack.c.l.b16 %v757
    %v1950 = vunpack.c.l.b16 %v758
    %v1951 = vunpack.c.l.b16 %v759
    %v1952 = vunpack.c.l.b16 %v760
    %v1953 = vunpack.c.l.b16 %v761
    %v1954 = vunpack.c.l.b16 %v762
    %v1955 = vunpack.c.l.b16 %v763
    %v1956 = vpack.c.b16 %v1941, %v1940
    %v1957 = vpack.c.b16 %v1943, %v1942
    %v1958 = vpack.c.b16 %v1945, %v1944
    %v1959 = vpack.c.b16 %v1947, %v1946
    %v1960 = vpack.c.b16 %v1949, %v1948
    %v1961 = vpack.c.b16 %v1951, %v1950
    %v1962 = vpack.c.b16 %v1953, %v1952
    %v1963 = vpack.c.b16 %v1955, %v1954
    %1972 = vmatprep.subr.bf16.mxu0 0
    %1973 = vmatpush1.bf16.msra.mxu0 %v1956
    %1974 = vmatprep.subr.bf16.mxu0 0
    %1975 = vmatpush1.bf16.msra.mxu0 %v1957
    %1976 = vmatprep.subr.bf16.mxu0 0
    %1977 = vmatpush1.bf16.msra.mxu0 %v1958
    %1978 = vmatprep.subr.bf16.mxu0 0
    %1979 = vmatpush1.bf16.msra.mxu0 %v1959
    %1980 = vmatprep.subr.bf16.mxu0 0
    %1981 = vmatpush1.bf16.msra.mxu0 %v1960
    %1982 = vmatprep.subr.bf16.mxu0 0
    %1983 = vmatpush1.bf16.msra.mxu0 %v1961
    %1984 = vmatprep.subr.bf16.mxu0 0
    %1985 = vmatpush1.bf16.msra.mxu0 %v1962
    %1986 = vmatprep.subr.bf16.mxu0 0
    %1987 = vmatpush1.bf16.msra.mxu0 %v1963
    %1988 = vmatprep.subr.bf16.mxu0 0
    %1989 = vmatpush1.bf16.msra.mxu0 0
    %1990 = vmatprep.subr.bf16.mxu0 0
    %1991 = vmatpush1.bf16.msra.mxu0 0
    %1992 = vmatprep.subr.bf16.mxu0 0
    %1993 = vmatpush1.bf16.msra.mxu0 0
    %1994 = vmatprep.subr.bf16.mxu0 0
    %1995 = vmatpush1.bf16.msra.mxu0 0
    %1996 = vmatprep.subr.bf16.mxu0 0
    %1997 = vmatpush1.bf16.msra.mxu0 0
    %1998 = vmatprep.subr.bf16.mxu0 0
    %1999 = vmatpush1.bf16.msra.mxu0 0
    %2000 = vmatprep.subr.bf16.mxu0 0
    %2001 = vmatpush1.bf16.msra.mxu0 0
    %2002 = vmatprep.subr.bf16.mxu0 0
    %2003 = vmatpush1.bf16.msra.mxu0 0
    %2004 = vmatprep.mubr.bf16.mxu0 0
    %2005 = vmatmul.mubr.bf16.gmra.mrb[0].mxu0 %v1917
    %v2006 = vpop.f32.mrb[0].mxu0
    %v2007 = vadd.f32 %v1922, %v2006
    %v2008 = vpop.f32.mrb[0].mxu0
    %v2009 = vpop.f32.mrb[0].mxu0
    %v2010 = vadd.f32 %v1922, %v2009
    %v2011 = vpop.f32.mrb[0].mxu0
    %2012 = vdwg.mxu0
    %v2013 = vld [vmem:[%s11] sm:$0x1]
    %v2014 = vld [vmem:[%s12] sm:$0x1]
    %v2015 = vadd.f32 %v709, %v2007
    %v2016 = vadd.f32 %v712, %v2010
    %2017 = vadd.xlane.f32.xlu0 %v2015
    %v2018 = vpop.xlane.xlu0 %2017
    %2019 = vadd.xlane.f32.xlu0 %v2016
    %v2020 = vpop.xlane.xlu0 %2019
    %v2021 = vrcp.pop 128.0
    %v2022 = vmul.f32 %v2018, %v2021
    %v2023 = vmul.f32 %v2020, %v2021
    %v2024 = vsub.f32 %v2015, %v2022
    %v2025 = vsub.f32 %v2016, %v2023
    %v2026 = vmul.f32 %v2024, %v2024
    %v2027 = vmul.f32 %v2025, %v2025
    %2028 = vadd.xlane.f32.xlu0 %v2026
    %v2029 = vpop.xlane.xlu0 %2028
    %2030 = vadd.xlane.f32.xlu0 %v2027
    %v2031 = vpop.xlane.xlu0 %2030
    %v2032 = vmul.f32 %v2029, %v2021
    %v2033 = vmul.f32 %v2031, %v2021
    %v2034 = vadd.f32 %v2032, 1e-05
    %v2035 = vadd.f32 %v2033, 1e-05
    %v2036 = vrsqrt.pop %v2034
    %v2037 = vrsqrt.pop %v2035
    %v2038 = vmul.f32 %v2024, %v2036
    %v2039 = vmul.f32 %v2025, %v2037
    %v2041 = vlaneseq
    %v2042 = vshrl.u32 %v2041, 7
    %v2043 = vsub.s32 0, %v2042
    %v2044 = vrot.slane %v2013, %v2043
    %v2046 = vmul.f32 %v2038, %v2044
    %v2047 = vmul.f32 %v2039, %v2044
    %v2049 = vlaneseq
    %v2050 = vshrl.u32 %v2049, 7
    %v2051 = vsub.s32 0, %v2050
    %v2052 = vrot.slane %v2014, %v2051
    %v2054 = vadd.f32 %v2046, %v2052
    %v2055 = vadd.f32 %v2047, %v2052
    %v2056 = vld [vmem:[#allocation11] sm:$0xff]
    %v2057 = vld [vmem:[#allocation11 + $0x8] sm:$0xff]
    %v2058 = vld [vmem:[#allocation11 + $0x10] sm:$0xff]
    %v2059 = vld [vmem:[#allocation11 + $0x18] sm:$0xff]
    %v2060 = vld [vmem:[#allocation11 + $0x20] sm:$0xff]
    %v2061 = vld [vmem:[#allocation11 + $0x28] sm:$0xff]
    %v2062 = vld [vmem:[#allocation11 + $0x30] sm:$0xff]
    %v2063 = vld [vmem:[#allocation11 + $0x38] sm:$0xff]
    %v2064 = vld [vmem:[#allocation11 + $0x40] sm:$0xff]
    %v2065 = vld [vmem:[#allocation11 + $0x48] sm:$0xff]
    %v2066 = vld [vmem:[#allocation11 + $0x50] sm:$0xff]
    %v2067 = vld [vmem:[#allocation11 + $0x58] sm:$0xff]
    %v2068 = vld [vmem:[#allocation11 + $0x60] sm:$0xff]
    %v2069 = vld [vmem:[#allocation11 + $0x68] sm:$0xff]
    %v2070 = vld [vmem:[#allocation11 + $0x70] sm:$0xff]
    %v2071 = vld [vmem:[#allocation11 + $0x78] sm:$0xff]
    %v2072 = vld [vmem:[#allocation11 + $0x80] sm:$0xff]
    %v2073 = vld [vmem:[#allocation11 + $0x88] sm:$0xff]
    %v2074 = vld [vmem:[#allocation11 + $0x90] sm:$0xff]
    %v2075 = vld [vmem:[#allocation11 + $0x98] sm:$0xff]
    %v2076 = vld [vmem:[#allocation11 + $0xa0] sm:$0xff]
    %v2077 = vld [vmem:[#allocation11 + $0xa8] sm:$0xff]
    %v2078 = vld [vmem:[#allocation11 + $0xb0] sm:$0xff]
    %v2079 = vld [vmem:[#allocation11 + $0xb8] sm:$0xff]
    %v2080 = vld [vmem:[#allocation11 + $0xc0] sm:$0xff]
    %v2081 = vld [vmem:[#allocation11 + $0xc8] sm:$0xff]
    %v2082 = vld [vmem:[#allocation11 + $0xd0] sm:$0xff]
    %v2083 = vld [vmem:[#allocation11 + $0xd8] sm:$0xff]
    %v2084 = vld [vmem:[#allocation11 + $0xe0] sm:$0xff]
    %v2085 = vld [vmem:[#allocation11 + $0xe8] sm:$0xff]
    %v2086 = vld [vmem:[#allocation11 + $0xf0] sm:$0xff]
    %v2087 = vld [vmem:[#allocation11 + $0xf8] sm:$0xff]
    %v2088 = vpack.c.bf16 %v2055, %v2054
    %v2089 = vld [vmem:[%s8] sm:$0xf]
    %v2091 = vlaneseq
    %v2092 = vshrl.u32 %v2091, 7
    %v2093 = vsub.s32 0, %v2092
    %v2094 = vrot.slane %v2089, %v2093
    %v2095 = vlaneseq
    %v2096 = vshrl.u32 %v2095, 7
    %v2097 = vsub.s32 1, %v2096
    %v2098 = vrot.slane %v2089, %v2097
    %v2099 = vlaneseq
    %v2100 = vshrl.u32 %v2099, 7
    %v2101 = vsub.s32 2, %v2100
    %v2102 = vrot.slane %v2089, %v2101
    %v2103 = vlaneseq
    %v2104 = vshrl.u32 %v2103, 7
    %v2105 = vsub.s32 3, %v2104
    %v2106 = vrot.slane %v2089, %v2105
    %v2143 = vunpack.c.l.b16 %v2056
    %v2144 = vunpack.c.h.b16 %v2056
    %v2145 = vunpack.c.l.b16 %v2057
    %v2146 = vunpack.c.h.b16 %v2057
    %v2147 = vunpack.c.l.b16 %v2058
    %v2148 = vunpack.c.h.b16 %v2058
    %v2149 = vunpack.c.l.b16 %v2059
    %v2150 = vunpack.c.h.b16 %v2059
    %v2151 = vunpack.c.l.b16 %v2060
    %v2152 = vunpack.c.h.b16 %v2060
    %v2153 = vunpack.c.l.b16 %v2061
    %v2154 = vunpack.c.h.b16 %v2061
    %v2155 = vunpack.c.l.b16 %v2062
    %v2156 = vunpack.c.h.b16 %v2062
    %v2157 = vunpack.c.l.b16 %v2063
    %v2158 = vunpack.c.h.b16 %v2063
    %v2159 = vunpack.c.l.b16 %v2064
    %v2160 = vunpack.c.h.b16 %v2064
    %v2161 = vunpack.c.l.b16 %v2065
    %v2162 = vunpack.c.h.b16 %v2065
    %v2163 = vunpack.c.l.b16 %v2066
    %v2164 = vunpack.c.h.b16 %v2066
    %v2165 = vunpack.c.l.b16 %v2067
    %v2166 = vunpack.c.h.b16 %v2067
    %v2167 = vunpack.c.l.b16 %v2068
    %v2168 = vunpack.c.h.b16 %v2068
    %v2169 = vunpack.c.l.b16 %v2069
    %v2170 = vunpack.c.h.b16 %v2069
    %v2171 = vunpack.c.l.b16 %v2070
    %v2172 = vunpack.c.h.b16 %v2070
    %v2173 = vunpack.c.l.b16 %v2071
    %v2174 = vunpack.c.h.b16 %v2071
    %v2175 = vunpack.c.l.b16 %v2072
    %v2176 = vunpack.c.h.b16 %v2072
    %v2177 = vunpack.c.l.b16 %v2073
    %v2178 = vunpack.c.h.b16 %v2073
    %v2179 = vunpack.c.l.b16 %v2074
    %v2180 = vunpack.c.h.b16 %v2074
    %v2181 = vunpack.c.l.b16 %v2075
    %v2182 = vunpack.c.h.b16 %v2075
    %v2183 = vunpack.c.l.b16 %v2076
    %v2184 = vunpack.c.h.b16 %v2076
    %v2185 = vunpack.c.l.b16 %v2077
    %v2186 = vunpack.c.h.b16 %v2077
    %v2187 = vunpack.c.l.b16 %v2078
    %v2188 = vunpack.c.h.b16 %v2078
    %v2189 = vunpack.c.l.b16 %v2079
    %v2190 = vunpack.c.h.b16 %v2079
    %v2191 = vunpack.c.l.b16 %v2080
    %v2192 = vunpack.c.h.b16 %v2080
    %v2193 = vunpack.c.l.b16 %v2081
    %v2194 = vunpack.c.h.b16 %v2081
    %v2195 = vunpack.c.l.b16 %v2082
    %v2196 = vunpack.c.h.b16 %v2082
    %v2197 = vunpack.c.l.b16 %v2083
    %v2198 = vunpack.c.h.b16 %v2083
    %v2199 = vunpack.c.l.b16 %v2084
    %v2200 = vunpack.c.h.b16 %v2084
    %v2201 = vunpack.c.l.b16 %v2085
    %v2202 = vunpack.c.h.b16 %v2085
    %v2203 = vunpack.c.l.b16 %v2086
    %v2204 = vunpack.c.h.b16 %v2086
    %v2205 = vunpack.c.l.b16 %v2087
    %v2206 = vunpack.c.h.b16 %v2087
    %v2207 = vpack.c.b16 %v2147, %v2143
    %v2208 = vpack.c.b16 %v2148, %v2144
    %v2209 = vpack.c.b16 %v2149, %v2145
    %v2210 = vpack.c.b16 %v2150, %v2146
    %v2211 = vpack.c.b16 %v2155, %v2151
    %v2212 = vpack.c.b16 %v2156, %v2152
    %v2213 = vpack.c.b16 %v2157, %v2153
    %v2214 = vpack.c.b16 %v2158, %v2154
    %v2215 = vpack.c.b16 %v2163, %v2159
    %v2216 = vpack.c.b16 %v2164, %v2160
    %v2217 = vpack.c.b16 %v2165, %v2161
    %v2218 = vpack.c.b16 %v2166, %v2162
    %v2219 = vpack.c.b16 %v2171, %v2167
    %v2220 = vpack.c.b16 %v2172, %v2168
    %v2221 = vpack.c.b16 %v2173, %v2169
    %v2222 = vpack.c.b16 %v2174, %v2170
    %v2223 = vpack.c.b16 %v2179, %v2175
    %v2224 = vpack.c.b16 %v2180, %v2176
    %v2225 = vpack.c.b16 %v2181, %v2177
    %v2226 = vpack.c.b16 %v2182, %v2178
    %v2227 = vpack.c.b16 %v2187, %v2183
    %v2228 = vpack.c.b16 %v2188, %v2184
    %v2229 = vpack.c.b16 %v2189, %v2185
    %v2230 = vpack.c.b16 %v2190, %v2186
    %v2231 = vpack.c.b16 %v2195, %v2191
    %v2232 = vpack.c.b16 %v2196, %v2192
    %v2233 = vpack.c.b16 %v2197, %v2193
    %v2234 = vpack.c.b16 %v2198, %v2194
    %v2235 = vpack.c.b16 %v2203, %v2199
    %v2236 = vpack.c.b16 %v2204, %v2200
    %v2237 = vpack.c.b16 %v2205, %v2201
    %v2238 = vpack.c.b16 %v2206, %v2202
    %2271 = vmatprep.subr.bf16.mxu0 %v2208
    %2272 = vmatpush1.bf16.msra.mxu0 %v2207
    %2273 = vmatprep.subr.bf16.mxu0 %v2212
    %2274 = vmatpush1.bf16.msra.mxu0 %v2211
    %2275 = vmatprep.subr.bf16.mxu0 %v2216
    %2276 = vmatpush1.bf16.msra.mxu0 %v2215
    %2277 = vmatprep.subr.bf16.mxu0 %v2220
    %2278 = vmatpush1.bf16.msra.mxu0 %v2219
    %2279 = vmatprep.subr.bf16.mxu0 %v2224
    %2280 = vmatpush1.bf16.msra.mxu0 %v2223
    %2281 = vmatprep.subr.bf16.mxu0 %v2228
    %2282 = vmatpush1.bf16.msra.mxu0 %v2227
    %2283 = vmatprep.subr.bf16.mxu0 %v2232
    %2284 = vmatpush1.bf16.msra.mxu0 %v2231
    %2285 = vmatprep.subr.bf16.mxu0 %v2236
    %2286 = vmatpush1.bf16.msra.mxu0 %v2235
    %2287 = vmatprep.subr.bf16.mxu0 0
    %2288 = vmatpush1.bf16.msra.mxu0 0
    %2289 = vmatprep.subr.bf16.mxu0 0
    %2290 = vmatpush1.bf16.msra.mxu0 0
    %2291 = vmatprep.subr.bf16.mxu0 0
    %2292 = vmatpush1.bf16.msra.mxu0 0
    %2293 = vmatprep.subr.bf16.mxu0 0
    %2294 = vmatpush1.bf16.msra.mxu0 0
    %2295 = vmatprep.subr.bf16.mxu0 0
    %2296 = vmatpush1.bf16.msra.mxu0 0
    %2297 = vmatprep.subr.bf16.mxu0 0
    %2298 = vmatpush1.bf16.msra.mxu0 0
    %2299 = vmatprep.subr.bf16.mxu0 0
    %2300 = vmatpush1.bf16.msra.mxu0 0
    %2301 = vmatprep.subr.bf16.mxu0 0
    %2302 = vmatpush1.bf16.msra.mxu0 0
    %2303 = vmatprep.mubr.bf16.mxu0 0
    %2304 = vmatmul.mubr.bf16.gmra.mrb[0].mxu0 %v2088
    %v2305 = vpop.f32.mrb[0].mxu0
    %v2306 = vadd.f32 %v2094, %v2305
    %v2307 = vpop.f32.mrb[0].mxu0
    %v2308 = vadd.f32 %v2098, %v2307
    %v2309 = vpop.f32.mrb[0].mxu0
    %v2310 = vadd.f32 %v2094, %v2309
    %v2311 = vpop.f32.mrb[0].mxu0
    %v2312 = vadd.f32 %v2098, %v2311
    %2313 = vdwg.mxu0
    %2314 = vmatprep.subr.bf16.mxu0 %v2210
    %2315 = vmatpush1.bf16.msra.mxu0 %v2209
    %2316 = vmatprep.subr.bf16.mxu0 %v2214
    %2317 = vmatpush1.bf16.msra.mxu0 %v2213
    %2318 = vmatprep.subr.bf16.mxu0 %v2218
    %2319 = vmatpush1.bf16.msra.mxu0 %v2217
    %2320 = vmatprep.subr.bf16.mxu0 %v2222
    %2321 = vmatpush1.bf16.msra.mxu0 %v2221
    %2322 = vmatprep.subr.bf16.mxu0 %v2226
    %2323 = vmatpush1.bf16.msra.mxu0 %v2225
    %2324 = vmatprep.subr.bf16.mxu0 %v2230
    %2325 = vmatpush1.bf16.msra.mxu0 %v2229
    %2326 = vmatprep.subr.bf16.mxu0 %v2234
    %2327 = vmatpush1.bf16.msra.mxu0 %v2233
    %2328 = vmatprep.subr.bf16.mxu0 %v2238
    %2329 = vmatpush1.bf16.msra.mxu0 %v2237
    %2330 = vmatprep.subr.bf16.mxu0 0
    %2331 = vmatpush1.bf16.msra.mxu0 0
    %2332 = vmatprep.subr.bf16.mxu0 0
    %2333 = vmatpush1.bf16.msra.mxu0 0
    %2334 = vmatprep.subr.bf16.mxu0 0
    %2335 = vmatpush1.bf16.msra.mxu0 0
    %2336 = vmatprep.subr.bf16.mxu0 0
    %2337 = vmatpush1.bf16.msra.mxu0 0
    %2338 = vmatprep.subr.bf16.mxu0 0
    %2339 = vmatpush1.bf16.msra.mxu0 0
    %2340 = vmatprep.subr.bf16.mxu0 0
    %2341 = vmatpush1.bf16.msra.mxu0 0
    %2342 = vmatprep.subr.bf16.mxu0 0
    %2343 = vmatpush1.bf16.msra.mxu0 0
    %2344 = vmatprep.subr.bf16.mxu0 0
    %2345 = vmatpush1.bf16.msra.mxu0 0
    %2346 = vmatprep.mubr.bf16.mxu0 0
    %2347 = vmatmul.mubr.bf16.gmra.mrb[0].mxu0 %v2088
    %v2348 = vpop.f32.mrb[0].mxu0
    %v2349 = vadd.f32 %v2102, %v2348
    %v2350 = vpop.f32.mrb[0].mxu0
    %v2351 = vadd.f32 %v2106, %v2350
    %v2352 = vpop.f32.mrb[0].mxu0
    %v2353 = vadd.f32 %v2102, %v2352
    %v2354 = vpop.f32.mrb[0].mxu0
    %v2355 = vadd.f32 %v2106, %v2354
    %2356 = vdwg.mxu0
    %v2357 = vmax.f32 %v2306, 0.0
    %v2358 = vmax.f32 %v2308, 0.0
    %v2359 = vmax.f32 %v2349, 0.0
    %v2360 = vmax.f32 %v2351, 0.0
    %v2361 = vmax.f32 %v2310, 0.0
    %v2362 = vmax.f32 %v2312, 0.0
    %v2363 = vmax.f32 %v2353, 0.0
    %v2364 = vmax.f32 %v2355, 0.0
    %v2365 = vld [vmem:[#allocation13] sm:$0xf]
    %v2366 = vld [vmem:[#allocation13 + $0x4] sm:$0xf]
    %v2367 = vld [vmem:[#allocation13 + $0x8] sm:$0xf]
    %v2368 = vld [vmem:[#allocation13 + $0xc] sm:$0xf]
    %v2369 = vld [vmem:[#allocation13 + $0x10] sm:$0xf]
    %v2370 = vld [vmem:[#allocation13 + $0x14] sm:$0xf]
    %v2371 = vld [vmem:[#allocation13 + $0x18] sm:$0xf]
    %v2372 = vld [vmem:[#allocation13 + $0x1c] sm:$0xf]
    %v2373 = vld [vmem:[#allocation13 + $0x20] sm:$0xf]
    %v2374 = vld [vmem:[#allocation13 + $0x24] sm:$0xf]
    %v2375 = vld [vmem:[#allocation13 + $0x28] sm:$0xf]
    %v2376 = vld [vmem:[#allocation13 + $0x2c] sm:$0xf]
    %v2377 = vld [vmem:[#allocation13 + $0x30] sm:$0xf]
    %v2378 = vld [vmem:[#allocation13 + $0x34] sm:$0xf]
    %v2379 = vld [vmem:[#allocation13 + $0x38] sm:$0xf]
    %v2380 = vld [vmem:[#allocation13 + $0x3c] sm:$0xf]
    %v2381 = vld [vmem:[#allocation13 + $0x40] sm:$0xf]
    %v2382 = vld [vmem:[#allocation13 + $0x44] sm:$0xf]
    %v2383 = vld [vmem:[#allocation13 + $0x48] sm:$0xf]
    %v2384 = vld [vmem:[#allocation13 + $0x4c] sm:$0xf]
    %v2385 = vld [vmem:[#allocation13 + $0x50] sm:$0xf]
    %v2386 = vld [vmem:[#allocation13 + $0x54] sm:$0xf]
    %v2387 = vld [vmem:[#allocation13 + $0x58] sm:$0xf]
    %v2388 = vld [vmem:[#allocation13 + $0x5c] sm:$0xf]
    %v2389 = vld [vmem:[#allocation13 + $0x60] sm:$0xf]
    %v2390 = vld [vmem:[#allocation13 + $0x64] sm:$0xf]
    %v2391 = vld [vmem:[#allocation13 + $0x68] sm:$0xf]
    %v2392 = vld [vmem:[#allocation13 + $0x6c] sm:$0xf]
    %v2393 = vld [vmem:[#allocation13 + $0x70] sm:$0xf]
    %v2394 = vld [vmem:[#allocation13 + $0x74] sm:$0xf]
    %v2395 = vld [vmem:[#allocation13 + $0x78] sm:$0xf]
    %v2396 = vld [vmem:[#allocation13 + $0x7c] sm:$0xf]
    %v2397 = vld [vmem:[#allocation13 + $0x80] sm:$0xf]
    %v2398 = vld [vmem:[#allocation13 + $0x84] sm:$0xf]
    %v2399 = vld [vmem:[#allocation13 + $0x88] sm:$0xf]
    %v2400 = vld [vmem:[#allocation13 + $0x8c] sm:$0xf]
    %v2401 = vld [vmem:[#allocation13 + $0x90] sm:$0xf]
    %v2402 = vld [vmem:[#allocation13 + $0x94] sm:$0xf]
    %v2403 = vld [vmem:[#allocation13 + $0x98] sm:$0xf]
    %v2404 = vld [vmem:[#allocation13 + $0x9c] sm:$0xf]
    %v2405 = vld [vmem:[#allocation13 + $0xa0] sm:$0xf]
    %v2406 = vld [vmem:[#allocation13 + $0xa4] sm:$0xf]
    %v2407 = vld [vmem:[#allocation13 + $0xa8] sm:$0xf]
    %v2408 = vld [vmem:[#allocation13 + $0xac] sm:$0xf]
    %v2409 = vld [vmem:[#allocation13 + $0xb0] sm:$0xf]
    %v2410 = vld [vmem:[#allocation13 + $0xb4] sm:$0xf]
    %v2411 = vld [vmem:[#allocation13 + $0xb8] sm:$0xf]
    %v2412 = vld [vmem:[#allocation13 + $0xbc] sm:$0xf]
    %v2413 = vld [vmem:[#allocation13 + $0xc0] sm:$0xf]
    %v2414 = vld [vmem:[#allocation13 + $0xc4] sm:$0xf]
    %v2415 = vld [vmem:[#allocation13 + $0xc8] sm:$0xf]
    %v2416 = vld [vmem:[#allocation13 + $0xcc] sm:$0xf]
    %v2417 = vld [vmem:[#allocation13 + $0xd0] sm:$0xf]
    %v2418 = vld [vmem:[#allocation13 + $0xd4] sm:$0xf]
    %v2419 = vld [vmem:[#allocation13 + $0xd8] sm:$0xf]
    %v2420 = vld [vmem:[#allocation13 + $0xdc] sm:$0xf]
    %v2421 = vld [vmem:[#allocation13 + $0xe0] sm:$0xf]
    %v2422 = vld [vmem:[#allocation13 + $0xe4] sm:$0xf]
    %v2423 = vld [vmem:[#allocation13 + $0xe8] sm:$0xf]
    %v2424 = vld [vmem:[#allocation13 + $0xec] sm:$0xf]
    %v2425 = vld [vmem:[#allocation13 + $0xf0] sm:$0xf]
    %v2426 = vld [vmem:[#allocation13 + $0xf4] sm:$0xf]
    %v2427 = vld [vmem:[#allocation13 + $0xf8] sm:$0xf]
    %v2428 = vld [vmem:[#allocation13 + $0xfc] sm:$0xf]
    %v2429 = vpack.c.bf16 %v2361, %v2357
    %v2430 = vpack.c.bf16 %v2362, %v2358
    %v2431 = vpack.c.bf16 %v2363, %v2359
    %v2432 = vpack.c.bf16 %v2364, %v2360
    %v2433 = vld [vmem:[%s10] sm:$0x1]
    %v2435 = vlaneseq
    %v2436 = vshrl.u32 %v2435, 7
    %v2437 = vsub.s32 0, %v2436
    %v2438 = vrot.slane %v2433, %v2437
    %v2504 = vunpack.c.l.b16 %v2365
    %v2505 = vunpack.c.l.b16 %v2366
    %v2506 = vunpack.c.l.b16 %v2367
    %v2507 = vunpack.c.l.b16 %v2368
    %v2508 = vunpack.c.l.b16 %v2369
    %v2509 = vunpack.c.l.b16 %v2370
    %v2510 = vunpack.c.l.b16 %v2371
    %v2511 = vunpack.c.l.b16 %v2372
    %v2512 = vunpack.c.l.b16 %v2373
    %v2513 = vunpack.c.l.b16 %v2374
    %v2514 = vunpack.c.l.b16 %v2375
    %v2515 = vunpack.c.l.b16 %v2376
    %v2516 = vunpack.c.l.b16 %v2377
    %v2517 = vunpack.c.l.b16 %v2378
    %v2518 = vunpack.c.l.b16 %v2379
    %v2519 = vunpack.c.l.b16 %v2380
    %v2520 = vunpack.c.l.b16 %v2381
    %v2521 = vunpack.c.l.b16 %v2382
    %v2522 = vunpack.c.l.b16 %v2383
    %v2523 = vunpack.c.l.b16 %v2384
    %v2524 = vunpack.c.l.b16 %v2385
    %v2525 = vunpack.c.l.b16 %v2386
    %v2526 = vunpack.c.l.b16 %v2387
    %v2527 = vunpack.c.l.b16 %v2388
    %v2528 = vunpack.c.l.b16 %v2389
    %v2529 = vunpack.c.l.b16 %v2390
    %v2530 = vunpack.c.l.b16 %v2391
    %v2531 = vunpack.c.l.b16 %v2392
    %v2532 = vunpack.c.l.b16 %v2393
    %v2533 = vunpack.c.l.b16 %v2394
    %v2534 = vunpack.c.l.b16 %v2395
    %v2535 = vunpack.c.l.b16 %v2396
    %v2536 = vunpack.c.l.b16 %v2397
    %v2537 = vunpack.c.l.b16 %v2398
    %v2538 = vunpack.c.l.b16 %v2399
    %v2539 = vunpack.c.l.b16 %v2400
    %v2540 = vunpack.c.l.b16 %v2401
    %v2541 = vunpack.c.l.b16 %v2402
    %v2542 = vunpack.c.l.b16 %v2403
    %v2543 = vunpack.c.l.b16 %v2404
    %v2544 = vunpack.c.l.b16 %v2405
    %v2545 = vunpack.c.l.b16 %v2406
    %v2546 = vunpack.c.l.b16 %v2407
    %v2547 = vunpack.c.l.b16 %v2408
    %v2548 = vunpack.c.l.b16 %v2409
    %v2549 = vunpack.c.l.b16 %v2410
    %v2550 = vunpack.c.l.b16 %v2411
    %v2551 = vunpack.c.l.b16 %v2412
    %v2552 = vunpack.c.l.b16 %v2413
    %v2553 = vunpack.c.l.b16 %v2414
    %v2554 = vunpack.c.l.b16 %v2415
    %v2555 = vunpack.c.l.b16 %v2416
    %v2556 = vunpack.c.l.b16 %v2417
    %v2557 = vunpack.c.l.b16 %v2418
    %v2558 = vunpack.c.l.b16 %v2419
    %v2559 = vunpack.c.l.b16 %v2420
    %v2560 = vunpack.c.l.b16 %v2421
    %v2561 = vunpack.c.l.b16 %v2422
    %v2562 = vunpack.c.l.b16 %v2423
    %v2563 = vunpack.c.l.b16 %v2424
    %v2564 = vunpack.c.l.b16 %v2425
    %v2565 = vunpack.c.l.b16 %v2426
    %v2566 = vunpack.c.l.b16 %v2427
    %v2567 = vunpack.c.l.b16 %v2428
    %v2568 = vpack.c.b16 %v2505, %v2504
    %v2569 = vpack.c.b16 %v2507, %v2506
    %v2570 = vpack.c.b16 %v2509, %v2508
    %v2571 = vpack.c.b16 %v2511, %v2510
    %v2572 = vpack.c.b16 %v2513, %v2512
    %v2573 = vpack.c.b16 %v2515, %v2514
    %v2574 = vpack.c.b16 %v2517, %v2516
    %v2575 = vpack.c.b16 %v2519, %v2518
    %v2576 = vpack.c.b16 %v2521, %v2520
    %v2577 = vpack.c.b16 %v2523, %v2522
    %v2578 = vpack.c.b16 %v2525, %v2524
    %v2579 = vpack.c.b16 %v2527, %v2526
    %v2580 = vpack.c.b16 %v2529, %v2528
    %v2581 = vpack.c.b16 %v2531, %v2530
    %v2582 = vpack.c.b16 %v2533, %v2532
    %v2583 = vpack.c.b16 %v2535, %v2534
    %v2584 = vpack.c.b16 %v2537, %v2536
    %v2585 = vpack.c.b16 %v2539, %v2538
    %v2586 = vpack.c.b16 %v2541, %v2540
    %v2587 = vpack.c.b16 %v2543, %v2542
    %v2588 = vpack.c.b16 %v2545, %v2544
    %v2589 = vpack.c.b16 %v2547, %v2546
    %v2590 = vpack.c.b16 %v2549, %v2548
    %v2591 = vpack.c.b16 %v2551, %v2550
    %v2592 = vpack.c.b16 %v2553, %v2552
    %v2593 = vpack.c.b16 %v2555, %v2554
    %v2594 = vpack.c.b16 %v2557, %v2556
    %v2595 = vpack.c.b16 %v2559, %v2558
    %v2596 = vpack.c.b16 %v2561, %v2560
    %v2597 = vpack.c.b16 %v2563, %v2562
    %v2598 = vpack.c.b16 %v2565, %v2564
    %v2599 = vpack.c.b16 %v2567, %v2566
    %2632 = vmatprep.subr.bf16.mxu0 0
    %2633 = vmatpush1.bf16.msra.mxu0 %v2568
    %2634 = vmatprep.subr.bf16.mxu0 0
    %2635 = vmatpush1.bf16.msra.mxu0 %v2569
    %2636 = vmatprep.subr.bf16.mxu0 0
    %2637 = vmatpush1.bf16.msra.mxu0 %v2570
    %2638 = vmatprep.subr.bf16.mxu0 0
    %2639 = vmatpush1.bf16.msra.mxu0 %v2571
    %2640 = vmatprep.subr.bf16.mxu0 0
    %2641 = vmatpush1.bf16.msra.mxu0 %v2572
    %2642 = vmatprep.subr.bf16.mxu0 0
    %2643 = vmatpush1.bf16.msra.mxu0 %v2573
    %2644 = vmatprep.subr.bf16.mxu0 0
    %2645 = vmatpush1.bf16.msra.mxu0 %v2574
    %2646 = vmatprep.subr.bf16.mxu0 0
    %2647 = vmatpush1.bf16.msra.mxu0 %v2575
    %2648 = vmatprep.subr.bf16.mxu0 0
    %2649 = vmatpush1.bf16.msra.mxu0 %v2576
    %2650 = vmatprep.subr.bf16.mxu0 0
    %2651 = vmatpush1.bf16.msra.mxu0 %v2577
    %2652 = vmatprep.subr.bf16.mxu0 0
    %2653 = vmatpush1.bf16.msra.mxu0 %v2578
    %2654 = vmatprep.subr.bf16.mxu0 0
    %2655 = vmatpush1.bf16.msra.mxu0 %v2579
    %2656 = vmatprep.subr.bf16.mxu0 0
    %2657 = vmatpush1.bf16.msra.mxu0 %v2580
    %2658 = vmatprep.subr.bf16.mxu0 0
    %2659 = vmatpush1.bf16.msra.mxu0 %v2581
    %2660 = vmatprep.subr.bf16.mxu0 0
    %2661 = vmatpush1.bf16.msra.mxu0 %v2582
    %2662 = vmatprep.subr.bf16.mxu0 0
    %2663 = vmatpush1.bf16.msra.mxu0 %v2583
    %2664 = vmatprep.mubr.bf16.mxu0 %v2430
    %2665 = vmatmul.mubr.bf16.gmra.mrb[0].mxu0 %v2429
    %v2666 = vpop.f32.mrb[0].mxu0
    %v2667 = vadd.f32 %v2438, %v2666
    %v2668 = vpop.f32.mrb[0].mxu0
    %v2669 = vpop.f32.mrb[0].mxu0
    %v2670 = vadd.f32 %v2438, %v2669
    %v2671 = vpop.f32.mrb[0].mxu0
    %2672 = vdwg.mxu0
    %2673 = vmatprep.subr.bf16.mxu0 0
    %2674 = vmatpush1.bf16.msra.mxu0 %v2584
    %2675 = vmatprep.subr.bf16.mxu0 0
    %2676 = vmatpush1.bf16.msra.mxu0 %v2585
    %2677 = vmatprep.subr.bf16.mxu0 0
    %2678 = vmatpush1.bf16.msra.mxu0 %v2586
    %2679 = vmatprep.subr.bf16.mxu0 0
    %2680 = vmatpush1.bf16.msra.mxu0 %v2587
    %2681 = vmatprep.subr.bf16.mxu0 0
    %2682 = vmatpush1.bf16.msra.mxu0 %v2588
    %2683 = vmatprep.subr.bf16.mxu0 0
    %2684 = vmatpush1.bf16.msra.mxu0 %v2589
    %2685 = vmatprep.subr.bf16.mxu0 0
    %2686 = vmatpush1.bf16.msra.mxu0 %v2590
    %2687 = vmatprep.subr.bf16.mxu0 0
    %2688 = vmatpush1.bf16.msra.mxu0 %v2591
    %2689 = vmatprep.subr.bf16.mxu0 0
    %2690 = vmatpush1.bf16.msra.mxu0 %v2592
    %2691 = vmatprep.subr.bf16.mxu0 0
    %2692 = vmatpush1.bf16.msra.mxu0 %v2593
    %2693 = vmatprep.subr.bf16.mxu0 0
    %2694 = vmatpush1.bf16.msra.mxu0 %v2594
    %2695 = vmatprep.subr.bf16.mxu0 0
    %2696 = vmatpush1.bf16.msra.mxu0 %v2595
    %2697 = vmatprep.subr.bf16.mxu0 0
    %2698 = vmatpush1.bf16.msra.mxu0 %v2596
    %2699 = vmatprep.subr.bf16.mxu0 0
    %2700 = vmatpush1.bf16.msra.mxu0 %v2597
    %2701 = vmatprep.subr.bf16.mxu0 0
    %2702 = vmatpush1.bf16.msra.mxu0 %v2598
    %2703 = vmatprep.subr.bf16.mxu0 0
    %2704 = vmatpush1.bf16.msra.mxu0 %v2599
    %2705 = vmatprep.mubr.bf16.mxu0 %v2432
    %2706 = vmatmul.mubr.bf16.gmra.mrb[0].mxu0 %v2431
    %v2707 = vpop.f32.mrb[0].mxu0
    %v2708 = vadd.f32 %v2667, %v2707
    %v2709 = vpop.f32.mrb[0].mxu0
    %v2710 = vpop.f32.mrb[0].mxu0
    %v2711 = vadd.f32 %v2670, %v2710
    %v2712 = vpop.f32.mrb[0].mxu0
    %2713 = vdwg.mxu0
    %v2714 = vld [vmem:[%s13] sm:$0x1]
    %v2715 = vld [vmem:[%s14] sm:$0x1]
    %v2716 = vadd.f32 %v2054, %v2708
    %v2717 = vadd.f32 %v2055, %v2711
    %2718 = vadd.xlane.f32.xlu0 %v2716
    %v2719 = vpop.xlane.xlu0 %2718
    %2720 = vadd.xlane.f32.xlu0 %v2717
    %v2721 = vpop.xlane.xlu0 %2720
    %v2722 = vmul.f32 %v2719, %v2021
    %v2723 = vmul.f32 %v2721, %v2021
    %v2724 = vsub.f32 %v2716, %v2722
    %v2725 = vsub.f32 %v2717, %v2723
    %v2726 = vmul.f32 %v2724, %v2724
    %v2727 = vmul.f32 %v2725, %v2725
    %2728 = vadd.xlane.f32.xlu0 %v2726
    %v2729 = vpop.xlane.xlu0 %2728
    %2730 = vadd.xlane.f32.xlu0 %v2727
    %v2731 = vpop.xlane.xlu0 %2730
    %v2732 = vmul.f32 %v2729, %v2021
    %v2733 = vmul.f32 %v2731, %v2021
    %v2734 = vadd.f32 %v2732, 1e-05
    %v2735 = vadd.f32 %v2733, 1e-05
    %v2736 = vrsqrt.pop %v2734
    %v2737 = vrsqrt.pop %v2735
    %v2738 = vmul.f32 %v2724, %v2736
    %v2739 = vmul.f32 %v2725, %v2737
    %v2741 = vlaneseq
    %v2742 = vshrl.u32 %v2741, 7
    %v2743 = vsub.s32 0, %v2742
    %v2744 = vrot.slane %v2714, %v2743
    %v2746 = vmul.f32 %v2738, %v2744
    %v2747 = vmul.f32 %v2739, %v2744
    %v2749 = vlaneseq
    %v2750 = vshrl.u32 %v2749, 7
    %v2751 = vsub.s32 0, %v2750
    %v2752 = vrot.slane %v2715, %v2751
    %v2754 = vadd.f32 %v2746, %v2752
    %v2755 = vadd.f32 %v2747, %v2752
    %s2756 = scalar_lea.vmem [#allocation8], 192
    %v2757 = vld [vmem:[%s2756] sm:$0xff]
    %v2758 = vld [vmem:[%s2756 + $0x8] sm:$0xf]
    %v2759 = vld [vmem:[%s2756 + $0xc] sm:$0xff]
    %v2760 = vld [vmem:[%s2756 + $0x14] sm:$0xf]
    %v2761 = vld [vmem:[%s2756 + $0x18] sm:$0xff]
    %v2762 = vld [vmem:[%s2756 + $0x20] sm:$0xf]
    %v2763 = vld [vmem:[%s2756 + $0x24] sm:$0xff]
    %v2764 = vld [vmem:[%s2756 + $0x2c] sm:$0xf]
    %v2765 = vld [vmem:[%s2756 + $0x30] sm:$0xff]
    %v2766 = vld [vmem:[%s2756 + $0x38] sm:$0xf]
    %v2767 = vld [vmem:[%s2756 + $0x3c] sm:$0xff]
    %v2768 = vld [vmem:[%s2756 + $0x44] sm:$0xf]
    %v2769 = vld [vmem:[%s2756 + $0x48] sm:$0xff]
    %v2770 = vld [vmem:[%s2756 + $0x50] sm:$0xf]
    %v2771 = vld [vmem:[%s2756 + $0x54] sm:$0xff]
    %v2772 = vld [vmem:[%s2756 + $0x5c] sm:$0xf]
    %v2773 = vld [vmem:[%s2756 + $0x60] sm:$0xff]
    %v2774 = vld [vmem:[%s2756 + $0x68] sm:$0xf]
    %v2775 = vld [vmem:[%s2756 + $0x6c] sm:$0xff]
    %v2776 = vld [vmem:[%s2756 + $0x74] sm:$0xf]
    %v2777 = vld [vmem:[%s2756 + $0x78] sm:$0xff]
    %v2778 = vld [vmem:[%s2756 + $0x80] sm:$0xf]
    %v2779 = vld [vmem:[%s2756 + $0x84] sm:$0xff]
    %v2780 = vld [vmem:[%s2756 + $0x8c] sm:$0xf]
    %v2781 = vld [vmem:[%s2756 + $0x90] sm:$0xff]
    %v2782 = vld [vmem:[%s2756 + $0x98] sm:$0xf]
    %v2783 = vld [vmem:[%s2756 + $0x9c] sm:$0xff]
    %v2784 = vld [vmem:[%s2756 + $0xa4] sm:$0xf]
    %v2785 = vld [vmem:[%s2756 + $0xa8] sm:$0xff]
    %v2786 = vld [vmem:[%s2756 + $0xb0] sm:$0xf]
    %v2787 = vld [vmem:[%s2756 + $0xb4] sm:$0xff]
    %v2788 = vld [vmem:[%s2756 + $0xbc] sm:$0xf]
    %s2789 = scalar_lea.vmem %s4, 3
    %v2790 = vld [vmem:[%s2789] sm:$0x7]
    %s2791 = scalar_lea.vmem [#allocation10], 64
    %v2792 = vld [vmem:[%s2791] sm:$0xf]
    %v2793 = vld [vmem:[%s2791 + $0x4] sm:$0xf]
    %v2794 = vld [vmem:[%s2791 + $0x8] sm:$0xf]
    %v2795 = vld [vmem:[%s2791 + $0xc] sm:$0xf]
    %v2796 = vld [vmem:[%s2791 + $0x10] sm:$0xf]
    %v2797 = vld [vmem:[%s2791 + $0x14] sm:$0xf]
    %v2798 = vld [vmem:[%s2791 + $0x18] sm:$0xf]
    %v2799 = vld [vmem:[%s2791 + $0x1c] sm:$0xf]
    %v2800 = vld [vmem:[%s2791 + $0x20] sm:$0xf]
    %v2801 = vld [vmem:[%s2791 + $0x24] sm:$0xf]
    %v2802 = vld [vmem:[%s2791 + $0x28] sm:$0xf]
    %v2803 = vld [vmem:[%s2791 + $0x2c] sm:$0xf]
    %v2804 = vld [vmem:[%s2791 + $0x30] sm:$0xf]
    %v2805 = vld [vmem:[%s2791 + $0x34] sm:$0xf]
    %v2806 = vld [vmem:[%s2791 + $0x38] sm:$0xf]
    %v2807 = vld [vmem:[%s2791 + $0x3c] sm:$0xf]
    %s2808 = scalar_lea.vmem %s6, 1
    %v2809 = vld [vmem:[%s2808] sm:$0x1]
    %v2810 = vpack.c.bf16 %v2755, %v2754
    %v2812 = vlaneseq
    %v2813 = vshrl.u32 %v2812, 7
    %v2814 = vsub.s32 0, %v2813
    %v2815 = vrot.slane %v2790, %v2814
    %v2816 = vlaneseq
    %v2817 = vshrl.u32 %v2816, 7
    %v2818 = vsub.s32 1, %v2817
    %v2819 = vrot.slane %v2790, %v2818
    %v2820 = vlaneseq
    %v2821 = vshrl.u32 %v2820, 7
    %v2822 = vsub.s32 2, %v2821
    %v2823 = vrot.slane %v2790, %v2822
    %v2859 = vunpack.c.l.b16 %v2757
    %v2860 = vunpack.c.h.b16 %v2757
    %v2861 = vunpack.c.l.b16 %v2758
    %v2862 = vunpack.c.l.b16 %v2759
    %v2863 = vunpack.c.h.b16 %v2759
    %v2864 = vunpack.c.l.b16 %v2760
    %v2865 = vunpack.c.l.b16 %v2761
    %v2866 = vunpack.c.h.b16 %v2761
    %v2867 = vunpack.c.l.b16 %v2762
    %v2868 = vunpack.c.l.b16 %v2763
    %v2869 = vunpack.c.h.b16 %v2763
    %v2870 = vunpack.c.l.b16 %v2764
    %v2871 = vunpack.c.l.b16 %v2765
    %v2872 = vunpack.c.h.b16 %v2765
    %v2873 = vunpack.c.l.b16 %v2766
    %v2874 = vunpack.c.l.b16 %v2767
    %v2875 = vunpack.c.h.b16 %v2767
    %v2876 = vunpack.c.l.b16 %v2768
    %v2877 = vunpack.c.l.b16 %v2769
    %v2878 = vunpack.c.h.b16 %v2769
    %v2879 = vunpack.c.l.b16 %v2770
    %v2880 = vunpack.c.l.b16 %v2771
    %v2881 = vunpack.c.h.b16 %v2771
    %v2882 = vunpack.c.l.b16 %v2772
    %v2883 = vunpack.c.l.b16 %v2773
    %v2884 = vunpack.c.h.b16 %v2773
    %v2885 = vunpack.c.l.b16 %v2774
    %v2886 = vunpack.c.l.b16 %v2775
    %v2887 = vunpack.c.h.b16 %v2775
    %v2888 = vunpack.c.l.b16 %v2776
    %v2889 = vunpack.c.l.b16 %v2777
    %v2890 = vunpack.c.h.b16 %v2777
    %v2891 = vunpack.c.l.b16 %v2778
    %v2892 = vunpack.c.l.b16 %v2779
    %v2893 = vunpack.c.h.b16 %v2779
    %v2894 = vunpack.c.l.b16 %v2780
    %v2895 = vunpack.c.l.b16 %v2781
    %v2896 = vunpack.c.h.b16 %v2781
    %v2897 = vunpack.c.l.b16 %v2782
    %v2898 = vunpack.c.l.b16 %v2783
    %v2899 = vunpack.c.h.b16 %v2783
    %v2900 = vunpack.c.l.b16 %v2784
    %v2901 = vunpack.c.l.b16 %v2785
    %v2902 = vunpack.c.h.b16 %v2785
    %v2903 = vunpack.c.l.b16 %v2786
    %v2904 = vunpack.c.l.b16 %v2787
    %v2905 = vunpack.c.h.b16 %v2787
    %v2906 = vunpack.c.l.b16 %v2788
    %v2907 = vpack.c.b16 %v2862, %v2859
    %v2908 = vpack.c.b16 %v2863, %v2860
    %v2909 = vpack.c.b16 %v2864, %v2861
    %v2910 = vpack.c.b16 %v2868, %v2865
    %v2911 = vpack.c.b16 %v2869, %v2866
    %v2912 = vpack.c.b16 %v2870, %v2867
    %v2913 = vpack.c.b16 %v2874, %v2871
    %v2914 = vpack.c.b16 %v2875, %v2872
    %v2915 = vpack.c.b16 %v2876, %v2873
    %v2916 = vpack.c.b16 %v2880, %v2877
    %v2917 = vpack.c.b16 %v2881, %v2878
    %v2918 = vpack.c.b16 %v2882, %v2879
    %v2919 = vpack.c.b16 %v2886, %v2883
    %v2920 = vpack.c.b16 %v2887, %v2884
    %v2921 = vpack.c.b16 %v2888, %v2885
    %v2922 = vpack.c.b16 %v2892, %v2889
    %v2923 = vpack.c.b16 %v2893, %v2890
    %v2924 = vpack.c.b16 %v2894, %v2891
    %v2925 = vpack.c.b16 %v2898, %v2895
    %v2926 = vpack.c.b16 %v2899, %v2896
    %v2927 = vpack.c.b16 %v2900, %v2897
    %v2928 = vpack.c.b16 %v2904, %v2901
    %v2929 = vpack.c.b16 %v2905, %v2902
    %v2930 = vpack.c.b16 %v2906, %v2903
    %2955 = vmatprep.subr.bf16.mxu0 %v2908
    %2956 = vmatpush1.bf16.msra.mxu0 %v2907
    %2957 = vmatprep.subr.bf16.mxu0 %v2911
    %2958 = vmatpush1.bf16.msra.mxu0 %v2910
    %2959 = vmatprep.subr.bf16.mxu0 %v2914
    %2960 = vmatpush1.bf16.msra.mxu0 %v2913
    %2961 = vmatprep.subr.bf16.mxu0 %v2917
    %2962 = vmatpush1.bf16.msra.mxu0 %v2916
    %2963 = vmatprep.subr.bf16.mxu0 %v2920
    %2964 = vmatpush1.bf16.msra.mxu0 %v2919
    %2965 = vmatprep.subr.bf16.mxu0 %v2923
    %2966 = vmatpush1.bf16.msra.mxu0 %v2922
    %2967 = vmatprep.subr.bf16.mxu0 %v2926
    %2968 = vmatpush1.bf16.msra.mxu0 %v2925
    %2969 = vmatprep.subr.bf16.mxu0 %v2929
    %2970 = vmatpush1.bf16.msra.mxu0 %v2928
    %2971 = vmatprep.subr.bf16.mxu0 0
    %2972 = vmatpush1.bf16.msra.mxu0 0
    %2973 = vmatprep.subr.bf16.mxu0 0
    %2974 = vmatpush1.bf16.msra.mxu0 0
    %2975 = vmatprep.subr.bf16.mxu0 0
    %2976 = vmatpush1.bf16.msra.mxu0 0
    %2977 = vmatprep.subr.bf16.mxu0 0
    %2978 = vmatpush1.bf16.msra.mxu0 0
    %2979 = vmatprep.subr.bf16.mxu0 0
    %2980 = vmatpush1.bf16.msra.mxu0 0
    %2981 = vmatprep.subr.bf16.mxu0 0
    %2982 = vmatpush1.bf16.msra.mxu0 0
    %2983 = vmatprep.subr.bf16.mxu0 0
    %2984 = vmatpush1.bf16.msra.mxu0 0
    %2985 = vmatprep.subr.bf16.mxu0 0
    %2986 = vmatpush1.bf16.msra.mxu0 0
    %2987 = vmatprep.mubr.bf16.mxu0 0
    %2988 = vmatmul.mubr.bf16.gmra.mrb[0].mxu0 %v2810
    %v2989 = vpop.f32.mrb[0].mxu0
    %v2990 = vadd.f32 %v2815, %v2989
    %v2991 = vpop.f32.mrb[0].mxu0
    %v2992 = vadd.f32 %v2819, %v2991
    %v2993 = vpop.f32.mrb[0].mxu0
    %v2994 = vadd.f32 %v2815, %v2993
    %v2995 = vpop.f32.mrb[0].mxu0
    %v2996 = vadd.f32 %v2819, %v2995
    %2997 = vdwg.mxu0
    %2998 = vmatprep.subr.bf16.mxu0 0
    %2999 = vmatpush1.bf16.msra.mxu0 %v2909
    %3000 = vmatprep.subr.bf16.mxu0 0
    %3001 = vmatpush1.bf16.msra.mxu0 %v2912
    %3002 = vmatprep.subr.bf16.mxu0 0
    %3003 = vmatpush1.bf16.msra.mxu0 %v2915
    %3004 = vmatprep.subr.bf16.mxu0 0
    %3005 = vmatpush1.bf16.msra.mxu0 %v2918
    %3006 = vmatprep.subr.bf16.mxu0 0
    %3007 = vmatpush1.bf16.msra.mxu0 %v2921
    %3008 = vmatprep.subr.bf16.mxu0 0
    %3009 = vmatpush1.bf16.msra.mxu0 %v2924
    %3010 = vmatprep.subr.bf16.mxu0 0
    %3011 = vmatpush1.bf16.msra.mxu0 %v2927
    %3012 = vmatprep.subr.bf16.mxu0 0
    %3013 = vmatpush1.bf16.msra.mxu0 %v2930
    %3014 = vmatprep.subr.bf16.mxu0 0
    %3015 = vmatpush1.bf16.msra.mxu0 0
    %3016 = vmatprep.subr.bf16.mxu0 0
    %3017 = vmatpush1.bf16.msra.mxu0 0
    %3018 = vmatprep.subr.bf16.mxu0 0
    %3019 = vmatpush1.bf16.msra.mxu0 0
    %3020 = vmatprep.subr.bf16.mxu0 0
    %3021 = vmatpush1.bf16.msra.mxu0 0
    %3022 = vmatprep.subr.bf16.mxu0 0
    %3023 = vmatpush1.bf16.msra.mxu0 0
    %3024 = vmatprep.subr.bf16.mxu0 0
    %3025 = vmatpush1.bf16.msra.mxu0 0
    %3026 = vmatprep.subr.bf16.mxu0 0
    %3027 = vmatpush1.bf16.msra.mxu0 0
    %3028 = vmatprep.subr.bf16.mxu0 0
    %3029 = vmatpush1.bf16.msra.mxu0 0
    %3030 = vmatprep.mubr.bf16.mxu0 0
    %3031 = vmatmul.mubr.bf16.gmra.mrb[0].mxu0 %v2810
    %v3032 = vpop.f32.mrb[0].mxu0
    %v3033 = vadd.f32 %v2823, %v3032
    %v3034 = vpop.f32.mrb[0].mxu0
    %v3035 = vpop.f32.mrb[0].mxu0
    %v3036 = vadd.f32 %v2823, %v3035
    %v3037 = vpop.f32.mrb[0].mxu0
    %3038 = vdwg.mxu0
    %v3039 = vpack.c.bf16 %v2990, %v2990
    %v3040 = vpack.c.bf16 %v2994, %v2994
    %v3041 = vpack.c.bf16 %v2992, %v2992
    %v3042 = vpack.c.bf16 %v2996, %v2996
    %v3044 = vsel %vm998, %v3039, 0
    %v3047 = vsel %vm998, %v3041, 0
    %3049 = vmatprep.subr.bf16.mxu0 0
    %3050 = vmatpush1.bf16.xpose.msra.mxu0 %v3047
    %3051 = vmatprep.subr.bf16.mxu0 0
    %3052 = vmatpush1.bf16.xpose.msra.mxu0 0
    %3053 = vmatprep.subr.bf16.mxu0 0
    %3054 = vmatpush1.bf16.xpose.msra.mxu0 0
    %3055 = vmatprep.subr.bf16.mxu0 0
    %3056 = vmatpush1.bf16.xpose.msra.mxu0 0
    %3057 = vmatprep.subr.bf16.mxu0 0
    %3058 = vmatpush1.bf16.xpose.msra.mxu0 0
    %3059 = vmatprep.subr.bf16.mxu0 0
    %3060 = vmatpush1.bf16.xpose.msra.mxu0 0
    %3061 = vmatprep.subr.bf16.mxu0 0
    %3062 = vmatpush1.bf16.xpose.msra.mxu0 0
    %3063 = vmatprep.subr.bf16.mxu0 0
    %3064 = vmatpush1.bf16.xpose.msra.mxu0 0
    %3065 = vmatprep.subr.bf16.mxu0 0
    %3066 = vmatpush1.bf16.xpose.msra.mxu0 0
    %3067 = vmatprep.subr.bf16.mxu0 0
    %3068 = vmatpush1.bf16.xpose.msra.mxu0 0
    %3069 = vmatprep.subr.bf16.mxu0 0
    %3070 = vmatpush1.bf16.xpose.msra.mxu0 0
    %3071 = vmatprep.subr.bf16.mxu0 0
    %3072 = vmatpush1.bf16.xpose.msra.mxu0 0
    %3073 = vmatprep.subr.bf16.mxu0 0
    %3074 = vmatpush1.bf16.xpose.msra.mxu0 0
    %3075 = vmatprep.subr.bf16.mxu0 0
    %3076 = vmatpush1.bf16.xpose.msra.mxu0 0
    %3077 = vmatprep.subr.bf16.mxu0 0
    %3078 = vmatpush1.bf16.xpose.msra.mxu0 0
    %3079 = vmatprep.subr.bf16.mxu0 0
    %3080 = vmatpush1.bf16.xpose.msra.mxu0 0
    %3081 = vmatprep.mubr.bf16.mxu0 0
    %3082 = vmatmul.mubr.bf16.gmra.mrb[0].mxu0 %v3044
    %v3083 = vpop.f32.mrb[0].mxu0
    %v3084 = vadd.f32 0.0, %v3083
    %v3085 = vpop.f32.mrb[0].mxu0
    %v3086 = vpop.f32.mrb[0].mxu0
    %v3087 = vpop.f32.mrb[0].mxu0
    %3088 = vdwg.mxu0
    %v3090 = vsel %vm998, %v3040, 0
    %v3093 = vsel %vm998, %v3042, 0
    %3095 = vmatprep.subr.bf16.mxu0 0
    %3096 = vmatpush1.bf16.xpose.msra.mxu0 %v3093
    %3097 = vmatprep.subr.bf16.mxu0 0
    %3098 = vmatpush1.bf16.xpose.msra.mxu0 0
    %3099 = vmatprep.subr.bf16.mxu0 0
    %3100 = vmatpush1.bf16.xpose.msra.mxu0 0
    %3101 = vmatprep.subr.bf16.mxu0 0
    %3102 = vmatpush1.bf16.xpose.msra.mxu0 0
    %3103 = vmatprep.subr.bf16.mxu0 0
    %3104 = vmatpush1.bf16.xpose.msra.mxu0 0
    %3105 = vmatprep.subr.bf16.mxu0 0
    %3106 = vmatpush1.bf16.xpose.msra.mxu0 0
    %3107 = vmatprep.subr.bf16.mxu0 0
    %3108 = vmatpush1.bf16.xpose.msra.mxu0 0
    %3109 = vmatprep.subr.bf16.mxu0 0
    %3110 = vmatpush1.bf16.xpose.msra.mxu0 0
    %3111 = vmatprep.subr.bf16.mxu0 0
    %3112 = vmatpush1.bf16.xpose.msra.mxu0 0
    %3113 = vmatprep.subr.bf16.mxu0 0
    %3114 = vmatpush1.bf16.xpose.msra.mxu0 0
    %3115 = vmatprep.subr.bf16.mxu0 0
    %3116 = vmatpush1.bf16.xpose.msra.mxu0 0
    %3117 = vmatprep.subr.bf16.mxu0 0
    %3118 = vmatpush1.bf16.xpose.msra.mxu0 0
    %3119 = vmatprep.subr.bf16.mxu0 0
    %3120 = vmatpush1.bf16.xpose.msra.mxu0 0
    %3121 = vmatprep.subr.bf16.mxu0 0
    %3122 = vmatpush1.bf16.xpose.msra.mxu0 0
    %3123 = vmatprep.subr.bf16.mxu0 0
    %3124 = vmatpush1.bf16.xpose.msra.mxu0 0
    %3125 = vmatprep.subr.bf16.mxu0 0
    %3126 = vmatpush1.bf16.xpose.msra.mxu0 0
    %3127 = vmatprep.mubr.bf16.mxu0 0
    %3128 = vmatmul.mubr.bf16.gmra.mrb[0].mxu0 %v3090
    %v3129 = vpop.f32.mrb[0].mxu0
    %v3130 = vadd.f32 0.0, %v3129
    %v3131 = vpop.f32.mrb[0].mxu0
    %v3132 = vpop.f32.mrb[0].mxu0
    %v3133 = vpop.f32.mrb[0].mxu0
    %3134 = vdwg.mxu0
    %v3135 = vmul.f32 %v3084, 0.17677669
    %v3136 = vmul.f32 %v3130, 0.17677669
    %v3137 = vsel %vm1093, %v3135, -inf
    %3138 = vmax.xlane.f32.xlu0 %v3137
    %v3139 = vpop.xlane.xlu0 %3138
    %v3140 = vsel %vm1093, %v3136, -inf
    %3141 = vmax.xlane.f32.xlu0 %v3140
    %v3142 = vpop.xlane.xlu0 %3141
    %v3143 = vsub.f32 %v3135, %v3139
    %v3144 = vsub.f32 %v3136, %v3142
    %v3145 = vmul.f32 %v3143, 1.442695
    %v3146 = vpow.pop %v3145
    %v3147 = vmul.f32 %v3144, 1.442695
    %v3148 = vpow.pop %v3147
    %v3149 = vsel %vm1093, %v3146, 0.0
    %3150 = vadd.xlane.f32.xlu0 %v3149
    %v3151 = vpop.xlane.xlu0 %3150
    %v3152 = vsel %vm1093, %v3148, 0.0
    %3153 = vadd.xlane.f32.xlu0 %v3152
    %v3154 = vpop.xlane.xlu0 %3153
    %v3155 = vrcp.pop %v3151
    %v3156 = vrcp.pop %v3154
    %v3157 = vmul.f32 %v3146, %v3155
    %v3158 = vmul.f32 %v3148, %v3156
    %v3159 = vpack.c.bf16 %v3157, %v3157
    %v3160 = vpack.c.bf16 %v3158, %v3158
    %v3161 = vpack.c.bf16 %v3033, %v3033
    %v3162 = vpack.c.bf16 %v3036, %v3036
    %v3164 = vsel %vm1093, %v3159, 0
    %v3167 = vsel %vm1123, %v3161, 0
    %3169 = vmatprep.subr.bf16.mxu0 0
    %3170 = vmatpush1.bf16.msra.mxu0 %v3167
    %3171 = vmatprep.subr.bf16.mxu0 0
    %3172 = vmatpush1.bf16.msra.mxu0 0
    %3173 = vmatprep.subr.bf16.mxu0 0
    %3174 = vmatpush1.bf16.msra.mxu0 0
    %3175 = vmatprep.subr.bf16.mxu0 0
    %3176 = vmatpush1.bf16.msra.mxu0 0
    %3177 = vmatprep.subr.bf16.mxu0 0
    %3178 = vmatpush1.bf16.msra.mxu0 0
    %3179 = vmatprep.subr.bf16.mxu0 0
    %3180 = vmatpush1.bf16.msra.mxu0 0
    %3181 = vmatprep.subr.bf16.mxu0 0
    %3182 = vmatpush1.bf16.msra.mxu0 0
    %3183 = vmatprep.subr.bf16.mxu0 0
    %3184 = vmatpush1.bf16.msra.mxu0 0
    %3185 = vmatprep.subr.bf16.mxu0 0
    %3186 = vmatpush1.bf16.msra.mxu0 0
    %3187 = vmatprep.subr.bf16.mxu0 0
    %3188 = vmatpush1.bf16.msra.mxu0 0
    %3189 = vmatprep.subr.bf16.mxu0 0
    %3190 = vmatpush1.bf16.msra.mxu0 0
    %3191 = vmatprep.subr.bf16.mxu0 0
    %3192 = vmatpush1.bf16.msra.mxu0 0
    %3193 = vmatprep.subr.bf16.mxu0 0
    %3194 = vmatpush1.bf16.msra.mxu0 0
    %3195 = vmatprep.subr.bf16.mxu0 0
    %3196 = vmatpush1.bf16.msra.mxu0 0
    %3197 = vmatprep.subr.bf16.mxu0 0
    %3198 = vmatpush1.bf16.msra.mxu0 0
    %3199 = vmatprep.subr.bf16.mxu0 0
    %3200 = vmatpush1.bf16.msra.mxu0 0
    %3201 = vmatprep.mubr.bf16.mxu0 0
    %3202 = vmatmul.mubr.bf16.gmra.mrb[0].mxu0 %v3164
    %v3203 = vpop.f32.mrb[0].mxu0
    %v3204 = vadd.f32 0.0, %v3203
    %v3205 = vpop.f32.mrb[0].mxu0
    %v3206 = vpop.f32.mrb[0].mxu0
    %v3207 = vpop.f32.mrb[0].mxu0
    %3208 = vdwg.mxu0
    %v3210 = vsel %vm1093, %v3160, 0
    %v3213 = vsel %vm1123, %v3162, 0
    %3215 = vmatprep.subr.bf16.mxu0 0
    %3216 = vmatpush1.bf16.msra.mxu0 %v3213
    %3217 = vmatprep.subr.bf16.mxu0 0
    %3218 = vmatpush1.bf16.msra.mxu0 0
    %3219 = vmatprep.subr.bf16.mxu0 0
    %3220 = vmatpush1.bf16.msra.mxu0 0
    %3221 = vmatprep.subr.bf16.mxu0 0
    %3222 = vmatpush1.bf16.msra.mxu0 0
    %3223 = vmatprep.subr.bf16.mxu0 0
    %3224 = vmatpush1.bf16.msra.mxu0 0
    %3225 = vmatprep.subr.bf16.mxu0 0
    %3226 = vmatpush1.bf16.msra.mxu0 0
    %3227 = vmatprep.subr.bf16.mxu0 0
    %3228 = vmatpush1.bf16.msra.mxu0 0
    %3229 = vmatprep.subr.bf16.mxu0 0
    %3230 = vmatpush1.bf16.msra.mxu0 0
    %3231 = vmatprep.subr.bf16.mxu0 0
    %3232 = vmatpush1.bf16.msra.mxu0 0
    %3233 = vmatprep.subr.bf16.mxu0 0
    %3234 = vmatpush1.bf16.msra.mxu0 0
    %3235 = vmatprep.subr.bf16.mxu0 0
    %3236 = vmatpush1.bf16.msra.mxu0 0
    %3237 = vmatprep.subr.bf16.mxu0 0
    %3238 = vmatpush1.bf16.msra.mxu0 0
    %3239 = vmatprep.subr.bf16.mxu0 0
    %3240 = vmatpush1.bf16.msra.mxu0 0
    %3241 = vmatprep.subr.bf16.mxu0 0
    %3242 = vmatpush1.bf16.msra.mxu0 0
    %3243 = vmatprep.subr.bf16.mxu0 0
    %3244 = vmatpush1.bf16.msra.mxu0 0
    %3245 = vmatprep.subr.bf16.mxu0 0
    %3246 = vmatpush1.bf16.msra.mxu0 0
    %3247 = vmatprep.mubr.bf16.mxu0 0
    %3248 = vmatmul.mubr.bf16.gmra.mrb[0].mxu0 %v3210
    %v3249 = vpop.f32.mrb[0].mxu0
    %v3250 = vadd.f32 0.0, %v3249
    %v3251 = vpop.f32.mrb[0].mxu0
    %v3252 = vpop.f32.mrb[0].mxu0
    %v3253 = vpop.f32.mrb[0].mxu0
    %3254 = vdwg.mxu0
    %3256 = vrot.lane.b32.xlu0 %v3039, 96
    %v3257 = vpop.permute.xlu0 %3256
    %3259 = vrot.lane.b32.xlu0 %v3041, 96
    %v3260 = vpop.permute.xlu0 %3259
    %v3262 = vsel %vm998, %v3257, 0
    %v3265 = vsel %vm998, %v3260, 0
    %3267 = vmatprep.subr.bf16.mxu0 0
    %3268 = vmatpush1.bf16.xpose.msra.mxu0 %v3265
    %3269 = vmatprep.subr.bf16.mxu0 0
    %3270 = vmatpush1.bf16.xpose.msra.mxu0 0
    %3271 = vmatprep.subr.bf16.mxu0 0
    %3272 = vmatpush1.bf16.xpose.msra.mxu0 0
    %3273 = vmatprep.subr.bf16.mxu0 0
    %3274 = vmatpush1.bf16.xpose.msra.mxu0 0
    %3275 = vmatprep.subr.bf16.mxu0 0
    %3276 = vmatpush1.bf16.xpose.msra.mxu0 0
    %3277 = vmatprep.subr.bf16.mxu0 0
    %3278 = vmatpush1.bf16.xpose.msra.mxu0 0
    %3279 = vmatprep.subr.bf16.mxu0 0
    %3280 = vmatpush1.bf16.xpose.msra.mxu0 0
    %3281 = vmatprep.subr.bf16.mxu0 0
    %3282 = vmatpush1.bf16.xpose.msra.mxu0 0
    %3283 = vmatprep.subr.bf16.mxu0 0
    %3284 = vmatpush1.bf16.xpose.msra.mxu0 0
    %3285 = vmatprep.subr.bf16.mxu0 0
    %3286 = vmatpush1.bf16.xpose.msra.mxu0 0
    %3287 = vmatprep.subr.bf16.mxu0 0
    %3288 = vmatpush1.bf16.xpose.msra.mxu0 0
    %3289 = vmatprep.subr.bf16.mxu0 0
    %3290 = vmatpush1.bf16.xpose.msra.mxu0 0
    %3291 = vmatprep.subr.bf16.mxu0 0
    %3292 = vmatpush1.bf16.xpose.msra.mxu0 0
    %3293 = vmatprep.subr.bf16.mxu0 0
    %3294 = vmatpush1.bf16.xpose.msra.mxu0 0
    %3295 = vmatprep.subr.bf16.mxu0 0
    %3296 = vmatpush1.bf16.xpose.msra.mxu0 0
    %3297 = vmatprep.subr.bf16.mxu0 0
    %3298 = vmatpush1.bf16.xpose.msra.mxu0 0
    %3299 = vmatprep.mubr.bf16.mxu0 0
    %3300 = vmatmul.mubr.bf16.gmra.mrb[0].mxu0 %v3262
    %v3301 = vpop.f32.mrb[0].mxu0
    %v3302 = vadd.f32 0.0, %v3301
    %v3303 = vpop.f32.mrb[0].mxu0
    %v3304 = vpop.f32.mrb[0].mxu0
    %v3305 = vpop.f32.mrb[0].mxu0
    %3306 = vdwg.mxu0
    %3308 = vrot.lane.b32.xlu0 %v3040, 96
    %v3309 = vpop.permute.xlu0 %3308
    %3311 = vrot.lane.b32.xlu0 %v3042, 96
    %v3312 = vpop.permute.xlu0 %3311
    %v3314 = vsel %vm998, %v3309, 0
    %v3317 = vsel %vm998, %v3312, 0
    %3319 = vmatprep.subr.bf16.mxu0 0
    %3320 = vmatpush1.bf16.xpose.msra.mxu0 %v3317
    %3321 = vmatprep.subr.bf16.mxu0 0
    %3322 = vmatpush1.bf16.xpose.msra.mxu0 0
    %3323 = vmatprep.subr.bf16.mxu0 0
    %3324 = vmatpush1.bf16.xpose.msra.mxu0 0
    %3325 = vmatprep.subr.bf16.mxu0 0
    %3326 = vmatpush1.bf16.xpose.msra.mxu0 0
    %3327 = vmatprep.subr.bf16.mxu0 0
    %3328 = vmatpush1.bf16.xpose.msra.mxu0 0
    %3329 = vmatprep.subr.bf16.mxu0 0
    %3330 = vmatpush1.bf16.xpose.msra.mxu0 0
    %3331 = vmatprep.subr.bf16.mxu0 0
    %3332 = vmatpush1.bf16.xpose.msra.mxu0 0
    %3333 = vmatprep.subr.bf16.mxu0 0
    %3334 = vmatpush1.bf16.xpose.msra.mxu0 0
    %3335 = vmatprep.subr.bf16.mxu0 0
    %3336 = vmatpush1.bf16.xpose.msra.mxu0 0
    %3337 = vmatprep.subr.bf16.mxu0 0
    %3338 = vmatpush1.bf16.xpose.msra.mxu0 0
    %3339 = vmatprep.subr.bf16.mxu0 0
    %3340 = vmatpush1.bf16.xpose.msra.mxu0 0
    %3341 = vmatprep.subr.bf16.mxu0 0
    %3342 = vmatpush1.bf16.xpose.msra.mxu0 0
    %3343 = vmatprep.subr.bf16.mxu0 0
    %3344 = vmatpush1.bf16.xpose.msra.mxu0 0
    %3345 = vmatprep.subr.bf16.mxu0 0
    %3346 = vmatpush1.bf16.xpose.msra.mxu0 0
    %3347 = vmatprep.subr.bf16.mxu0 0
    %3348 = vmatpush1.bf16.xpose.msra.mxu0 0
    %3349 = vmatprep.subr.bf16.mxu0 0
    %3350 = vmatpush1.bf16.xpose.msra.mxu0 0
    %3351 = vmatprep.mubr.bf16.mxu0 0
    %3352 = vmatmul.mubr.bf16.gmra.mrb[0].mxu0 %v3314
    %v3353 = vpop.f32.mrb[0].mxu0
    %v3354 = vadd.f32 0.0, %v3353
    %v3355 = vpop.f32.mrb[0].mxu0
    %v3356 = vpop.f32.mrb[0].mxu0
    %v3357 = vpop.f32.mrb[0].mxu0
    %3358 = vdwg.mxu0
    %v3359 = vmul.f32 %v3302, 0.17677669
    %v3360 = vmul.f32 %v3354, 0.17677669
    %v3361 = vsel %vm1093, %v3359, -inf
    %3362 = vmax.xlane.f32.xlu0 %v3361
    %v3363 = vpop.xlane.xlu0 %3362
    %v3364 = vsel %vm1093, %v3360, -inf
    %3365 = vmax.xlane.f32.xlu0 %v3364
    %v3366 = vpop.xlane.xlu0 %3365
    %v3367 = vsub.f32 %v3359, %v3363
    %v3368 = vsub.f32 %v3360, %v3366
    %v3369 = vmul.f32 %v3367, 1.442695
    %v3370 = vpow.pop %v3369
    %v3371 = vmul.f32 %v3368, 1.442695
    %v3372 = vpow.pop %v3371
    %v3373 = vsel %vm1093, %v3370, 0.0
    %3374 = vadd.xlane.f32.xlu0 %v3373
    %v3375 = vpop.xlane.xlu0 %3374
    %v3376 = vsel %vm1093, %v3372, 0.0
    %3377 = vadd.xlane.f32.xlu0 %v3376
    %v3378 = vpop.xlane.xlu0 %3377
    %v3379 = vrcp.pop %v3375
    %v3380 = vrcp.pop %v3378
    %v3381 = vmul.f32 %v3370, %v3379
    %v3382 = vmul.f32 %v3372, %v3380
    %v3383 = vpack.c.bf16 %v3381, %v3381
    %v3384 = vpack.c.bf16 %v3382, %v3382
    %3386 = vrot.lane.b32.xlu0 %v3161, 96
    %v3387 = vpop.permute.xlu0 %3386
    %v3389 = vsel %vm1093, %v3383, 0
    %v3392 = vsel %vm1123, %v3387, 0
    %3394 = vmatprep.subr.bf16.mxu0 0
    %3395 = vmatpush1.bf16.msra.mxu0 %v3392
    %3396 = vmatprep.subr.bf16.mxu0 0
    %3397 = vmatpush1.bf16.msra.mxu0 0
    %3398 = vmatprep.subr.bf16.mxu0 0
    %3399 = vmatpush1.bf16.msra.mxu0 0
    %3400 = vmatprep.subr.bf16.mxu0 0
    %3401 = vmatpush1.bf16.msra.mxu0 0
    %3402 = vmatprep.subr.bf16.mxu0 0
    %3403 = vmatpush1.bf16.msra.mxu0 0
    %3404 = vmatprep.subr.bf16.mxu0 0
    %3405 = vmatpush1.bf16.msra.mxu0 0
    %3406 = vmatprep.subr.bf16.mxu0 0
    %3407 = vmatpush1.bf16.msra.mxu0 0
    %3408 = vmatprep.subr.bf16.mxu0 0
    %3409 = vmatpush1.bf16.msra.mxu0 0
    %3410 = vmatprep.subr.bf16.mxu0 0
    %3411 = vmatpush1.bf16.msra.mxu0 0
    %3412 = vmatprep.subr.bf16.mxu0 0
    %3413 = vmatpush1.bf16.msra.mxu0 0
    %3414 = vmatprep.subr.bf16.mxu0 0
    %3415 = vmatpush1.bf16.msra.mxu0 0
    %3416 = vmatprep.subr.bf16.mxu0 0
    %3417 = vmatpush1.bf16.msra.mxu0 0
    %3418 = vmatprep.subr.bf16.mxu0 0
    %3419 = vmatpush1.bf16.msra.mxu0 0
    %3420 = vmatprep.subr.bf16.mxu0 0
    %3421 = vmatpush1.bf16.msra.mxu0 0
    %3422 = vmatprep.subr.bf16.mxu0 0
    %3423 = vmatpush1.bf16.msra.mxu0 0
    %3424 = vmatprep.subr.bf16.mxu0 0
    %3425 = vmatpush1.bf16.msra.mxu0 0
    %3426 = vmatprep.mubr.bf16.mxu0 0
    %3427 = vmatmul.mubr.bf16.gmra.mrb[0].mxu0 %v3389
    %v3428 = vpop.f32.mrb[0].mxu0
    %v3429 = vadd.f32 0.0, %v3428
    %v3430 = vpop.f32.mrb[0].mxu0
    %v3431 = vpop.f32.mrb[0].mxu0
    %v3432 = vpop.f32.mrb[0].mxu0
    %3433 = vdwg.mxu0
    %3435 = vrot.lane.b32.xlu0 %v3162, 96
    %v3436 = vpop.permute.xlu0 %3435
    %v3438 = vsel %vm1093, %v3384, 0
    %v3441 = vsel %vm1123, %v3436, 0
    %3443 = vmatprep.subr.bf16.mxu0 0
    %3444 = vmatpush1.bf16.msra.mxu0 %v3441
    %3445 = vmatprep.subr.bf16.mxu0 0
    %3446 = vmatpush1.bf16.msra.mxu0 0
    %3447 = vmatprep.subr.bf16.mxu0 0
    %3448 = vmatpush1.bf16.msra.mxu0 0
    %3449 = vmatprep.subr.bf16.mxu0 0
    %3450 = vmatpush1.bf16.msra.mxu0 0
    %3451 = vmatprep.subr.bf16.mxu0 0
    %3452 = vmatpush1.bf16.msra.mxu0 0
    %3453 = vmatprep.subr.bf16.mxu0 0
    %3454 = vmatpush1.bf16.msra.mxu0 0
    %3455 = vmatprep.subr.bf16.mxu0 0
    %3456 = vmatpush1.bf16.msra.mxu0 0
    %3457 = vmatprep.subr.bf16.mxu0 0
    %3458 = vmatpush1.bf16.msra.mxu0 0
    %3459 = vmatprep.subr.bf16.mxu0 0
    %3460 = vmatpush1.bf16.msra.mxu0 0
    %3461 = vmatprep.subr.bf16.mxu0 0
    %3462 = vmatpush1.bf16.msra.mxu0 0
    %3463 = vmatprep.subr.bf16.mxu0 0
    %3464 = vmatpush1.bf16.msra.mxu0 0
    %3465 = vmatprep.subr.bf16.mxu0 0
    %3466 = vmatpush1.bf16.msra.mxu0 0
    %3467 = vmatprep.subr.bf16.mxu0 0
    %3468 = vmatpush1.bf16.msra.mxu0 0
    %3469 = vmatprep.subr.bf16.mxu0 0
    %3470 = vmatpush1.bf16.msra.mxu0 0
    %3471 = vmatprep.subr.bf16.mxu0 0
    %3472 = vmatpush1.bf16.msra.mxu0 0
    %3473 = vmatprep.subr.bf16.mxu0 0
    %3474 = vmatpush1.bf16.msra.mxu0 0
    %3475 = vmatprep.mubr.bf16.mxu0 0
    %3476 = vmatmul.mubr.bf16.gmra.mrb[0].mxu0 %v3438
    %v3477 = vpop.f32.mrb[0].mxu0
    %v3478 = vadd.f32 0.0, %v3477
    %v3479 = vpop.f32.mrb[0].mxu0
    %v3480 = vpop.f32.mrb[0].mxu0
    %v3481 = vpop.f32.mrb[0].mxu0
    %3482 = vdwg.mxu0
    %3483 = vrot.lane.b32.xlu0 %v3039, 64
    %v3484 = vpop.permute.xlu0 %3483
    %3485 = vrot.lane.b32.xlu0 %v3041, 64
    %v3486 = vpop.permute.xlu0 %3485
    %v3488 = vsel %vm998, %v3484, 0
    %v3491 = vsel %vm998, %v3486, 0
    %3493 = vmatprep.subr.bf16.mxu0 0
    %3494 = vmatpush1.bf16.xpose.msra.mxu0 %v3491
    %3495 = vmatprep.subr.bf16.mxu0 0
    %3496 = vmatpush1.bf16.xpose.msra.mxu0 0
    %3497 = vmatprep.subr.bf16.mxu0 0
    %3498 = vmatpush1.bf16.xpose.msra.mxu0 0
    %3499 = vmatprep.subr.bf16.mxu0 0
    %3500 = vmatpush1.bf16.xpose.msra.mxu0 0
    %3501 = vmatprep.subr.bf16.mxu0 0
    %3502 = vmatpush1.bf16.xpose.msra.mxu0 0
    %3503 = vmatprep.subr.bf16.mxu0 0
    %3504 = vmatpush1.bf16.xpose.msra.mxu0 0
    %3505 = vmatprep.subr.bf16.mxu0 0
    %3506 = vmatpush1.bf16.xpose.msra.mxu0 0
    %3507 = vmatprep.subr.bf16.mxu0 0
    %3508 = vmatpush1.bf16.xpose.msra.mxu0 0
    %3509 = vmatprep.subr.bf16.mxu0 0
    %3510 = vmatpush1.bf16.xpose.msra.mxu0 0
    %3511 = vmatprep.subr.bf16.mxu0 0
    %3512 = vmatpush1.bf16.xpose.msra.mxu0 0
    %3513 = vmatprep.subr.bf16.mxu0 0
    %3514 = vmatpush1.bf16.xpose.msra.mxu0 0
    %3515 = vmatprep.subr.bf16.mxu0 0
    %3516 = vmatpush1.bf16.xpose.msra.mxu0 0
    %3517 = vmatprep.subr.bf16.mxu0 0
    %3518 = vmatpush1.bf16.xpose.msra.mxu0 0
    %3519 = vmatprep.subr.bf16.mxu0 0
    %3520 = vmatpush1.bf16.xpose.msra.mxu0 0
    %3521 = vmatprep.subr.bf16.mxu0 0
    %3522 = vmatpush1.bf16.xpose.msra.mxu0 0
    %3523 = vmatprep.subr.bf16.mxu0 0
    %3524 = vmatpush1.bf16.xpose.msra.mxu0 0
    %3525 = vmatprep.mubr.bf16.mxu0 0
    %3526 = vmatmul.mubr.bf16.gmra.mrb[0].mxu0 %v3488
    %v3527 = vpop.f32.mrb[0].mxu0
    %v3528 = vadd.f32 0.0, %v3527
    %v3529 = vpop.f32.mrb[0].mxu0
    %v3530 = vpop.f32.mrb[0].mxu0
    %v3531 = vpop.f32.mrb[0].mxu0
    %3532 = vdwg.mxu0
    %3533 = vrot.lane.b32.xlu0 %v3040, 64
    %v3534 = vpop.permute.xlu0 %3533
    %3535 = vrot.lane.b32.xlu0 %v3042, 64
    %v3536 = vpop.permute.xlu0 %3535
    %v3538 = vsel %vm998, %v3534, 0
    %v3541 = vsel %vm998, %v3536, 0
    %3543 = vmatprep.subr.bf16.mxu0 0
    %3544 = vmatpush1.bf16.xpose.msra.mxu0 %v3541
    %3545 = vmatprep.subr.bf16.mxu0 0
    %3546 = vmatpush1.bf16.xpose.msra.mxu0 0
    %3547 = vmatprep.subr.bf16.mxu0 0
    %3548 = vmatpush1.bf16.xpose.msra.mxu0 0
    %3549 = vmatprep.subr.bf16.mxu0 0
    %3550 = vmatpush1.bf16.xpose.msra.mxu0 0
    %3551 = vmatprep.subr.bf16.mxu0 0
    %3552 = vmatpush1.bf16.xpose.msra.mxu0 0
    %3553 = vmatprep.subr.bf16.mxu0 0
    %3554 = vmatpush1.bf16.xpose.msra.mxu0 0
    %3555 = vmatprep.subr.bf16.mxu0 0
    %3556 = vmatpush1.bf16.xpose.msra.mxu0 0
    %3557 = vmatprep.subr.bf16.mxu0 0
    %3558 = vmatpush1.bf16.xpose.msra.mxu0 0
    %3559 = vmatprep.subr.bf16.mxu0 0
    %3560 = vmatpush1.bf16.xpose.msra.mxu0 0
    %3561 = vmatprep.subr.bf16.mxu0 0
    %3562 = vmatpush1.bf16.xpose.msra.mxu0 0
    %3563 = vmatprep.subr.bf16.mxu0 0
    %3564 = vmatpush1.bf16.xpose.msra.mxu0 0
    %3565 = vmatprep.subr.bf16.mxu0 0
    %3566 = vmatpush1.bf16.xpose.msra.mxu0 0
    %3567 = vmatprep.subr.bf16.mxu0 0
    %3568 = vmatpush1.bf16.xpose.msra.mxu0 0
    %3569 = vmatprep.subr.bf16.mxu0 0
    %3570 = vmatpush1.bf16.xpose.msra.mxu0 0
    %3571 = vmatprep.subr.bf16.mxu0 0
    %3572 = vmatpush1.bf16.xpose.msra.mxu0 0
    %3573 = vmatprep.subr.bf16.mxu0 0
    %3574 = vmatpush1.bf16.xpose.msra.mxu0 0
    %3575 = vmatprep.mubr.bf16.mxu0 0
    %3576 = vmatmul.mubr.bf16.gmra.mrb[0].mxu0 %v3538
    %v3577 = vpop.f32.mrb[0].mxu0
    %v3578 = vadd.f32 0.0, %v3577
    %v3579 = vpop.f32.mrb[0].mxu0
    %v3580 = vpop.f32.mrb[0].mxu0
    %v3581 = vpop.f32.mrb[0].mxu0
    %3582 = vdwg.mxu0
    %v3583 = vmul.f32 %v3528, 0.17677669
    %v3584 = vmul.f32 %v3578, 0.17677669
    %v3585 = vsel %vm1093, %v3583, -inf
    %3586 = vmax.xlane.f32.xlu0 %v3585
    %v3587 = vpop.xlane.xlu0 %3586
    %v3588 = vsel %vm1093, %v3584, -inf
    %3589 = vmax.xlane.f32.xlu0 %v3588
    %v3590 = vpop.xlane.xlu0 %3589
    %v3591 = vsub.f32 %v3583, %v3587
    %v3592 = vsub.f32 %v3584, %v3590
    %v3593 = vmul.f32 %v3591, 1.442695
    %v3594 = vpow.pop %v3593
    %v3595 = vmul.f32 %v3592, 1.442695
    %v3596 = vpow.pop %v3595
    %v3597 = vsel %vm1093, %v3594, 0.0
    %3598 = vadd.xlane.f32.xlu0 %v3597
    %v3599 = vpop.xlane.xlu0 %3598
    %v3600 = vsel %vm1093, %v3596, 0.0
    %3601 = vadd.xlane.f32.xlu0 %v3600
    %v3602 = vpop.xlane.xlu0 %3601
    %v3603 = vrcp.pop %v3599
    %v3604 = vrcp.pop %v3602
    %v3605 = vmul.f32 %v3594, %v3603
    %v3606 = vmul.f32 %v3596, %v3604
    %v3607 = vpack.c.bf16 %v3605, %v3605
    %v3608 = vpack.c.bf16 %v3606, %v3606
    %3609 = vrot.lane.b32.xlu0 %v3161, 64
    %v3610 = vpop.permute.xlu0 %3609
    %v3612 = vsel %vm1093, %v3607, 0
    %v3615 = vsel %vm1123, %v3610, 0
    %3617 = vmatprep.subr.bf16.mxu0 0
    %3618 = vmatpush1.bf16.msra.mxu0 %v3615
    %3619 = vmatprep.subr.bf16.mxu0 0
    %3620 = vmatpush1.bf16.msra.mxu0 0
    %3621 = vmatprep.subr.bf16.mxu0 0
    %3622 = vmatpush1.bf16.msra.mxu0 0
    %3623 = vmatprep.subr.bf16.mxu0 0
    %3624 = vmatpush1.bf16.msra.mxu0 0
    %3625 = vmatprep.subr.bf16.mxu0 0
    %3626 = vmatpush1.bf16.msra.mxu0 0
    %3627 = vmatprep.subr.bf16.mxu0 0
    %3628 = vmatpush1.bf16.msra.mxu0 0
    %3629 = vmatprep.subr.bf16.mxu0 0
    %3630 = vmatpush1.bf16.msra.mxu0 0
    %3631 = vmatprep.subr.bf16.mxu0 0
    %3632 = vmatpush1.bf16.msra.mxu0 0
    %3633 = vmatprep.subr.bf16.mxu0 0
    %3634 = vmatpush1.bf16.msra.mxu0 0
    %3635 = vmatprep.subr.bf16.mxu0 0
    %3636 = vmatpush1.bf16.msra.mxu0 0
    %3637 = vmatprep.subr.bf16.mxu0 0
    %3638 = vmatpush1.bf16.msra.mxu0 0
    %3639 = vmatprep.subr.bf16.mxu0 0
    %3640 = vmatpush1.bf16.msra.mxu0 0
    %3641 = vmatprep.subr.bf16.mxu0 0
    %3642 = vmatpush1.bf16.msra.mxu0 0
    %3643 = vmatprep.subr.bf16.mxu0 0
    %3644 = vmatpush1.bf16.msra.mxu0 0
    %3645 = vmatprep.subr.bf16.mxu0 0
    %3646 = vmatpush1.bf16.msra.mxu0 0
    %3647 = vmatprep.subr.bf16.mxu0 0
    %3648 = vmatpush1.bf16.msra.mxu0 0
    %3649 = vmatprep.mubr.bf16.mxu0 0
    %3650 = vmatmul.mubr.bf16.gmra.mrb[0].mxu0 %v3612
    %v3651 = vpop.f32.mrb[0].mxu0
    %v3652 = vadd.f32 0.0, %v3651
    %v3653 = vpop.f32.mrb[0].mxu0
    %v3654 = vpop.f32.mrb[0].mxu0
    %v3655 = vpop.f32.mrb[0].mxu0
    %3656 = vdwg.mxu0
    %3657 = vrot.lane.b32.xlu0 %v3162, 64
    %v3658 = vpop.permute.xlu0 %3657
    %v3660 = vsel %vm1093, %v3608, 0
    %v3663 = vsel %vm1123, %v3658, 0
    %3665 = vmatprep.subr.bf16.mxu0 0
    %3666 = vmatpush1.bf16.msra.mxu0 %v3663
    %3667 = vmatprep.subr.bf16.mxu0 0
    %3668 = vmatpush1.bf16.msra.mxu0 0
    %3669 = vmatprep.subr.bf16.mxu0 0
    %3670 = vmatpush1.bf16.msra.mxu0 0
    %3671 = vmatprep.subr.bf16.mxu0 0
    %3672 = vmatpush1.bf16.msra.mxu0 0
    %3673 = vmatprep.subr.bf16.mxu0 0
    %3674 = vmatpush1.bf16.msra.mxu0 0
    %3675 = vmatprep.subr.bf16.mxu0 0
    %3676 = vmatpush1.bf16.msra.mxu0 0
    %3677 = vmatprep.subr.bf16.mxu0 0
    %3678 = vmatpush1.bf16.msra.mxu0 0
    %3679 = vmatprep.subr.bf16.mxu0 0
    %3680 = vmatpush1.bf16.msra.mxu0 0
    %3681 = vmatprep.subr.bf16.mxu0 0
    %3682 = vmatpush1.bf16.msra.mxu0 0
    %3683 = vmatprep.subr.bf16.mxu0 0
    %3684 = vmatpush1.bf16.msra.mxu0 0
    %3685 = vmatprep.subr.bf16.mxu0 0
    %3686 = vmatpush1.bf16.msra.mxu0 0
    %3687 = vmatprep.subr.bf16.mxu0 0
    %3688 = vmatpush1.bf16.msra.mxu0 0
    %3689 = vmatprep.subr.bf16.mxu0 0
    %3690 = vmatpush1.bf16.msra.mxu0 0
    %3691 = vmatprep.subr.bf16.mxu0 0
    %3692 = vmatpush1.bf16.msra.mxu0 0
    %3693 = vmatprep.subr.bf16.mxu0 0
    %3694 = vmatpush1.bf16.msra.mxu0 0
    %3695 = vmatprep.subr.bf16.mxu0 0
    %3696 = vmatpush1.bf16.msra.mxu0 0
    %3697 = vmatprep.mubr.bf16.mxu0 0
    %3698 = vmatmul.mubr.bf16.gmra.mrb[0].mxu0 %v3660
    %v3699 = vpop.f32.mrb[0].mxu0
    %v3700 = vadd.f32 0.0, %v3699
    %v3701 = vpop.f32.mrb[0].mxu0
    %v3702 = vpop.f32.mrb[0].mxu0
    %v3703 = vpop.f32.mrb[0].mxu0
    %3704 = vdwg.mxu0
    %3705 = vrot.lane.b32.xlu0 %v3039, 32
    %v3706 = vpop.permute.xlu0 %3705
    %3707 = vrot.lane.b32.xlu0 %v3041, 32
    %v3708 = vpop.permute.xlu0 %3707
    %v3710 = vsel %vm998, %v3706, 0
    %v3713 = vsel %vm998, %v3708, 0
    %3715 = vmatprep.subr.bf16.mxu0 0
    %3716 = vmatpush1.bf16.xpose.msra.mxu0 %v3713
    %3717 = vmatprep.subr.bf16.mxu0 0
    %3718 = vmatpush1.bf16.xpose.msra.mxu0 0
    %3719 = vmatprep.subr.bf16.mxu0 0
    %3720 = vmatpush1.bf16.xpose.msra.mxu0 0
    %3721 = vmatprep.subr.bf16.mxu0 0
    %3722 = vmatpush1.bf16.xpose.msra.mxu0 0
    %3723 = vmatprep.subr.bf16.mxu0 0
    %3724 = vmatpush1.bf16.xpose.msra.mxu0 0
    %3725 = vmatprep.subr.bf16.mxu0 0
    %3726 = vmatpush1.bf16.xpose.msra.mxu0 0
    %3727 = vmatprep.subr.bf16.mxu0 0
    %3728 = vmatpush1.bf16.xpose.msra.mxu0 0
    %3729 = vmatprep.subr.bf16.mxu0 0
    %3730 = vmatpush1.bf16.xpose.msra.mxu0 0
    %3731 = vmatprep.subr.bf16.mxu0 0
    %3732 = vmatpush1.bf16.xpose.msra.mxu0 0
    %3733 = vmatprep.subr.bf16.mxu0 0
    %3734 = vmatpush1.bf16.xpose.msra.mxu0 0
    %3735 = vmatprep.subr.bf16.mxu0 0
    %3736 = vmatpush1.bf16.xpose.msra.mxu0 0
    %3737 = vmatprep.subr.bf16.mxu0 0
    %3738 = vmatpush1.bf16.xpose.msra.mxu0 0
    %3739 = vmatprep.subr.bf16.mxu0 0
    %3740 = vmatpush1.bf16.xpose.msra.mxu0 0
    %3741 = vmatprep.subr.bf16.mxu0 0
    %3742 = vmatpush1.bf16.xpose.msra.mxu0 0
    %3743 = vmatprep.subr.bf16.mxu0 0
    %3744 = vmatpush1.bf16.xpose.msra.mxu0 0
    %3745 = vmatprep.subr.bf16.mxu0 0
    %3746 = vmatpush1.bf16.xpose.msra.mxu0 0
    %3747 = vmatprep.mubr.bf16.mxu0 0
    %3748 = vmatmul.mubr.bf16.gmra.mrb[0].mxu0 %v3710
    %v3749 = vpop.f32.mrb[0].mxu0
    %v3750 = vadd.f32 0.0, %v3749
    %v3751 = vpop.f32.mrb[0].mxu0
    %v3752 = vpop.f32.mrb[0].mxu0
    %v3753 = vpop.f32.mrb[0].mxu0
    %3754 = vdwg.mxu0
    %3755 = vrot.lane.b32.xlu0 %v3040, 32
    %v3756 = vpop.permute.xlu0 %3755
    %3757 = vrot.lane.b32.xlu0 %v3042, 32
    %v3758 = vpop.permute.xlu0 %3757
    %v3760 = vsel %vm998, %v3756, 0
    %v3763 = vsel %vm998, %v3758, 0
    %3765 = vmatprep.subr.bf16.mxu0 0
    %3766 = vmatpush1.bf16.xpose.msra.mxu0 %v3763
    %3767 = vmatprep.subr.bf16.mxu0 0
    %3768 = vmatpush1.bf16.xpose.msra.mxu0 0
    %3769 = vmatprep.subr.bf16.mxu0 0
    %3770 = vmatpush1.bf16.xpose.msra.mxu0 0
    %3771 = vmatprep.subr.bf16.mxu0 0
    %3772 = vmatpush1.bf16.xpose.msra.mxu0 0
    %3773 = vmatprep.subr.bf16.mxu0 0
    %3774 = vmatpush1.bf16.xpose.msra.mxu0 0
    %3775 = vmatprep.subr.bf16.mxu0 0
    %3776 = vmatpush1.bf16.xpose.msra.mxu0 0
    %3777 = vmatprep.subr.bf16.mxu0 0
    %3778 = vmatpush1.bf16.xpose.msra.mxu0 0
    %3779 = vmatprep.subr.bf16.mxu0 0
    %3780 = vmatpush1.bf16.xpose.msra.mxu0 0
    %3781 = vmatprep.subr.bf16.mxu0 0
    %3782 = vmatpush1.bf16.xpose.msra.mxu0 0
    %3783 = vmatprep.subr.bf16.mxu0 0
    %3784 = vmatpush1.bf16.xpose.msra.mxu0 0
    %3785 = vmatprep.subr.bf16.mxu0 0
    %3786 = vmatpush1.bf16.xpose.msra.mxu0 0
    %3787 = vmatprep.subr.bf16.mxu0 0
    %3788 = vmatpush1.bf16.xpose.msra.mxu0 0
    %3789 = vmatprep.subr.bf16.mxu0 0
    %3790 = vmatpush1.bf16.xpose.msra.mxu0 0
    %3791 = vmatprep.subr.bf16.mxu0 0
    %3792 = vmatpush1.bf16.xpose.msra.mxu0 0
    %3793 = vmatprep.subr.bf16.mxu0 0
    %3794 = vmatpush1.bf16.xpose.msra.mxu0 0
    %3795 = vmatprep.subr.bf16.mxu0 0
    %3796 = vmatpush1.bf16.xpose.msra.mxu0 0
    %3797 = vmatprep.mubr.bf16.mxu0 0
    %3798 = vmatmul.mubr.bf16.gmra.mrb[0].mxu0 %v3760
    %v3799 = vpop.f32.mrb[0].mxu0
    %v3800 = vadd.f32 0.0, %v3799
    %v3801 = vpop.f32.mrb[0].mxu0
    %v3802 = vpop.f32.mrb[0].mxu0
    %v3803 = vpop.f32.mrb[0].mxu0
    %3804 = vdwg.mxu0
    %v3805 = vmul.f32 %v3750, 0.17677669
    %v3806 = vmul.f32 %v3800, 0.17677669
    %v3807 = vsel %vm1093, %v3805, -inf
    %3808 = vmax.xlane.f32.xlu0 %v3807
    %v3809 = vpop.xlane.xlu0 %3808
    %v3810 = vsel %vm1093, %v3806, -inf
    %3811 = vmax.xlane.f32.xlu0 %v3810
    %v3812 = vpop.xlane.xlu0 %3811
    %v3813 = vsub.f32 %v3805, %v3809
    %v3814 = vsub.f32 %v3806, %v3812
    %v3815 = vmul.f32 %v3813, 1.442695
    %v3816 = vpow.pop %v3815
    %v3817 = vmul.f32 %v3814, 1.442695
    %v3818 = vpow.pop %v3817
    %v3819 = vsel %vm1093, %v3816, 0.0
    %3820 = vadd.xlane.f32.xlu0 %v3819
    %v3821 = vpop.xlane.xlu0 %3820
    %v3822 = vsel %vm1093, %v3818, 0.0
    %3823 = vadd.xlane.f32.xlu0 %v3822
    %v3824 = vpop.xlane.xlu0 %3823
    %v3825 = vrcp.pop %v3821
    %v3826 = vrcp.pop %v3824
    %v3827 = vmul.f32 %v3816, %v3825
    %v3828 = vmul.f32 %v3818, %v3826
    %v3829 = vpack.c.bf16 %v3827, %v3827
    %v3830 = vpack.c.bf16 %v3828, %v3828
    %3831 = vrot.lane.b32.xlu0 %v3161, 32
    %v3832 = vpop.permute.xlu0 %3831
    %v3834 = vsel %vm1093, %v3829, 0
    %v3837 = vsel %vm1123, %v3832, 0
    %3839 = vmatprep.subr.bf16.mxu0 0
    %3840 = vmatpush1.bf16.msra.mxu0 %v3837
    %3841 = vmatprep.subr.bf16.mxu0 0
    %3842 = vmatpush1.bf16.msra.mxu0 0
    %3843 = vmatprep.subr.bf16.mxu0 0
    %3844 = vmatpush1.bf16.msra.mxu0 0
    %3845 = vmatprep.subr.bf16.mxu0 0
    %3846 = vmatpush1.bf16.msra.mxu0 0
    %3847 = vmatprep.subr.bf16.mxu0 0
    %3848 = vmatpush1.bf16.msra.mxu0 0
    %3849 = vmatprep.subr.bf16.mxu0 0
    %3850 = vmatpush1.bf16.msra.mxu0 0
    %3851 = vmatprep.subr.bf16.mxu0 0
    %3852 = vmatpush1.bf16.msra.mxu0 0
    %3853 = vmatprep.subr.bf16.mxu0 0
    %3854 = vmatpush1.bf16.msra.mxu0 0
    %3855 = vmatprep.subr.bf16.mxu0 0
    %3856 = vmatpush1.bf16.msra.mxu0 0
    %3857 = vmatprep.subr.bf16.mxu0 0
    %3858 = vmatpush1.bf16.msra.mxu0 0
    %3859 = vmatprep.subr.bf16.mxu0 0
    %3860 = vmatpush1.bf16.msra.mxu0 0
    %3861 = vmatprep.subr.bf16.mxu0 0
    %3862 = vmatpush1.bf16.msra.mxu0 0
    %3863 = vmatprep.subr.bf16.mxu0 0
    %3864 = vmatpush1.bf16.msra.mxu0 0
    %3865 = vmatprep.subr.bf16.mxu0 0
    %3866 = vmatpush1.bf16.msra.mxu0 0
    %3867 = vmatprep.subr.bf16.mxu0 0
    %3868 = vmatpush1.bf16.msra.mxu0 0
    %3869 = vmatprep.subr.bf16.mxu0 0
    %3870 = vmatpush1.bf16.msra.mxu0 0
    %3871 = vmatprep.mubr.bf16.mxu0 0
    %3872 = vmatmul.mubr.bf16.gmra.mrb[0].mxu0 %v3834
    %v3873 = vpop.f32.mrb[0].mxu0
    %v3874 = vadd.f32 0.0, %v3873
    %v3875 = vpop.f32.mrb[0].mxu0
    %v3876 = vpop.f32.mrb[0].mxu0
    %v3877 = vpop.f32.mrb[0].mxu0
    %3878 = vdwg.mxu0
    %3879 = vrot.lane.b32.xlu0 %v3162, 32
    %v3880 = vpop.permute.xlu0 %3879
    %v3882 = vsel %vm1093, %v3830, 0
    %v3885 = vsel %vm1123, %v3880, 0
    %3887 = vmatprep.subr.bf16.mxu0 0
    %3888 = vmatpush1.bf16.msra.mxu0 %v3885
    %3889 = vmatprep.subr.bf16.mxu0 0
    %3890 = vmatpush1.bf16.msra.mxu0 0
    %3891 = vmatprep.subr.bf16.mxu0 0
    %3892 = vmatpush1.bf16.msra.mxu0 0
    %3893 = vmatprep.subr.bf16.mxu0 0
    %3894 = vmatpush1.bf16.msra.mxu0 0
    %3895 = vmatprep.subr.bf16.mxu0 0
    %3896 = vmatpush1.bf16.msra.mxu0 0
    %3897 = vmatprep.subr.bf16.mxu0 0
    %3898 = vmatpush1.bf16.msra.mxu0 0
    %3899 = vmatprep.subr.bf16.mxu0 0
    %3900 = vmatpush1.bf16.msra.mxu0 0
    %3901 = vmatprep.subr.bf16.mxu0 0
    %3902 = vmatpush1.bf16.msra.mxu0 0
    %3903 = vmatprep.subr.bf16.mxu0 0
    %3904 = vmatpush1.bf16.msra.mxu0 0
    %3905 = vmatprep.subr.bf16.mxu0 0
    %3906 = vmatpush1.bf16.msra.mxu0 0
    %3907 = vmatprep.subr.bf16.mxu0 0
    %3908 = vmatpush1.bf16.msra.mxu0 0
    %3909 = vmatprep.subr.bf16.mxu0 0
    %3910 = vmatpush1.bf16.msra.mxu0 0
    %3911 = vmatprep.subr.bf16.mxu0 0
    %3912 = vmatpush1.bf16.msra.mxu0 0
    %3913 = vmatprep.subr.bf16.mxu0 0
    %3914 = vmatpush1.bf16.msra.mxu0 0
    %3915 = vmatprep.subr.bf16.mxu0 0
    %3916 = vmatpush1.bf16.msra.mxu0 0
    %3917 = vmatprep.subr.bf16.mxu0 0
    %3918 = vmatpush1.bf16.msra.mxu0 0
    %3919 = vmatprep.mubr.bf16.mxu0 0
    %3920 = vmatmul.mubr.bf16.gmra.mrb[0].mxu0 %v3882
    %v3921 = vpop.f32.mrb[0].mxu0
    %v3922 = vadd.f32 0.0, %v3921
    %v3923 = vpop.f32.mrb[0].mxu0
    %v3924 = vpop.f32.mrb[0].mxu0
    %v3925 = vpop.f32.mrb[0].mxu0
    %3926 = vdwg.mxu0
    %3929 = vrot.lane.b32.xlu0 %v3429, 32
    %v3930 = vpop.permute.xlu0 %3929
    %3931 = vrot.lane.b32.xlu0 %v3478, 32
    %v3932 = vpop.permute.xlu0 %3931
    %3937 = vrot.lane.b32.xlu0 %v3652, 64
    %v3938 = vpop.permute.xlu0 %3937
    %3939 = vrot.lane.b32.xlu0 %v3700, 64
    %v3940 = vpop.permute.xlu0 %3939
    %3945 = vrot.lane.b32.xlu0 %v3874, 96
    %v3946 = vpop.permute.xlu0 %3945
    %3947 = vrot.lane.b32.xlu0 %v3922, 96
    %v3948 = vpop.permute.xlu0 %3947
    %v3951 = vsel %vm998, %v3204, %v3930
    %v3952 = vsel %vm998, %v3250, %v3932
    %v3953 = vsel %vm1911, %v3951, %v3938
    %v3954 = vsel %vm1911, %v3952, %v3940
    %v3955 = vsel %vm1914, %v3953, %v3946
    %v3956 = vsel %vm1914, %v3954, %v3948
    %v3957 = vpack.c.bf16 %v3956, %v3955
    %v3959 = vlaneseq
    %v3960 = vshrl.u32 %v3959, 7
    %v3961 = vsub.s32 0, %v3960
    %v3962 = vrot.slane %v2809, %v3961
    %v3980 = vunpack.c.l.b16 %v2792
    %v3981 = vunpack.c.l.b16 %v2793
    %v3982 = vunpack.c.l.b16 %v2794
    %v3983 = vunpack.c.l.b16 %v2795
    %v3984 = vunpack.c.l.b16 %v2796
    %v3985 = vunpack.c.l.b16 %v2797
    %v3986 = vunpack.c.l.b16 %v2798
    %v3987 = vunpack.c.l.b16 %v2799
    %v3988 = vunpack.c.l.b16 %v2800
    %v3989 = vunpack.c.l.b16 %v2801
    %v3990 = vunpack.c.l.b16 %v2802
    %v3991 = vunpack.c.l.b16 %v2803
    %v3992 = vunpack.c.l.b16 %v2804
    %v3993 = vunpack.c.l.b16 %v2805
    %v3994 = vunpack.c.l.b16 %v2806
    %v3995 = vunpack.c.l.b16 %v2807
    %v3996 = vpack.c.b16 %v3981, %v3980
    %v3997 = vpack.c.b16 %v3983, %v3982
    %v3998 = vpack.c.b16 %v3985, %v3984
    %v3999 = vpack.c.b16 %v3987, %v3986
    %v4000 = vpack.c.b16 %v3989, %v3988
    %v4001 = vpack.c.b16 %v3991, %v3990
    %v4002 = vpack.c.b16 %v3993, %v3992
    %v4003 = vpack.c.b16 %v3995, %v3994
    %4012 = vmatprep.subr.bf16.mxu0 0
    %4013 = vmatpush1.bf16.msra.mxu0 %v3996
    %4014 = vmatprep.subr.bf16.mxu0 0
    %4015 = vmatpush1.bf16.msra.mxu0 %v3997
    %4016 = vmatprep.subr.bf16.mxu0 0
    %4017 = vmatpush1.bf16.msra.mxu0 %v3998
    %4018 = vmatprep.subr.bf16.mxu0 0
    %4019 = vmatpush1.bf16.msra.mxu0 %v3999
    %4020 = vmatprep.subr.bf16.mxu0 0
    %4021 = vmatpush1.bf16.msra.mxu0 %v4000
    %4022 = vmatprep.subr.bf16.mxu0 0
    %4023 = vmatpush1.bf16.msra.mxu0 %v4001
    %4024 = vmatprep.subr.bf16.mxu0 0
    %4025 = vmatpush1.bf16.msra.mxu0 %v4002
    %4026 = vmatprep.subr.bf16.mxu0 0
    %4027 = vmatpush1.bf16.msra.mxu0 %v4003
    %4028 = vmatprep.subr.bf16.mxu0 0
    %4029 = vmatpush1.bf16.msra.mxu0 0
    %4030 = vmatprep.subr.bf16.mxu0 0
    %4031 = vmatpush1.bf16.msra.mxu0 0
    %4032 = vmatprep.subr.bf16.mxu0 0
    %4033 = vmatpush1.bf16.msra.mxu0 0
    %4034 = vmatprep.subr.bf16.mxu0 0
    %4035 = vmatpush1.bf16.msra.mxu0 0
    %4036 = vmatprep.subr.bf16.mxu0 0
    %4037 = vmatpush1.bf16.msra.mxu0 0
    %4038 = vmatprep.subr.bf16.mxu0 0
    %4039 = vmatpush1.bf16.msra.mxu0 0
    %4040 = vmatprep.subr.bf16.mxu0 0
    %4041 = vmatpush1.bf16.msra.mxu0 0
    %4042 = vmatprep.subr.bf16.mxu0 0
    %4043 = vmatpush1.bf16.msra.mxu0 0
    %4044 = vmatprep.mubr.bf16.mxu0 0
    %4045 = vmatmul.mubr.bf16.gmra.mrb[0].mxu0 %v3957
    %v4046 = vpop.f32.mrb[0].mxu0
    %v4047 = vadd.f32 %v3962, %v4046
    %v4048 = vpop.f32.mrb[0].mxu0
    %v4049 = vpop.f32.mrb[0].mxu0
    %v4050 = vadd.f32 %v3962, %v4049
    %v4051 = vpop.f32.mrb[0].mxu0
    %4052 = vdwg.mxu0
    %s4053 = scalar_lea.vmem %s11, 1
    %v4054 = vld [vmem:[%s4053] sm:$0x1]
    %s4055 = scalar_lea.vmem %s12, 1
    %v4056 = vld [vmem:[%s4055] sm:$0x1]
    %v4057 = vadd.f32 %v2754, %v4047
    %v4058 = vadd.f32 %v2755, %v4050
    %4059 = vadd.xlane.f32.xlu0 %v4057
    %v4060 = vpop.xlane.xlu0 %4059
    %4061 = vadd.xlane.f32.xlu0 %v4058
    %v4062 = vpop.xlane.xlu0 %4061
    %v4063 = vmul.f32 %v4060, %v2021
    %v4064 = vmul.f32 %v4062, %v2021
    %v4065 = vsub.f32 %v4057, %v4063
    %v4066 = vsub.f32 %v4058, %v4064
    %v4067 = vmul.f32 %v4065, %v4065
    %v4068 = vmul.f32 %v4066, %v4066
    %4069 = vadd.xlane.f32.xlu0 %v4067
    %v4070 = vpop.xlane.xlu0 %4069
    %4071 = vadd.xlane.f32.xlu0 %v4068
    %v4072 = vpop.xlane.xlu0 %4071
    %v4073 = vmul.f32 %v4070, %v2021
    %v4074 = vmul.f32 %v4072, %v2021
    %v4075 = vadd.f32 %v4073, 1e-05
    %v4076 = vadd.f32 %v4074, 1e-05
    %v4077 = vrsqrt.pop %v4075
    %v4078 = vrsqrt.pop %v4076
    %v4079 = vmul.f32 %v4065, %v4077
    %v4080 = vmul.f32 %v4066, %v4078
    %v4082 = vlaneseq
    %v4083 = vshrl.u32 %v4082, 7
    %v4084 = vsub.s32 0, %v4083
    %v4085 = vrot.slane %v4054, %v4084
    %v4087 = vmul.f32 %v4079, %v4085
    %v4088 = vmul.f32 %v4080, %v4085
    %v4090 = vlaneseq
    %v4091 = vshrl.u32 %v4090, 7
    %v4092 = vsub.s32 0, %v4091
    %v4093 = vrot.slane %v4056, %v4092
    %v4095 = vadd.f32 %v4087, %v4093
    %v4096 = vadd.f32 %v4088, %v4093
    %s4097 = scalar_lea.vmem [#allocation11], 256
    %v4098 = vld [vmem:[%s4097] sm:$0xff]
    %v4099 = vld [vmem:[%s4097 + $0x8] sm:$0xff]
    %v4100 = vld [vmem:[%s4097 + $0x10] sm:$0xff]
    %v4101 = vld [vmem:[%s4097 + $0x18] sm:$0xff]
    %v4102 = vld [vmem:[%s4097 + $0x20] sm:$0xff]
    %v4103 = vld [vmem:[%s4097 + $0x28] sm:$0xff]
    %v4104 = vld [vmem:[%s4097 + $0x30] sm:$0xff]
    %v4105 = vld [vmem:[%s4097 + $0x38] sm:$0xff]
    %v4106 = vld [vmem:[%s4097 + $0x40] sm:$0xff]
    %v4107 = vld [vmem:[%s4097 + $0x48] sm:$0xff]
    %v4108 = vld [vmem:[%s4097 + $0x50] sm:$0xff]
    %v4109 = vld [vmem:[%s4097 + $0x58] sm:$0xff]
    %v4110 = vld [vmem:[%s4097 + $0x60] sm:$0xff]
    %v4111 = vld [vmem:[%s4097 + $0x68] sm:$0xff]
    %v4112 = vld [vmem:[%s4097 + $0x70] sm:$0xff]
    %v4113 = vld [vmem:[%s4097 + $0x78] sm:$0xff]
    %v4114 = vld [vmem:[%s4097 + $0x80] sm:$0xff]
    %v4115 = vld [vmem:[%s4097 + $0x88] sm:$0xff]
    %v4116 = vld [vmem:[%s4097 + $0x90] sm:$0xff]
    %v4117 = vld [vmem:[%s4097 + $0x98] sm:$0xff]
    %v4118 = vld [vmem:[%s4097 + $0xa0] sm:$0xff]
    %v4119 = vld [vmem:[%s4097 + $0xa8] sm:$0xff]
    %v4120 = vld [vmem:[%s4097 + $0xb0] sm:$0xff]
    %v4121 = vld [vmem:[%s4097 + $0xb8] sm:$0xff]
    %v4122 = vld [vmem:[%s4097 + $0xc0] sm:$0xff]
    %v4123 = vld [vmem:[%s4097 + $0xc8] sm:$0xff]
    %v4124 = vld [vmem:[%s4097 + $0xd0] sm:$0xff]
    %v4125 = vld [vmem:[%s4097 + $0xd8] sm:$0xff]
    %v4126 = vld [vmem:[%s4097 + $0xe0] sm:$0xff]
    %v4127 = vld [vmem:[%s4097 + $0xe8] sm:$0xff]
    %v4128 = vld [vmem:[%s4097 + $0xf0] sm:$0xff]
    %v4129 = vld [vmem:[%s4097 + $0xf8] sm:$0xff]
    %v4130 = vpack.c.bf16 %v4096, %v4095
    %s4131 = scalar_lea.vmem %s8, 4
    %v4132 = vld [vmem:[%s4131] sm:$0xf]
    %v4134 = vlaneseq
    %v4135 = vshrl.u32 %v4134, 7
    %v4136 = vsub.s32 0, %v4135
    %v4137 = vrot.slane %v4132, %v4136
    %v4138 = vlaneseq
    %v4139 = vshrl.u32 %v4138, 7
    %v4140 = vsub.s32 1, %v4139
    %v4141 = vrot.slane %v4132, %v4140
    %v4142 = vlaneseq
    %v4143 = vshrl.u32 %v4142, 7
    %v4144 = vsub.s32 2, %v4143
    %v4145 = vrot.slane %v4132, %v4144
    %v4146 = vlaneseq
    %v4147 = vshrl.u32 %v4146, 7
    %v4148 = vsub.s32 3, %v4147
    %v4149 = vrot.slane %v4132, %v4148
    %v4186 = vunpack.c.l.b16 %v4098
    %v4187 = vunpack.c.h.b16 %v4098
    %v4188 = vunpack.c.l.b16 %v4099
    %v4189 = vunpack.c.h.b16 %v4099
    %v4190 = vunpack.c.l.b16 %v4100
    %v4191 = vunpack.c.h.b16 %v4100
    %v4192 = vunpack.c.l.b16 %v4101
    %v4193 = vunpack.c.h.b16 %v4101
    %v4194 = vunpack.c.l.b16 %v4102
    %v4195 = vunpack.c.h.b16 %v4102
    %v4196 = vunpack.c.l.b16 %v4103
    %v4197 = vunpack.c.h.b16 %v4103
    %v4198 = vunpack.c.l.b16 %v4104
    %v4199 = vunpack.c.h.b16 %v4104
    %v4200 = vunpack.c.l.b16 %v4105
    %v4201 = vunpack.c.h.b16 %v4105
    %v4202 = vunpack.c.l.b16 %v4106
    %v4203 = vunpack.c.h.b16 %v4106
    %v4204 = vunpack.c.l.b16 %v4107
    %v4205 = vunpack.c.h.b16 %v4107
    %v4206 = vunpack.c.l.b16 %v4108
    %v4207 = vunpack.c.h.b16 %v4108
    %v4208 = vunpack.c.l.b16 %v4109
    %v4209 = vunpack.c.h.b16 %v4109
    %v4210 = vunpack.c.l.b16 %v4110
    %v4211 = vunpack.c.h.b16 %v4110
    %v4212 = vunpack.c.l.b16 %v4111
    %v4213 = vunpack.c.h.b16 %v4111
    %v4214 = vunpack.c.l.b16 %v4112
    %v4215 = vunpack.c.h.b16 %v4112
    %v4216 = vunpack.c.l.b16 %v4113
    %v4217 = vunpack.c.h.b16 %v4113
    %v4218 = vunpack.c.l.b16 %v4114
    %v4219 = vunpack.c.h.b16 %v4114
    %v4220 = vunpack.c.l.b16 %v4115
    %v4221 = vunpack.c.h.b16 %v4115
    %v4222 = vunpack.c.l.b16 %v4116
    %v4223 = vunpack.c.h.b16 %v4116
    %v4224 = vunpack.c.l.b16 %v4117
    %v4225 = vunpack.c.h.b16 %v4117
    %v4226 = vunpack.c.l.b16 %v4118
    %v4227 = vunpack.c.h.b16 %v4118
    %v4228 = vunpack.c.l.b16 %v4119
    %v4229 = vunpack.c.h.b16 %v4119
    %v4230 = vunpack.c.l.b16 %v4120
    %v4231 = vunpack.c.h.b16 %v4120
    %v4232 = vunpack.c.l.b16 %v4121
    %v4233 = vunpack.c.h.b16 %v4121
    %v4234 = vunpack.c.l.b16 %v4122
    %v4235 = vunpack.c.h.b16 %v4122
    %v4236 = vunpack.c.l.b16 %v4123
    %v4237 = vunpack.c.h.b16 %v4123
    %v4238 = vunpack.c.l.b16 %v4124
    %v4239 = vunpack.c.h.b16 %v4124
    %v4240 = vunpack.c.l.b16 %v4125
    %v4241 = vunpack.c.h.b16 %v4125
    %v4242 = vunpack.c.l.b16 %v4126
    %v4243 = vunpack.c.h.b16 %v4126
    %v4244 = vunpack.c.l.b16 %v4127
    %v4245 = vunpack.c.h.b16 %v4127
    %v4246 = vunpack.c.l.b16 %v4128
    %v4247 = vunpack.c.h.b16 %v4128
    %v4248 = vunpack.c.l.b16 %v4129
    %v4249 = vunpack.c.h.b16 %v4129
    %v4250 = vpack.c.b16 %v4190, %v4186
    %v4251 = vpack.c.b16 %v4191, %v4187
    %v4252 = vpack.c.b16 %v4192, %v4188
    %v4253 = vpack.c.b16 %v4193, %v4189
    %v4254 = vpack.c.b16 %v4198, %v4194
    %v4255 = vpack.c.b16 %v4199, %v4195
    %v4256 = vpack.c.b16 %v4200, %v4196
    %v4257 = vpack.c.b16 %v4201, %v4197
    %v4258 = vpack.c.b16 %v4206, %v4202
    %v4259 = vpack.c.b16 %v4207, %v4203
    %v4260 = vpack.c.b16 %v4208, %v4204
    %v4261 = vpack.c.b16 %v4209, %v4205
    %v4262 = vpack.c.b16 %v4214, %v4210
    %v4263 = vpack.c.b16 %v4215, %v4211
    %v4264 = vpack.c.b16 %v4216, %v4212
    %v4265 = vpack.c.b16 %v4217, %v4213
    %v4266 = vpack.c.b16 %v4222, %v4218
    %v4267 = vpack.c.b16 %v4223, %v4219
    %v4268 = vpack.c.b16 %v4224, %v4220
    %v4269 = vpack.c.b16 %v4225, %v4221
    %v4270 = vpack.c.b16 %v4230, %v4226
    %v4271 = vpack.c.b16 %v4231, %v4227
    %v4272 = vpack.c.b16 %v4232, %v4228
    %v4273 = vpack.c.b16 %v4233, %v4229
    %v4274 = vpack.c.b16 %v4238, %v4234
    %v4275 = vpack.c.b16 %v4239, %v4235
    %v4276 = vpack.c.b16 %v4240, %v4236
    %v4277 = vpack.c.b16 %v4241, %v4237
    %v4278 = vpack.c.b16 %v4246, %v4242
    %v4279 = vpack.c.b16 %v4247, %v4243
    %v4280 = vpack.c.b16 %v4248, %v4244
    %v4281 = vpack.c.b16 %v4249, %v4245
    %4314 = vmatprep.subr.bf16.mxu0 %v4251
    %4315 = vmatpush1.bf16.msra.mxu0 %v4250
    %4316 = vmatprep.subr.bf16.mxu0 %v4255
    %4317 = vmatpush1.bf16.msra.mxu0 %v4254
    %4318 = vmatprep.subr.bf16.mxu0 %v4259
    %4319 = vmatpush1.bf16.msra.mxu0 %v4258
    %4320 = vmatprep.subr.bf16.mxu0 %v4263
    %4321 = vmatpush1.bf16.msra.mxu0 %v4262
    %4322 = vmatprep.subr.bf16.mxu0 %v4267
    %4323 = vmatpush1.bf16.msra.mxu0 %v4266
    %4324 = vmatprep.subr.bf16.mxu0 %v4271
    %4325 = vmatpush1.bf16.msra.mxu0 %v4270
    %4326 = vmatprep.subr.bf16.mxu0 %v4275
    %4327 = vmatpush1.bf16.msra.mxu0 %v4274
    %4328 = vmatprep.subr.bf16.mxu0 %v4279
    %4329 = vmatpush1.bf16.msra.mxu0 %v4278
    %4330 = vmatprep.subr.bf16.mxu0 0
    %4331 = vmatpush1.bf16.msra.mxu0 0
    %4332 = vmatprep.subr.bf16.mxu0 0
    %4333 = vmatpush1.bf16.msra.mxu0 0
    %4334 = vmatprep.subr.bf16.mxu0 0
    %4335 = vmatpush1.bf16.msra.mxu0 0
    %4336 = vmatprep.subr.bf16.mxu0 0
    %4337 = vmatpush1.bf16.msra.mxu0 0
    %4338 = vmatprep.subr.bf16.mxu0 0
    %4339 = vmatpush1.bf16.msra.mxu0 0
    %4340 = vmatprep.subr.bf16.mxu0 0
    %4341 = vmatpush1.bf16.msra.mxu0 0
    %4342 = vmatprep.subr.bf16.mxu0 0
    %4343 = vmatpush1.bf16.msra.mxu0 0
    %4344 = vmatprep.subr.bf16.mxu0 0
    %4345 = vmatpush1.bf16.msra.mxu0 0
    %4346 = vmatprep.mubr.bf16.mxu0 0
    %4347 = vmatmul.mubr.bf16.gmra.mrb[0].mxu0 %v4130
    %v4348 = vpop.f32.mrb[0].mxu0
    %v4349 = vadd.f32 %v4137, %v4348
    %v4350 = vpop.f32.mrb[0].mxu0
    %v4351 = vadd.f32 %v4141, %v4350
    %v4352 = vpop.f32.mrb[0].mxu0
    %v4353 = vadd.f32 %v4137, %v4352
    %v4354 = vpop.f32.mrb[0].mxu0
    %v4355 = vadd.f32 %v4141, %v4354
    %4356 = vdwg.mxu0
    %4357 = vmatprep.subr.bf16.mxu0 %v4253
    %4358 = vmatpush1.bf16.msra.mxu0 %v4252
    %4359 = vmatprep.subr.bf16.mxu0 %v4257
    %4360 = vmatpush1.bf16.msra.mxu0 %v4256
    %4361 = vmatprep.subr.bf16.mxu0 %v4261
    %4362 = vmatpush1.bf16.msra.mxu0 %v4260
    %4363 = vmatprep.subr.bf16.mxu0 %v4265
    %4364 = vmatpush1.bf16.msra.mxu0 %v4264
    %4365 = vmatprep.subr.bf16.mxu0 %v4269
    %4366 = vmatpush1.bf16.msra.mxu0 %v4268
    %4367 = vmatprep.subr.bf16.mxu0 %v4273
    %4368 = vmatpush1.bf16.msra.mxu0 %v4272
    %4369 = vmatprep.subr.bf16.mxu0 %v4277
    %4370 = vmatpush1.bf16.msra.mxu0 %v4276
    %4371 = vmatprep.subr.bf16.mxu0 %v4281
    %4372 = vmatpush1.bf16.msra.mxu0 %v4280
    %4373 = vmatprep.subr.bf16.mxu0 0
    %4374 = vmatpush1.bf16.msra.mxu0 0
    %4375 = vmatprep.subr.bf16.mxu0 0
    %4376 = vmatpush1.bf16.msra.mxu0 0
    %4377 = vmatprep.subr.bf16.mxu0 0
    %4378 = vmatpush1.bf16.msra.mxu0 0
    %4379 = vmatprep.subr.bf16.mxu0 0
    %4380 = vmatpush1.bf16.msra.mxu0 0
    %4381 = vmatprep.subr.bf16.mxu0 0
    %4382 = vmatpush1.bf16.msra.mxu0 0
    %4383 = vmatprep.subr.bf16.mxu0 0
    %4384 = vmatpush1.bf16.msra.mxu0 0
    %4385 = vmatprep.subr.bf16.mxu0 0
    %4386 = vmatpush1.bf16.msra.mxu0 0
    %4387 = vmatprep.subr.bf16.mxu0 0
    %4388 = vmatpush1.bf16.msra.mxu0 0
    %4389 = vmatprep.mubr.bf16.mxu0 0
    %4390 = vmatmul.mubr.bf16.gmra.mrb[0].mxu0 %v4130
    %v4391 = vpop.f32.mrb[0].mxu0
    %v4392 = vadd.f32 %v4145, %v4391
    %v4393 = vpop.f32.mrb[0].mxu0
    %v4394 = vadd.f32 %v4149, %v4393
    %v4395 = vpop.f32.mrb[0].mxu0
    %v4396 = vadd.f32 %v4145, %v4395
    %v4397 = vpop.f32.mrb[0].mxu0
    %v4398 = vadd.f32 %v4149, %v4397
    %4399 = vdwg.mxu0
    %v4400 = vmax.f32 %v4349, 0.0
    %v4401 = vmax.f32 %v4351, 0.0
    %v4402 = vmax.f32 %v4392, 0.0
    %v4403 = vmax.f32 %v4394, 0.0
    %v4404 = vmax.f32 %v4353, 0.0
    %v4405 = vmax.f32 %v4355, 0.0
    %v4406 = vmax.f32 %v4396, 0.0
    %v4407 = vmax.f32 %v4398, 0.0
    %s4408 = scalar_lea.vmem [#allocation13], 256
    %v4409 = vld [vmem:[%s4408] sm:$0xf]
    %v4410 = vld [vmem:[%s4408 + $0x4] sm:$0xf]
    %v4411 = vld [vmem:[%s4408 + $0x8] sm:$0xf]
    %v4412 = vld [vmem:[%s4408 + $0xc] sm:$0xf]
    %v4413 = vld [vmem:[%s4408 + $0x10] sm:$0xf]
    %v4414 = vld [vmem:[%s4408 + $0x14] sm:$0xf]
    %v4415 = vld [vmem:[%s4408 + $0x18] sm:$0xf]
    %v4416 = vld [vmem:[%s4408 + $0x1c] sm:$0xf]
    %v4417 = vld [vmem:[%s4408 + $0x20] sm:$0xf]
    %v4418 = vld [vmem:[%s4408 + $0x24] sm:$0xf]
    %v4419 = vld [vmem:[%s4408 + $0x28] sm:$0xf]
    %v4420 = vld [vmem:[%s4408 + $0x2c] sm:$0xf]
    %v4421 = vld [vmem:[%s4408 + $0x30] sm:$0xf]
    %v4422 = vld [vmem:[%s4408 + $0x34] sm:$0xf]
    %v4423 = vld [vmem:[%s4408 + $0x38] sm:$0xf]
    %v4424 = vld [vmem:[%s4408 + $0x3c] sm:$0xf]
    %v4425 = vld [vmem:[%s4408 + $0x40] sm:$0xf]
    %v4426 = vld [vmem:[%s4408 + $0x44] sm:$0xf]
    %v4427 = vld [vmem:[%s4408 + $0x48] sm:$0xf]
    %v4428 = vld [vmem:[%s4408 + $0x4c] sm:$0xf]
    %v4429 = vld [vmem:[%s4408 + $0x50] sm:$0xf]
    %v4430 = vld [vmem:[%s4408 + $0x54] sm:$0xf]
    %v4431 = vld [vmem:[%s4408 + $0x58] sm:$0xf]
    %v4432 = vld [vmem:[%s4408 + $0x5c] sm:$0xf]
    %v4433 = vld [vmem:[%s4408 + $0x60] sm:$0xf]
    %v4434 = vld [vmem:[%s4408 + $0x64] sm:$0xf]
    %v4435 = vld [vmem:[%s4408 + $0x68] sm:$0xf]
    %v4436 = vld [vmem:[%s4408 + $0x6c] sm:$0xf]
    %v4437 = vld [vmem:[%s4408 + $0x70] sm:$0xf]
    %v4438 = vld [vmem:[%s4408 + $0x74] sm:$0xf]
    %v4439 = vld [vmem:[%s4408 + $0x78] sm:$0xf]
    %v4440 = vld [vmem:[%s4408 + $0x7c] sm:$0xf]
    %v4441 = vld [vmem:[%s4408 + $0x80] sm:$0xf]
    %v4442 = vld [vmem:[%s4408 + $0x84] sm:$0xf]
    %v4443 = vld [vmem:[%s4408 + $0x88] sm:$0xf]
    %v4444 = vld [vmem:[%s4408 + $0x8c] sm:$0xf]
    %v4445 = vld [vmem:[%s4408 + $0x90] sm:$0xf]
    %v4446 = vld [vmem:[%s4408 + $0x94] sm:$0xf]
    %v4447 = vld [vmem:[%s4408 + $0x98] sm:$0xf]
    %v4448 = vld [vmem:[%s4408 + $0x9c] sm:$0xf]
    %v4449 = vld [vmem:[%s4408 + $0xa0] sm:$0xf]
    %v4450 = vld [vmem:[%s4408 + $0xa4] sm:$0xf]
    %v4451 = vld [vmem:[%s4408 + $0xa8] sm:$0xf]
    %v4452 = vld [vmem:[%s4408 + $0xac] sm:$0xf]
    %v4453 = vld [vmem:[%s4408 + $0xb0] sm:$0xf]
    %v4454 = vld [vmem:[%s4408 + $0xb4] sm:$0xf]
    %v4455 = vld [vmem:[%s4408 + $0xb8] sm:$0xf]
    %v4456 = vld [vmem:[%s4408 + $0xbc] sm:$0xf]
    %v4457 = vld [vmem:[%s4408 + $0xc0] sm:$0xf]
    %v4458 = vld [vmem:[%s4408 + $0xc4] sm:$0xf]
    %v4459 = vld [vmem:[%s4408 + $0xc8] sm:$0xf]
    %v4460 = vld [vmem:[%s4408 + $0xcc] sm:$0xf]
    %v4461 = vld [vmem:[%s4408 + $0xd0] sm:$0xf]
    %v4462 = vld [vmem:[%s4408 + $0xd4] sm:$0xf]
    %v4463 = vld [vmem:[%s4408 + $0xd8] sm:$0xf]
    %v4464 = vld [vmem:[%s4408 + $0xdc] sm:$0xf]
    %v4465 = vld [vmem:[%s4408 + $0xe0] sm:$0xf]
    %v4466 = vld [vmem:[%s4408 + $0xe4] sm:$0xf]
    %v4467 = vld [vmem:[%s4408 + $0xe8] sm:$0xf]
    %v4468 = vld [vmem:[%s4408 + $0xec] sm:$0xf]
    %v4469 = vld [vmem:[%s4408 + $0xf0] sm:$0xf]
    %v4470 = vld [vmem:[%s4408 + $0xf4] sm:$0xf]
    %v4471 = vld [vmem:[%s4408 + $0xf8] sm:$0xf]
    %v4472 = vld [vmem:[%s4408 + $0xfc] sm:$0xf]
    %v4473 = vpack.c.bf16 %v4404, %v4400
    %v4474 = vpack.c.bf16 %v4405, %v4401
    %v4475 = vpack.c.bf16 %v4406, %v4402
    %v4476 = vpack.c.bf16 %v4407, %v4403
    %s4477 = scalar_lea.vmem %s10, 1
    %v4478 = vld [vmem:[%s4477] sm:$0x1]
    %v4480 = vlaneseq
    %v4481 = vshrl.u32 %v4480, 7
    %v4482 = vsub.s32 0, %v4481
    %v4483 = vrot.slane %v4478, %v4482
    %v4549 = vunpack.c.l.b16 %v4409
    %v4550 = vunpack.c.l.b16 %v4410
    %v4551 = vunpack.c.l.b16 %v4411
    %v4552 = vunpack.c.l.b16 %v4412
    %v4553 = vunpack.c.l.b16 %v4413
    %v4554 = vunpack.c.l.b16 %v4414
    %v4555 = vunpack.c.l.b16 %v4415
    %v4556 = vunpack.c.l.b16 %v4416
    %v4557 = vunpack.c.l.b16 %v4417
    %v4558 = vunpack.c.l.b16 %v4418
    %v4559 = vunpack.c.l.b16 %v4419
    %v4560 = vunpack.c.l.b16 %v4420
    %v4561 = vunpack.c.l.b16 %v4421
    %v4562 = vunpack.c.l.b16 %v4422
    %v4563 = vunpack.c.l.b16 %v4423
    %v4564 = vunpack.c.l.b16 %v4424
    %v4565 = vunpack.c.l.b16 %v4425
    %v4566 = vunpack.c.l.b16 %v4426
    %v4567 = vunpack.c.l.b16 %v4427
    %v4568 = vunpack.c.l.b16 %v4428
    %v4569 = vunpack.c.l.b16 %v4429
    %v4570 = vunpack.c.l.b16 %v4430
    %v4571 = vunpack.c.l.b16 %v4431
    %v4572 = vunpack.c.l.b16 %v4432
    %v4573 = vunpack.c.l.b16 %v4433
    %v4574 = vunpack.c.l.b16 %v4434
    %v4575 = vunpack.c.l.b16 %v4435
    %v4576 = vunpack.c.l.b16 %v4436
    %v4577 = vunpack.c.l.b16 %v4437
    %v4578 = vunpack.c.l.b16 %v4438
    %v4579 = vunpack.c.l.b16 %v4439
    %v4580 = vunpack.c.l.b16 %v4440
    %v4581 = vunpack.c.l.b16 %v4441
    %v4582 = vunpack.c.l.b16 %v4442
    %v4583 = vunpack.c.l.b16 %v4443
    %v4584 = vunpack.c.l.b16 %v4444
    %v4585 = vunpack.c.l.b16 %v4445
    %v4586 = vunpack.c.l.b16 %v4446
    %v4587 = vunpack.c.l.b16 %v4447
    %v4588 = vunpack.c.l.b16 %v4448
    %v4589 = vunpack.c.l.b16 %v4449
    %v4590 = vunpack.c.l.b16 %v4450
    %v4591 = vunpack.c.l.b16 %v4451
    %v4592 = vunpack.c.l.b16 %v4452
    %v4593 = vunpack.c.l.b16 %v4453
    %v4594 = vunpack.c.l.b16 %v4454
    %v4595 = vunpack.c.l.b16 %v4455
    %v4596 = vunpack.c.l.b16 %v4456
    %v4597 = vunpack.c.l.b16 %v4457
    %v4598 = vunpack.c.l.b16 %v4458
    %v4599 = vunpack.c.l.b16 %v4459
    %v4600 = vunpack.c.l.b16 %v4460
    %v4601 = vunpack.c.l.b16 %v4461
    %v4602 = vunpack.c.l.b16 %v4462
    %v4603 = vunpack.c.l.b16 %v4463
    %v4604 = vunpack.c.l.b16 %v4464
    %v4605 = vunpack.c.l.b16 %v4465
    %v4606 = vunpack.c.l.b16 %v4466
    %v4607 = vunpack.c.l.b16 %v4467
    %v4608 = vunpack.c.l.b16 %v4468
    %v4609 = vunpack.c.l.b16 %v4469
    %v4610 = vunpack.c.l.b16 %v4470
    %v4611 = vunpack.c.l.b16 %v4471
    %v4612 = vunpack.c.l.b16 %v4472
    %v4613 = vpack.c.b16 %v4550, %v4549
    %v4614 = vpack.c.b16 %v4552, %v4551
    %v4615 = vpack.c.b16 %v4554, %v4553
    %v4616 = vpack.c.b16 %v4556, %v4555
    %v4617 = vpack.c.b16 %v4558, %v4557
    %v4618 = vpack.c.b16 %v4560, %v4559
    %v4619 = vpack.c.b16 %v4562, %v4561
    %v4620 = vpack.c.b16 %v4564, %v4563
    %v4621 = vpack.c.b16 %v4566, %v4565
    %v4622 = vpack.c.b16 %v4568, %v4567
    %v4623 = vpack.c.b16 %v4570, %v4569
    %v4624 = vpack.c.b16 %v4572, %v4571
    %v4625 = vpack.c.b16 %v4574, %v4573
    %v4626 = vpack.c.b16 %v4576, %v4575
    %v4627 = vpack.c.b16 %v4578, %v4577
    %v4628 = vpack.c.b16 %v4580, %v4579
    %v4629 = vpack.c.b16 %v4582, %v4581
    %v4630 = vpack.c.b16 %v4584, %v4583
    %v4631 = vpack.c.b16 %v4586, %v4585
    %v4632 = vpack.c.b16 %v4588, %v4587
    %v4633 = vpack.c.b16 %v4590, %v4589
    %v4634 = vpack.c.b16 %v4592, %v4591
    %v4635 = vpack.c.b16 %v4594, %v4593
    %v4636 = vpack.c.b16 %v4596, %v4595
    %v4637 = vpack.c.b16 %v4598, %v4597
    %v4638 = vpack.c.b16 %v4600, %v4599
    %v4639 = vpack.c.b16 %v4602, %v4601
    %v4640 = vpack.c.b16 %v4604, %v4603
    %v4641 = vpack.c.b16 %v4606, %v4605
    %v4642 = vpack.c.b16 %v4608, %v4607
    %v4643 = vpack.c.b16 %v4610, %v4609
    %v4644 = vpack.c.b16 %v4612, %v4611
    %4677 = vmatprep.subr.bf16.mxu0 0
    %4678 = vmatpush1.bf16.msra.mxu0 %v4613
    %4679 = vmatprep.subr.bf16.mxu0 0
    %4680 = vmatpush1.bf16.msra.mxu0 %v4614
    %4681 = vmatprep.subr.bf16.mxu0 0
    %4682 = vmatpush1.bf16.msra.mxu0 %v4615
    %4683 = vmatprep.subr.bf16.mxu0 0
    %4684 = vmatpush1.bf16.msra.mxu0 %v4616
    %4685 = vmatprep.subr.bf16.mxu0 0
    %4686 = vmatpush1.bf16.msra.mxu0 %v4617
    %4687 = vmatprep.subr.bf16.mxu0 0
    %4688 = vmatpush1.bf16.msra.mxu0 %v4618
    %4689 = vmatprep.subr.bf16.mxu0 0
    %4690 = vmatpush1.bf16.msra.mxu0 %v4619
    %4691 = vmatprep.subr.bf16.mxu0 0
    %4692 = vmatpush1.bf16.msra.mxu0 %v4620
    %4693 = vmatprep.subr.bf16.mxu0 0
    %4694 = vmatpush1.bf16.msra.mxu0 %v4621
    %4695 = vmatprep.subr.bf16.mxu0 0
    %4696 = vmatpush1.bf16.msra.mxu0 %v4622
    %4697 = vmatprep.subr.bf16.mxu0 0
    %4698 = vmatpush1.bf16.msra.mxu0 %v4623
    %4699 = vmatprep.subr.bf16.mxu0 0
    %4700 = vmatpush1.bf16.msra.mxu0 %v4624
    %4701 = vmatprep.subr.bf16.mxu0 0
    %4702 = vmatpush1.bf16.msra.mxu0 %v4625
    %4703 = vmatprep.subr.bf16.mxu0 0
    %4704 = vmatpush1.bf16.msra.mxu0 %v4626
    %4705 = vmatprep.subr.bf16.mxu0 0
    %4706 = vmatpush1.bf16.msra.mxu0 %v4627
    %4707 = vmatprep.subr.bf16.mxu0 0
    %4708 = vmatpush1.bf16.msra.mxu0 %v4628
    %4709 = vmatprep.mubr.bf16.mxu0 %v4474
    %4710 = vmatmul.mubr.bf16.gmra.mrb[0].mxu0 %v4473
    %v4711 = vpop.f32.mrb[0].mxu0
    %v4712 = vadd.f32 %v4483, %v4711
    %v4713 = vpop.f32.mrb[0].mxu0
    %v4714 = vpop.f32.mrb[0].mxu0
    %v4715 = vadd.f32 %v4483, %v4714
    %v4716 = vpop.f32.mrb[0].mxu0
    %4717 = vdwg.mxu0
    %4718 = vmatprep.subr.bf16.mxu0 0
    %4719 = vmatpush1.bf16.msra.mxu0 %v4629
    %4720 = vmatprep.subr.bf16.mxu0 0
    %4721 = vmatpush1.bf16.msra.mxu0 %v4630
    %4722 = vmatprep.subr.bf16.mxu0 0
    %4723 = vmatpush1.bf16.msra.mxu0 %v4631
    %4724 = vmatprep.subr.bf16.mxu0 0
    %4725 = vmatpush1.bf16.msra.mxu0 %v4632
    %4726 = vmatprep.subr.bf16.mxu0 0
    %4727 = vmatpush1.bf16.msra.mxu0 %v4633
    %4728 = vmatprep.subr.bf16.mxu0 0
    %4729 = vmatpush1.bf16.msra.mxu0 %v4634
    %4730 = vmatprep.subr.bf16.mxu0 0
    %4731 = vmatpush1.bf16.msra.mxu0 %v4635
    %4732 = vmatprep.subr.bf16.mxu0 0
    %4733 = vmatpush1.bf16.msra.mxu0 %v4636
    %4734 = vmatprep.subr.bf16.mxu0 0
    %4735 = vmatpush1.bf16.msra.mxu0 %v4637
    %4736 = vmatprep.subr.bf16.mxu0 0
    %4737 = vmatpush1.bf16.msra.mxu0 %v4638
    %4738 = vmatprep.subr.bf16.mxu0 0
    %4739 = vmatpush1.bf16.msra.mxu0 %v4639
    %4740 = vmatprep.subr.bf16.mxu0 0
    %4741 = vmatpush1.bf16.msra.mxu0 %v4640
    %4742 = vmatprep.subr.bf16.mxu0 0
    %4743 = vmatpush1.bf16.msra.mxu0 %v4641
    %4744 = vmatprep.subr.bf16.mxu0 0
    %4745 = vmatpush1.bf16.msra.mxu0 %v4642
    %4746 = vmatprep.subr.bf16.mxu0 0
    %4747 = vmatpush1.bf16.msra.mxu0 %v4643
    %4748 = vmatprep.subr.bf16.mxu0 0
    %4749 = vmatpush1.bf16.msra.mxu0 %v4644
    %4750 = vmatprep.mubr.bf16.mxu0 %v4476
    %4751 = vmatmul.mubr.bf16.gmra.mrb[0].mxu0 %v4475
    %v4752 = vpop.f32.mrb[0].mxu0
    %v4753 = vadd.f32 %v4712, %v4752
    %v4754 = vpop.f32.mrb[0].mxu0
    %v4755 = vpop.f32.mrb[0].mxu0
    %v4756 = vadd.f32 %v4715, %v4755
    %v4757 = vpop.f32.mrb[0].mxu0
    %4758 = vdwg.mxu0
    %s4759 = scalar_lea.vmem %s13, 1
    %v4760 = vld [vmem:[%s4759] sm:$0x1]
    %s4761 = scalar_lea.vmem %s14, 1
    %v4762 = vld [vmem:[%s4761] sm:$0x1]
    %v4763 = vadd.f32 %v4095, %v4753
    %v4764 = vadd.f32 %v4096, %v4756
    %4765 = vadd.xlane.f32.xlu0 %v4763
    %v4766 = vpop.xlane.xlu0 %4765
    %4767 = vadd.xlane.f32.xlu0 %v4764
    %v4768 = vpop.xlane.xlu0 %4767
    %v4769 = vmul.f32 %v4766, %v2021
    %v4770 = vmul.f32 %v4768, %v2021
    %v4771 = vsub.f32 %v4763, %v4769
    %v4772 = vsub.f32 %v4764, %v4770
    %v4773 = vmul.f32 %v4771, %v4771
    %v4774 = vmul.f32 %v4772, %v4772
    %4775 = vadd.xlane.f32.xlu0 %v4773
    %v4776 = vpop.xlane.xlu0 %4775
    %4777 = vadd.xlane.f32.xlu0 %v4774
    %v4778 = vpop.xlane.xlu0 %4777
    %v4779 = vmul.f32 %v4776, %v2021
    %v4780 = vmul.f32 %v4778, %v2021
    %v4781 = vadd.f32 %v4779, 1e-05
    %v4782 = vadd.f32 %v4780, 1e-05
    %v4783 = vrsqrt.pop %v4781
    %v4784 = vrsqrt.pop %v4782
    %v4785 = vmul.f32 %v4771, %v4783
    %v4786 = vmul.f32 %v4772, %v4784
    %v4788 = vlaneseq
    %v4789 = vshrl.u32 %v4788, 7
    %v4790 = vsub.s32 0, %v4789
    %v4791 = vrot.slane %v4760, %v4790
    %v4793 = vmul.f32 %v4785, %v4791
    %v4794 = vmul.f32 %v4786, %v4791
    %v4796 = vlaneseq
    %v4797 = vshrl.u32 %v4796, 7
    %v4798 = vsub.s32 0, %v4797
    %v4799 = vrot.slane %v4762, %v4798
    %v4801 = vadd.f32 %v4793, %v4799
    %v4802 = vadd.f32 %v4794, %v4799
    %v4803 = vld [vmem:[#allocation14] sm:$0xf]
    %v4804 = vld [vmem:[#allocation14 + $0x4] sm:$0xf]
    %v4805 = vld [vmem:[#allocation14 + $0x8] sm:$0xf]
    %v4806 = vld [vmem:[#allocation14 + $0xc] sm:$0xf]
    %v4807 = vld [vmem:[#allocation14 + $0x10] sm:$0xf]
    %v4808 = vld [vmem:[#allocation14 + $0x14] sm:$0xf]
    %v4809 = vld [vmem:[#allocation14 + $0x18] sm:$0xf]
    %v4810 = vld [vmem:[#allocation14 + $0x1c] sm:$0xf]
    %v4811 = vld [vmem:[#allocation14 + $0x20] sm:$0xf]
    %v4812 = vld [vmem:[#allocation14 + $0x24] sm:$0xf]
    %v4813 = vld [vmem:[#allocation14 + $0x28] sm:$0xf]
    %v4814 = vld [vmem:[#allocation14 + $0x2c] sm:$0xf]
    %v4815 = vld [vmem:[#allocation14 + $0x30] sm:$0xf]
    %v4816 = vld [vmem:[#allocation14 + $0x34] sm:$0xf]
    %v4817 = vld [vmem:[#allocation14 + $0x38] sm:$0xf]
    %v4818 = vld [vmem:[#allocation14 + $0x3c] sm:$0xf]
    %v4819 = vpack.c.bf16 %v4802, %v4801
    %v4820 = vld [vmem:[%s16] sm:$0x1]
    %v4822 = vlaneseq
    %v4823 = vshrl.u32 %v4822, 7
    %v4824 = vsub.s32 0, %v4823
    %v4825 = vrot.slane %v4820, %v4824
    %v4843 = vunpack.c.l.b16 %v4803
    %v4844 = vunpack.c.l.b16 %v4804
    %v4845 = vunpack.c.l.b16 %v4805
    %v4846 = vunpack.c.l.b16 %v4806
    %v4847 = vunpack.c.l.b16 %v4807
    %v4848 = vunpack.c.l.b16 %v4808
    %v4849 = vunpack.c.l.b16 %v4809
    %v4850 = vunpack.c.l.b16 %v4810
    %v4851 = vunpack.c.l.b16 %v4811
    %v4852 = vunpack.c.l.b16 %v4812
    %v4853 = vunpack.c.l.b16 %v4813
    %v4854 = vunpack.c.l.b16 %v4814
    %v4855 = vunpack.c.l.b16 %v4815
    %v4856 = vunpack.c.l.b16 %v4816
    %v4857 = vunpack.c.l.b16 %v4817
    %v4858 = vunpack.c.l.b16 %v4818
    %v4859 = vpack.c.b16 %v4844, %v4843
    %v4860 = vpack.c.b16 %v4846, %v4845
    %v4861 = vpack.c.b16 %v4848, %v4847
    %v4862 = vpack.c.b16 %v4850, %v4849
    %v4863 = vpack.c.b16 %v4852, %v4851
    %v4864 = vpack.c.b16 %v4854, %v4853
    %v4865 = vpack.c.b16 %v4856, %v4855
    %v4866 = vpack.c.b16 %v4858, %v4857
    %4875 = vmatprep.subr.bf16.mxu0 0
    %4876 = vmatpush1.bf16.msra.mxu0 %v4859
    %4877 = vmatprep.subr.bf16.mxu0 0
    %4878 = vmatpush1.bf16.msra.mxu0 %v4860
    %4879 = vmatprep.subr.bf16.mxu0 0
    %4880 = vmatpush1.bf16.msra.mxu0 %v4861
    %4881 = vmatprep.subr.bf16.mxu0 0
    %4882 = vmatpush1.bf16.msra.mxu0 %v4862
    %4883 = vmatprep.subr.bf16.mxu0 0
    %4884 = vmatpush1.bf16.msra.mxu0 %v4863
    %4885 = vmatprep.subr.bf16.mxu0 0
    %4886 = vmatpush1.bf16.msra.mxu0 %v4864
    %4887 = vmatprep.subr.bf16.mxu0 0
    %4888 = vmatpush1.bf16.msra.mxu0 %v4865
    %4889 = vmatprep.subr.bf16.mxu0 0
    %4890 = vmatpush1.bf16.msra.mxu0 %v4866
    %4891 = vmatprep.subr.bf16.mxu0 0
    %4892 = vmatpush1.bf16.msra.mxu0 0
    %4893 = vmatprep.subr.bf16.mxu0 0
    %4894 = vmatpush1.bf16.msra.mxu0 0
    %4895 = vmatprep.subr.bf16.mxu0 0
    %4896 = vmatpush1.bf16.msra.mxu0 0
    %4897 = vmatprep.subr.bf16.mxu0 0
    %4898 = vmatpush1.bf16.msra.mxu0 0
    %4899 = vmatprep.subr.bf16.mxu0 0
    %4900 = vmatpush1.bf16.msra.mxu0 0
    %4901 = vmatprep.subr.bf16.mxu0 0
    %4902 = vmatpush1.bf16.msra.mxu0 0
    %4903 = vmatprep.subr.bf16.mxu0 0
    %4904 = vmatpush1.bf16.msra.mxu0 0
    %4905 = vmatprep.subr.bf16.mxu0 0
    %4906 = vmatpush1.bf16.msra.mxu0 0
    %4907 = vmatprep.mubr.bf16.mxu0 0
    %4908 = vmatmul.mubr.bf16.gmra.mrb[0].mxu0 %v4819
    %v4909 = vpop.f32.mrb[0].mxu0
    %v4910 = vadd.f32 %v4825, %v4909
    %v4911 = vpop.f32.mrb[0].mxu0
    %v4912 = vpop.f32.mrb[0].mxu0
    %v4913 = vadd.f32 %v4825, %v4912
    %v4914 = vpop.f32.mrb[0].mxu0
    %4915 = vdwg.mxu0
    %4916 = vst [vmem:[#allocation16] sm:$0xff] %v4910
    %4917 = vst [vmem:[#allocation16 + $0x8] sm:$0xff] %v4913
    // Predicated region
    $region102: #{tpu_custom_call.1} parent=1 // pred_check
      _
    $region103: #{tpu_custom_call.1} parent=1 // pred_check_branch
      %4919 = sbr.rel (0) target = $region105
    $region104: #{tpu_custom_call.1} parent=1 // pred_region
      %s4921 = ssub.s32 256, 256
      %4922 = vsyncadd [#allocation4], %s4921
      %s4923 = sshll.u32 [#allocation16], 4
      %s4924 = int_to_ptr.vmem [resolvable:$true] %s4923
      %4929 = dma.vmem_to_hbm [thread:$0]  %s4924, 256, %s17, [#allocation4], 128, 128, 8
    $region105: #{tpu_custom_call.1} parent=1 // pred_fallthru
      _
    // Predicated region
    $region106: #{tpu_custom_call.1} parent=1 // pred_check
      _
    $region107: #{tpu_custom_call.1} parent=1 // pred_check_branch
      %4931 = sbr.rel (0) target = $region109
    $region108: #{tpu_custom_call.1} parent=1 // pred_region
      %4932 = dma.done [#allocation4], 256
    $region109: #{tpu_custom_call.1} parent=1 // pred_fallthru
      _
    %4933 = vsyncpa [#allocation3], 1
    %4934 = vsyncpa [#allocation6], 1
    %4935 = vsyncpa [#allocation9], 1
    %4936 = vsyncpa [#allocation12], 1
    %4937 = vsyncpa [#allocation15], 1
    %4938 = vsyncpa [#allocation4], 1

</llo_original>
